<compile_context>
chip_gen: v7x
topology: tpu7x:2x2x1
jax: 0.10.0
libtpu: 0.0.40
codegen_flags: <defaults>
</compile_context>

<pallas_src>
import math

import jax
import jax.numpy as jnp
from jax.experimental import pallas as pl
from jax.experimental.pallas import tpu as pltpu

HEAD_DIM = 64

# Scoped-VMEM knobs: 48 MiB is safely above the 16/32 MiB defaults and below v7x's
# 64 MiB physical VMEM; the block chooser budgets against a slightly smaller number
# to leave headroom for compiler temporaries.
_VMEM_LIMIT_BYTES = 48 * 1024 * 1024
_VMEM_BUDGET_BYTES = 40 * 1024 * 1024


def _attention_pooling_kernel(x_ref, ctx_ref, mask_ref,
                              wq_ref, wk_ref, wv_ref, wo_ref, out_ref):
    ctx = ctx_ref[...]                                   # (Bt, S, Dc), f32 or bf16
    Bt, S, Dc = ctx.shape
    C = x_ref.shape[1]
    nh = C // HEAD_DIM
    scale = 1.0 / math.sqrt(HEAD_DIM)
    neg = -jnp.finfo(jnp.float32).max

    # Single query token = mean over the context sequence (f32 accumulation).
    ctx_mean = jnp.mean(ctx.astype(jnp.float32), axis=1)                 # (Bt, Dc)

    # Query projection: one (Bt, Dc) x (Dc, C) MXU matmul, f32 accumulate.
    q = jnp.dot(ctx_mean.astype(ctx.dtype), wq_ref[...],
                preferred_element_type=jnp.float32)                      # (Bt, C) f32

    # Single-query trick: never materialize K = ctx @ Wk.
    #   scores[b,h,s] = q_h[b] . (ctx[b,s] @ Wk_h) = eff[b,h,:] . ctx[b,s,:]
    # with eff[b,h,:] = q_h[b] @ Wk_h^T  (all heads at once, batched over h).
    q_r = q.reshape(Bt, nh, HEAD_DIM)
    wk_r = wk_ref[...].reshape(Dc, nh, HEAD_DIM)
    eff = jnp.einsum('bhd,chd->bhc', q_r.astype(wk_r.dtype), wk_r,
                     preferred_element_type=jnp.float32)                 # (Bt, nh, Dc)

    # Scores on the MXU: contraction over Dc, lane-dense S output.
    s = jnp.einsum('bhc,bsc->bhs', eff.astype(ctx.dtype), ctx,
                   preferred_element_type=jnp.float32) * scale           # (Bt, nh, S) f32
    valid = (mask_ref[...] != 0)[:, None, :]                             # (Bt, 1, S)
    s = jnp.where(valid, s, neg)

    # Numerically-stable softmax in f32; normalization deferred past the pooling.
    m = jnp.max(s, axis=-1, keepdims=True)
    e = jnp.exp(s - m)                                                   # (Bt, nh, S)
    denom = jnp.sum(e, axis=-1, keepdims=True)                           # (Bt, nh, 1)

    # Pooled context token per head: pc[b,h,:] = softmax(s)[b,h,:] @ ctx[b]
    pc = jnp.einsum('bhs,bsc->bhc', e.astype(ctx.dtype), ctx,
                    preferred_element_type=jnp.float32)                  # (Bt, nh, Dc)
    pc = pc * pl.reciprocal(denom, approx=True)                          # EUP, per (b,h)

    # Value-project only the pooled token: o_h = pc_h @ Wv_h  (K=Dc, all heads batched).
    wv_r = wv_ref[...].reshape(Dc, nh, HEAD_DIM)
    o = jnp.einsum('bhc,chd->bhd', pc.astype(wv_r.dtype), wv_r,
                   preferred_element_type=jnp.float32)                   # (Bt, nh, 64)

    # Concatenate heads in registers -> single full-K output projection + residual add.
    attn = o.reshape(Bt, C)                                              # (Bt, C) f32
    out = x_ref[...].astype(jnp.float32) + jnp.dot(
        attn.astype(wo_ref.dtype), wo_ref[...],
        preferred_element_type=jnp.float32)                              # (Bt, C) f32
    out_ref[...] = out.astype(out_ref.dtype)


def _choose_block_b(batch, row_bytes, weight_bytes,
                    target=64, vmem_budget=_VMEM_BUDGET_BYTES):
    """Pick the batch tile:
      - as large as possible up to `target` (amortize ~0.35us/step overhead, give the
        MXU real M), bounded by the VMEM budget (double-buffered per-step blocks plus
        single-buffered resident weights),
      - a divisor of `batch` (no partial blocks), preferably a multiple of 8 so the
        (block_b, C)/(block_b, S) blocks keep the (8,128) sublane tiling,
      - leaving >=2 grid steps when batch is large enough, so the "parallel" grid axis
        can shard across v7x's two TensorCores; never falls back to block_b=batch for
        large batch (VMEM blowout)."""
    fit = max(1, (vmem_budget - weight_bytes) // max(1, row_bytes))
    cap = max(1, min(target, int(fit)))
    if batch >= 16:
        cap = min(cap, batch // 2)            # keep the second TensorCore busy (v7x)
    for d in range(min(cap, batch), 0, -1):   # prefer 8-aligned divisors
        if batch % d == 0 and d % 8 == 0:
            return d
    if batch <= cap:                          # small batch: one full block
        return batch
    for d in range(min(cap, batch), 0, -1):   # last resort: any divisor
        if batch % d == 0:
            return d
    return 1


def attention_pooling(x, context, context_mask, params):
    """x: (B, C); context: (B, S, Dc); context_mask: (B, S) (nonzero == keep) or None.
    params = (wq (Dc,C), wk (Dc,C), wv (Dc,C), wo (C,C)), stored transposed vs torch."""
    wq, wk, wv, wo = params
    B, C = x.shape
    _, S, Dc = context.shape
    assert C % HEAD_DIM == 0, "num_channels must be a multiple of head_dim=64"
    assert wq.shape == (Dc, C) and wk.shape == (Dc, C)
    assert wv.shape == (Dc, C) and wo.shape == (C, C)

    if context_mask is None:
        context_mask = jnp.ones((B, S), jnp.int32)
    context_mask = context_mask.astype(jnp.int32)

    w_item = jnp.dtype(wq.dtype).itemsize
    c_item = jnp.dtype(context.dtype).itemsize
    x_item = jnp.dtype(x.dtype).itemsize
    # resident weights (single-buffered): wq + wk + wv + wo
    weight_bytes = (3 * Dc * C + C * C) * w_item
    # per batch-row, per-step VMEM (double-buffered ctx / x / out blocks + mask)
    row_bytes = 2 * S * Dc * c_item + 4 * C * x_item + 2 * S * 4

    block_b = _choose_block_b(B, row_bytes, weight_bytes)
    grid = (pl.cdiv(B, block_b),)

    kernel = pl.pallas_call(
        _attention_pooling_kernel,
        out_shape=jax.ShapeDtypeStruct((B, C), x.dtype),
        grid=grid,
        in_specs=[
            pl.BlockSpec((block_b, C), lambda i: (i, 0)),          # x (aliased to out)
            pl.BlockSpec((block_b, S, Dc), lambda i: (i, 0, 0)),   # context
            pl.BlockSpec((block_b, S), lambda i: (i, 0)),          # mask
            # Weights: constant block across the grid -> keep resident and
            # single-buffered (default pipelining would reserve 2 buffers each).
            pl.BlockSpec((Dc, C), lambda i: (0, 0), pipeline_mode=pl.Buffered(1)),  # wq
            pl.BlockSpec((Dc, C), lambda i: (0, 0), pipeline_mode=pl.Buffered(1)),  # wk
            pl.BlockSpec((Dc, C), lambda i: (0, 0), pipeline_mode=pl.Buffered(1)),  # wv
            pl.BlockSpec((C, C), lambda i: (0, 0), pipeline_mode=pl.Buffered(1)),   # wo
        ],
        out_specs=pl.BlockSpec((block_b, C), lambda i: (i, 0)),
        input_output_aliases={0: 0},                               # in-place residual add
        compiler_params=pltpu.CompilerParams(
            dimension_semantics=("parallel",),
            vmem_limit_bytes=_VMEM_LIMIT_BYTES),
    )
    return kernel(x, context, context_mask, wq, wk, wv, wo)


def init_params(key, num_channels, context_dim):
    """Deterministic Linear weights (bias=False), stored transposed (in, out)."""
    def lin(k, fan_in, fan_out):
        bound = 1.0 / math.sqrt(fan_in)
        return jax.random.uniform(k, (fan_in, fan_out), jnp.float32, -bound, bound)

    k1, k2, k3, k4 = jax.random.split(key, 4)
    wq = lin(k1, context_dim, num_channels)     # to_query:  (Dc, C)
    wk = lin(k2, context_dim, num_channels)     # to_key:    (Dc, C)
    wv = lin(k3, context_dim, num_channels)     # to_value:  (Dc, C)
    wo = lin(k4, num_channels, num_channels)    # output:    (C, C)
    return wq, wk, wv, wo


def reference(x, context, context_mask, params):
    """Plain-JAX re-implementation of the PyTorch forward for validation."""
    wq, wk, wv, wo = params
    B, S, Dc = context.shape
    C = x.shape[1]
    nh = C // HEAD_DIM

    ctx_mean = context.mean(axis=1, keepdims=True)                  # (B, 1, Dc)
    q = (ctx_mean @ wq).reshape(B, 1, nh, HEAD_DIM).transpose(0, 2, 1, 3)
    k = (context @ wk).reshape(B, S, nh, HEAD_DIM).transpose(0, 2, 1, 3)
    v = (context @ wv).reshape(B, S, nh, HEAD_DIM).transpose(0, 2, 1, 3)

    attn = jnp.einsum('bhid,bhjd->bhij', q, k) / math.sqrt(HEAD_DIM)
    m = (context_mask > 0)[:, None, None, :]
    attn = jnp.where(m, attn, -jnp.finfo(jnp.float32).max)
    attn = jax.nn.softmax(attn, axis=-1)
    out = jnp.einsum('bhij,bhjd->bhid', attn, v)
    out = out.transpose(0, 2, 1, 3).reshape(B, 1, C) @ wo
    return x + out[:, 0, :]


if __name__ == "__main__":
    B, S = 2, 8
    context_dim = 64         # Dc
    num_channels = 128       # C  (2 heads of head_dim=64)

    key = jax.random.PRNGKey(0)
    kx, kc, kp = jax.random.split(key, 3)

    x = jax.random.normal(kx, (B, num_channels), jnp.float32)
    context = jax.random.normal(kc, (B, S, context_dim), jnp.float32)
    # mask: batch 0 all valid, batch 1 last 3 context tokens masked out
    context_mask = jnp.ones((B, S), jnp.int32).at[1, S - 3:].set(0)

    params = init_params(kp, num_channels, context_dim)

    # Reference first (x is donated into the kernel via input_output_aliases).
    ref = jax.block_until_ready(reference(x, context, context_mask, params))

    run = jax.jit(attention_pooling, donate_argnums=0)

    # f32 path. `x + 0.0` gives the kernel its own donatable buffer.
    out = jax.block_until_ready(run(x + 0.0, context, context_mask, params))
    assert out.shape == (B, num_channels) and out.dtype == jnp.float32
    assert jnp.allclose(out, ref, rtol=1e-2, atol=1e-2), \
        f"f32 max abs diff {float(jnp.max(jnp.abs(out - ref)))}"

    # bf16 MXU-operand path (recommended on v6e/v7x): halves HBM bytes for
    # context/weights; accumulation and softmax stay f32 inside the kernel.
    ctx_bf16 = context.astype(jnp.bfloat16)
    params_bf16 = tuple(w.astype(jnp.bfloat16) for w in params)
    out_bf16 = jax.block_until_ready(run(x + 0.0, ctx_bf16, context_mask, params_bf16))
    assert out_bf16.shape == (B, num_channels) and out_bf16.dtype == jnp.float32
    assert jnp.allclose(out_bf16, ref, rtol=5e-2, atol=5e-2), \
        f"bf16 max abs diff {float(jnp.max(jnp.abs(out_bf16 - ref)))}"

    print("KERNEL_OK")
</pallas_src>

<mosaic_0001>
module attributes {stable_mosaic.version = 11 : i64} {
  func.func @_attention_pooling_kernel(%arg0: i32, %arg1: memref<2x128xf32, #tpu.memory_space<vmem>>, %arg2: memref<2x8x64xf32, #tpu.memory_space<vmem>>, %arg3: memref<2x8xi32, #tpu.memory_space<vmem>>, %arg4: memref<64x128xf32, #tpu.memory_space<vmem>>, %arg5: memref<64x128xf32, #tpu.memory_space<vmem>>, %arg6: memref<64x128xf32, #tpu.memory_space<vmem>>, %arg7: memref<128x128xf32, #tpu.memory_space<vmem>>, %arg8: memref<2x128xf32, #tpu.memory_space<vmem>>) attributes {dimension_semantics = [#tpu.dimension_semantics<parallel>], iteration_bounds = array<i64: 1>, scalar_prefetch = 0 : i64, scratch_operands = 0 : i64, tpu.core_type = #tpu.core_type<tc>, window_params = [{transform_indices = @transform_0, window_bounds = array<i64: 2, 128>}, {transform_indices = @transform_1, window_bounds = array<i64: 2, 8, 64>}, {transform_indices = @transform_2, window_bounds = array<i64: 2, 8>}, {pipeline_mode = #tpu.pipeline_mode<synchronous>, transform_indices = @transform_3, window_bounds = array<i64: 64, 128>}, {pipeline_mode = #tpu.pipeline_mode<synchronous>, transform_indices = @transform_4, window_bounds = array<i64: 64, 128>}, {pipeline_mode = #tpu.pipeline_mode<synchronous>, transform_indices = @transform_5, window_bounds = array<i64: 64, 128>}, {pipeline_mode = #tpu.pipeline_mode<synchronous>, transform_indices = @transform_6, window_bounds = array<i64: 128, 128>}, {transform_indices = @transform_7, window_bounds = array<i64: 2, 128>}]} {
    %c0 = arith.constant 0 : index
    %c0_0 = arith.constant 0 : index
    %c0_1 = arith.constant 0 : index
    %0 = vector.load %arg2[%c0, %c0_0, %c0_1] : memref<2x8x64xf32, #tpu.memory_space<vmem>>, vector<2x8x64xf32>
    %cst = arith.constant dense<0.000000e+00> : vector<2x64xf32>
    %1 = vector.multi_reduction <add>, %0, %cst [1] : vector<2x8x64xf32> to vector<2x64xf32>
    %cst_2 = arith.constant 8.000000e+00 : f32
    %2 = vector.broadcast %cst_2 : f32 to vector<2x64xf32>
    %3 = arith.divf %1, %2 : vector<2x64xf32>
    %c0_3 = arith.constant 0 : index
    %c0_4 = arith.constant 0 : index
    %4 = vector.load %arg4[%c0_3, %c0_4] : memref<64x128xf32, #tpu.memory_space<vmem>>, vector<64x128xf32>
    %cst_5 = arith.constant dense<0.000000e+00> : vector<2x128xf32>
    %5 = tpu.matmul %3, %4, %cst_5 {dimension_numbers = #tpu.dot_dimension_numbers<[1], [0], [0], [1], [0, 0, 1, 1], [], []>} : vector<2x64xf32>, vector<64x128xf32>, vector<2x128xf32> -> vector<2x128xf32>
    %6 = vector.shape_cast %5 : vector<2x128xf32> to vector<2x2x64xf32>
    %c0_6 = arith.constant 0 : index
    %c0_7 = arith.constant 0 : index
    %7 = vector.load %arg5[%c0_6, %c0_7] : memref<64x128xf32, #tpu.memory_space<vmem>>, vector<64x128xf32>
    %8 = vector.shape_cast %7 : vector<64x128xf32> to vector<64x2x64xf32>
    "tpu.trace_start"() <{level = 10 : i32, message = "bhd,chd->bhc"}> : () -> ()
    %cst_8 = arith.constant dense<0.000000e+00> : vector<2x64x2xf32>
    %9 = tpu.matmul %8, %6, %cst_8 {dimension_numbers = #tpu.dot_dimension_numbers<[2], [2], [0], [0], [0, 1, 0, 0, 1, 0], [1], [1]>} : vector<64x2x64xf32>, vector<2x2x64xf32>, vector<2x64x2xf32> -> vector<2x64x2xf32>
    %10 = tpu.transpose %9, [2, 0, 1] : vector<2x64x2xf32> -> vector<2x2x64xf32>
    "tpu.trace_stop"() : () -> ()
    "tpu.trace_start"() <{level = 10 : i32, message = "bhc,bsc->bhs"}> : () -> ()
    %cst_9 = arith.constant dense<0.000000e+00> : vector<2x2x8xf32>
    %11 = tpu.matmul %10, %0, %cst_9 {dimension_numbers = #tpu.dot_dimension_numbers<[2], [2], [1], [1], [0, 0, 0, 1, 1, 1], [0], [0]>} : vector<2x2x64xf32>, vector<2x8x64xf32>, vector<2x2x8xf32> -> vector<2x2x8xf32>
    "tpu.trace_stop"() : () -> ()
    %cst_10 = arith.constant 1.250000e-01 : f32
    %12 = vector.broadcast %cst_10 : f32 to vector<2x2x8xf32>
    %13 = arith.mulf %11, %12 : vector<2x2x8xf32>
    %c0_11 = arith.constant 0 : index
    %c0_12 = arith.constant 0 : index
    %14 = vector.load %arg3[%c0_11, %c0_12] : memref<2x8xi32, #tpu.memory_space<vmem>>, vector<2x8xi32>
    %c0_i32 = arith.constant 0 : i32
    %15 = vector.broadcast %c0_i32 : i32 to vector<2x8xi32>
    %16 = arith.cmpi ne, %14, %15 : vector<2x8xi32>
    %17 = vector.shape_cast %16 : vector<2x8xi1> to vector<2x1x8xi1>
    %cst_13 = arith.constant -3.40282347E+38 : f32
    %18 = vector.shape_cast %17 : vector<2x1x8xi1> to vector<2x1x8xi1>
    %19 = vector.broadcast %18 : vector<2x1x8xi1> to vector<2x2x8xi1>
    %20 = vector.broadcast %cst_13 : f32 to vector<2x2x8xf32>
    %21 = arith.select %19, %13, %20 : vector<2x2x8xi1>, vector<2x2x8xf32>
    %cst_14 = arith.constant dense<0xFF800000> : vector<2x2xf32>
    %22 = vector.multi_reduction <maximumf>, %21, %cst_14 [2] : vector<2x2x8xf32> to vector<2x2xf32>
    %23 = vector.shape_cast %22 : vector<2x2xf32> to vector<2x2x1xf32>
    %24 = vector.broadcast %23 : vector<2x2x1xf32> to vector<2x2x8xf32>
    %25 = arith.subf %21, %24 : vector<2x2x8xf32>
    %26 = math.exp %25 : vector<2x2x8xf32>
    %cst_15 = arith.constant dense<0.000000e+00> : vector<2x2xf32>
    %27 = vector.multi_reduction <add>, %26, %cst_15 [2] : vector<2x2x8xf32> to vector<2x2xf32>
    %28 = vector.shape_cast %27 : vector<2x2xf32> to vector<2x2x1xf32>
    "tpu.trace_start"() <{level = 10 : i32, message = "bhs,bsc->bhc"}> : () -> ()
    %cst_16 = arith.constant dense<0.000000e+00> : vector<2x2x64xf32>
    %29 = tpu.matmul %26, %0, %cst_16 {dimension_numbers = #tpu.dot_dimension_numbers<[2], [1], [1], [2], [0, 0, 0, 1, 1, 2], [0], [0]>} : vector<2x2x8xf32>, vector<2x8x64xf32>, vector<2x2x64xf32> -> vector<2x2x64xf32>
    "tpu.trace_stop"() : () -> ()
    %30 = tpu.reciprocal %28 {approx = true} : vector<2x2x1xf32> -> vector<2x2x1xf32>
    %31 = vector.broadcast %30 : vector<2x2x1xf32> to vector<2x2x64xf32>
    %32 = arith.mulf %29, %31 : vector<2x2x64xf32>
    %c0_17 = arith.constant 0 : index
    %c0_18 = arith.constant 0 : index
    %33 = vector.load %arg6[%c0_17, %c0_18] : memref<64x128xf32, #tpu.memory_space<vmem>>, vector<64x128xf32>
    %34 = vector.shape_cast %33 : vector<64x128xf32> to vector<64x2x64xf32>
    "tpu.trace_start"() <{level = 10 : i32, message = "bhc,chd->bhd"}> : () -> ()
    %cst_19 = arith.constant dense<0.000000e+00> : vector<2x64x2xf32>
    %35 = tpu.matmul %34, %32, %cst_19 {dimension_numbers = #tpu.dot_dimension_numbers<[0], [2], [2], [0], [0, 1, 0, 2, 1, 0], [1], [1]>} : vector<64x2x64xf32>, vector<2x2x64xf32>, vector<2x64x2xf32> -> vector<2x64x2xf32>
    %36 = tpu.transpose %35, [2, 0, 1] : vector<2x64x2xf32> -> vector<2x2x64xf32>
    "tpu.trace_stop"() : () -> ()
    %37 = vector.shape_cast %36 : vector<2x2x64xf32> to vector<2x128xf32>
    %c0_20 = arith.constant 0 : index
    %c0_21 = arith.constant 0 : index
    %38 = vector.load %arg1[%c0_20, %c0_21] : memref<2x128xf32, #tpu.memory_space<vmem>>, vector<2x128xf32>
    %c0_22 = arith.constant 0 : index
    %c0_23 = arith.constant 0 : index
    %39 = vector.load %arg7[%c0_22, %c0_23] : memref<128x128xf32, #tpu.memory_space<vmem>>, vector<128x128xf32>
    %cst_24 = arith.constant dense<0.000000e+00> : vector<2x128xf32>
    %40 = tpu.matmul %37, %39, %cst_24 {dimension_numbers = #tpu.dot_dimension_numbers<[1], [0], [0], [1], [0, 0, 1, 1], [], []>} : vector<2x128xf32>, vector<128x128xf32>, vector<2x128xf32> -> vector<2x128xf32>
    %41 = arith.addf %38, %40 : vector<2x128xf32>
    %c0_25 = arith.constant 0 : index
    %c0_26 = arith.constant 0 : index
    %42 = vector.load %arg8[%c0_25, %c0_26] : memref<2x128xf32, #tpu.memory_space<vmem>>, vector<2x128xf32>
    tpu.vector_store %arg8[%c0_25, %c0_26], %41 {strides = array<i32>} : memref<2x128xf32, #tpu.memory_space<vmem>>, vector<2x128xf32>,
    return
  }
  func.func @transform_0(%arg0: i32) -> (i32, i32) {
    %c0_i32 = arith.constant 0 : i32
    %c0_i32_0 = arith.constant 0 : i32
    return %arg0, %c0_i32 : i32, i32
  }
  func.func @transform_1(%arg0: i32) -> (i32, i32, i32) {
    %c0_i32 = arith.constant 0 : i32
    %c0_i32_0 = arith.constant 0 : i32
    %c0_i32_1 = arith.constant 0 : i32
    return %arg0, %c0_i32, %c0_i32_0 : i32, i32, i32
  }
  func.func @transform_2(%arg0: i32) -> (i32, i32) {
    %c0_i32 = arith.constant 0 : i32
    %c0_i32_0 = arith.constant 0 : i32
    return %arg0, %c0_i32 : i32, i32
  }
  func.func @transform_3(%arg0: i32) -> (i32, i32) {
    %c0_i32 = arith.constant 0 : i32
    %c0_i32_0 = arith.constant 0 : i32
    %c0_i32_1 = arith.constant 0 : i32
    return %c0_i32, %c0_i32_0 : i32, i32
  }
  func.func @transform_4(%arg0: i32) -> (i32, i32) {
    %c0_i32 = arith.constant 0 : i32
    %c0_i32_0 = arith.constant 0 : i32
    %c0_i32_1 = arith.constant 0 : i32
    return %c0_i32, %c0_i32_0 : i32, i32
  }
  func.func @transform_5(%arg0: i32) -> (i32, i32) {
    %c0_i32 = arith.constant 0 : i32
    %c0_i32_0 = arith.constant 0 : i32
    %c0_i32_1 = arith.constant 0 : i32
    return %c0_i32, %c0_i32_0 : i32, i32
  }
  func.func @transform_6(%arg0: i32) -> (i32, i32) {
    %c0_i32 = arith.constant 0 : i32
    %c0_i32_0 = arith.constant 0 : i32
    %c0_i32_1 = arith.constant 0 : i32
    return %c0_i32, %c0_i32_0 : i32, i32
  }
  func.func @transform_7(%arg0: i32) -> (i32, i32) {
    %c0_i32 = arith.constant 0 : i32
    %c0_i32_0 = arith.constant 0 : i32
    return %arg0, %c0_i32 : i32, i32
  }
}

</mosaic_0001>

<llo_original>
// kernel: attention_pooling.1
$region0: #{attention_pooling.1}
  #allocation0 [shape = 'u32[]', space=smem, size = 0x4, offset = 0x4, fixed_abs, tag = 'smem constant byte address 0x4 - core index']
  #allocation1 [shape = 'u32[144,128]{1,0:T(1,128)}', space=vmem, size = 0x12000, scoped, tag = 'internal scratch']
  %s0 = inlined_call_operand.hbm [shape: f32[2,128], index: 0, kind: input, shape index: {}, may-alias: {0,7}]
  %s1 = inlined_call_operand.hbm [shape: f32[2,8,64], index: 1, kind: input, shape index: {}]
  %s2 = inlined_call_operand.vmem [shape: s32[2,8], index: 2, kind: input, shape index: {}]
  %s3 = inlined_call_operand.hbm [shape: f32[64,128], index: 3, kind: input, shape index: {}]
  %s4 = inlined_call_operand.hbm [shape: f32[64,128], index: 4, kind: input, shape index: {}]
  %s5 = inlined_call_operand.hbm [shape: f32[64,128], index: 5, kind: input, shape index: {}]
  %s6 = inlined_call_operand.hbm [shape: f32[128,128], index: 6, kind: input, shape index: {}]
  %s7 = inlined_call_operand.hbm [shape: f32[2,128], index: 7, kind: output, shape index: {}, may-alias: {0,7}]
  %s8 = sld [smem:[#allocation0]]
  $region62: #{attention_pooling.1} parent=0
    _
  %s10 = ssub.s32 1, %s8
  %s11 = scalar_select 0, %s10, %s8
  $region1: #{attention_pooling.1} parent=0
    #allocation2 [shape = 'u8[1024]{0}', space=vmem, size = 0x400, scoped, tag = 'input window, operand 0, single buffered']
    #allocation3 [shape = 's32[1]{0}', space=sflag, size = 0x4, scoped, tag = 'scoped memory for attention_pooling.1']
    #allocation4 [shape = 's32[1]{0}', space=sflag, size = 0x4, scoped, tag = 'scoped memory for attention_pooling.1']
    #allocation5 [shape = 'u8[8192]{0}', space=vmem, size = 0x2000, scoped, tag = 'input window, operand 1, single buffered']
    #allocation6 [shape = 's32[1]{0}', space=sflag, size = 0x4, scoped, tag = 'scoped memory for attention_pooling.1']
    #allocation7 [shape = 'u8[32768]{0}', space=vmem, size = 0x8000, scoped, tag = 'input window, operand 3, single buffered']
    #allocation8 [shape = 'u8[32768]{0}', space=vmem, size = 0x8000, scoped, tag = 'input window, operand 4, single buffered']
    #allocation9 [shape = 's32[1]{0}', space=sflag, size = 0x4, scoped, tag = 'scoped memory for attention_pooling.1']
    #allocation10 [shape = 'u8[32768]{0}', space=vmem, size = 0x8000, scoped, tag = 'input window, operand 5, single buffered']
    #allocation11 [shape = 'u8[65536]{0}', space=vmem, size = 0x10000, scoped, tag = 'input window, operand 6, single buffered']
    #allocation12 [shape = 's32[1]{0}', space=sflag, size = 0x4, scoped, tag = 'scoped memory for attention_pooling.1']
    #allocation13 [shape = 'u8[1024]{0}', space=vmem, size = 0x400, scoped, tag = 'output window, operand 0, single buffered']
    %12 = vsyncpa [#allocation3], 0
    %13 = vsyncpa [#allocation6], 0
    %14 = vsyncpa [#allocation9], 0
    %15 = vsyncpa [#allocation12], 0
    %16 = vsyncpa [#allocation4], 0
    // Predicated region
    $region2: #{attention_pooling.1} parent=1 // pred_check
      _
    $region3: #{attention_pooling.1} parent=1 // pred_check_branch
      %18 = sbr.rel (0) target = $region5
    $region4: #{attention_pooling.1} parent=1 // pred_region
      %s20 = ssub.s32 32, 32
      %21 = vsyncadd [#allocation3], %s20
      %s23 = sshll.u32 [#allocation2], 4
      %s24 = int_to_ptr.vmem [resolvable:$true] %s23
      %26 = dma.hbm_to_vmem [thread:$0]  %s0, 32, %s24, [#allocation3]
    $region5: #{attention_pooling.1} parent=1 // pred_fallthru
      _
    // Predicated region
    $region6: #{attention_pooling.1} parent=1 // pred_check
      _
    $region7: #{attention_pooling.1} parent=1 // pred_check_branch
      %28 = sbr.rel (0) target = $region9
    $region8: #{attention_pooling.1} parent=1 // pred_region
      %s30 = ssub.s32 256, 256
      %31 = vsyncadd [#allocation6], %s30
      %s32 = sshll.u32 [#allocation5], 4
      %s33 = int_to_ptr.vmem [resolvable:$true] %s32
      %38 = dma.hbm_to_vmem [thread:$0]  %s1, 256, %s33, [#allocation6], 128, 128, 8
    $region9: #{attention_pooling.1} parent=1 // pred_fallthru
      _
    // Predicated region
    $region10: #{attention_pooling.1} parent=1 // pred_check
      _
    $region11: #{attention_pooling.1} parent=1 // pred_check_branch
      %40 = sbr.rel (0) target = $region13
    $region12: #{attention_pooling.1} parent=1 // pred_region
      _
    $region13: #{attention_pooling.1} parent=1 // pred_fallthru
      _
    // Predicated region
    $region14: #{attention_pooling.1} parent=1 // pred_check
      _
    $region15: #{attention_pooling.1} parent=1 // pred_check_branch
      %42 = sbr.rel (0) target = $region17
    $region16: #{attention_pooling.1} parent=1 // pred_region
      %s44 = ssub.s32 1024, 1024
      %45 = vsyncadd [#allocation6], %s44
      %s46 = sshll.u32 [#allocation7], 4
      %s47 = int_to_ptr.vmem [resolvable:$true] %s46
      %52 = dma.hbm_to_vmem [thread:$0]  %s3, 1024, %s47, [#allocation6], 128, 128, 8
    $region17: #{attention_pooling.1} parent=1 // pred_fallthru
      _
    // Predicated region
    $region18: #{attention_pooling.1} parent=1 // pred_check
      _
    $region19: #{attention_pooling.1} parent=1 // pred_check_branch
      %54 = sbr.rel (0) target = $region21
    $region20: #{attention_pooling.1} parent=1 // pred_region
      %s56 = ssub.s32 1024, 1024
      %57 = vsyncadd [#allocation9], %s56
      %s58 = sshll.u32 [#allocation8], 4
      %s59 = int_to_ptr.vmem [resolvable:$true] %s58
      %64 = dma.hbm_to_vmem [thread:$0]  %s4, 1024, %s59, [#allocation9], 128, 128, 8
    $region21: #{attention_pooling.1} parent=1 // pred_fallthru
      _
    // Predicated region
    $region22: #{attention_pooling.1} parent=1 // pred_check
      _
    $region23: #{attention_pooling.1} parent=1 // pred_check_branch
      %66 = sbr.rel (0) target = $region25
    $region24: #{attention_pooling.1} parent=1 // pred_region
      %s68 = ssub.s32 1024, 1024
      %69 = vsyncadd [#allocation9], %s68
      %s70 = sshll.u32 [#allocation10], 4
      %s71 = int_to_ptr.vmem [resolvable:$true] %s70
      %76 = dma.hbm_to_vmem [thread:$0]  %s5, 1024, %s71, [#allocation9], 128, 128, 8
    $region25: #{attention_pooling.1} parent=1 // pred_fallthru
      _
    // Predicated region
    $region26: #{attention_pooling.1} parent=1 // pred_check
      _
    $region27: #{attention_pooling.1} parent=1 // pred_check_branch
      %78 = sbr.rel (0) target = $region29
    $region28: #{attention_pooling.1} parent=1 // pred_region
      %s80 = ssub.s32 2048, 2048
      %81 = vsyncadd [#allocation12], %s80
      %s82 = sshll.u32 [#allocation11], 4
      %s83 = int_to_ptr.vmem [resolvable:$true] %s82
      %88 = dma.hbm_to_vmem [thread:$0]  %s6, 2048, %s83, [#allocation12], 128, 128, 8
    $region29: #{attention_pooling.1} parent=1 // pred_fallthru
      _
    // Predicated region
    $region30: #{attention_pooling.1} parent=1 // pred_check
      _
    $region31: #{attention_pooling.1} parent=1 // pred_check_branch
      %90 = sbr.rel (0) target = $region33
    $region32: #{attention_pooling.1} parent=1 // pred_region
      %91 = dma.done [#allocation3], 32
    $region33: #{attention_pooling.1} parent=1 // pred_fallthru
      _
    // Predicated region
    $region34: #{attention_pooling.1} parent=1 // pred_check
      _
    $region35: #{attention_pooling.1} parent=1 // pred_check_branch
      %93 = sbr.rel (0) target = $region37
    $region36: #{attention_pooling.1} parent=1 // pred_region
      %94 = dma.done [#allocation6], 256
    $region37: #{attention_pooling.1} parent=1 // pred_fallthru
      _
    // Predicated region
    $region38: #{attention_pooling.1} parent=1 // pred_check
      _
    $region39: #{attention_pooling.1} parent=1 // pred_check_branch
      %96 = sbr.rel (0) target = $region41
    $region40: #{attention_pooling.1} parent=1 // pred_region
      %97 = dma.done [#allocation6], 1024
    $region41: #{attention_pooling.1} parent=1 // pred_fallthru
      _
    // Predicated region
    $region42: #{attention_pooling.1} parent=1 // pred_check
      _
    $region43: #{attention_pooling.1} parent=1 // pred_check_branch
      %99 = sbr.rel (0) target = $region45
    $region44: #{attention_pooling.1} parent=1 // pred_region
      %100 = dma.done [#allocation9], 1024
    $region45: #{attention_pooling.1} parent=1 // pred_fallthru
      _
    // Predicated region
    $region46: #{attention_pooling.1} parent=1 // pred_check
      _
    $region47: #{attention_pooling.1} parent=1 // pred_check_branch
      %102 = sbr.rel (0) target = $region49
    $region48: #{attention_pooling.1} parent=1 // pred_region
      %103 = dma.done [#allocation9], 1024
    $region49: #{attention_pooling.1} parent=1 // pred_fallthru
      _
    // Predicated region
    $region50: #{attention_pooling.1} parent=1 // pred_check
      _
    $region51: #{attention_pooling.1} parent=1 // pred_check_branch
      %105 = sbr.rel (0) target = $region53
    $region52: #{attention_pooling.1} parent=1 // pred_region
      %106 = dma.done [#allocation12], 2048
    $region53: #{attention_pooling.1} parent=1 // pred_fallthru
      _
    %v107 = vld [vmem:[#allocation5] sm:$0xff]
    %v108 = vld [vmem:[#allocation5 + $0x8] sm:$0xff]
    %vm109 = vcmask 523264
    %v110 = vsel %vm109, %v107, 0.0
    %v111 = vrot.slane %v110, 4
    %v112 = vadd.f32 %v110, %v111
    %v113 = vrot.slane %v112, 2
    %v114 = vadd.f32 %v112, %v113
    %v115 = vrot.slane %v114, 1
    %v116 = vadd.f32 %v114, %v115
    %v117 = vsel %vm109, %v108, 0.0
    %v118 = vrot.slane %v117, 4
    %v119 = vadd.f32 %v117, %v118
    %v120 = vrot.slane %v119, 2
    %v121 = vadd.f32 %v119, %v120
    %v122 = vrot.slane %v121, 1
    %v123 = vadd.f32 %v121, %v122
    %v124 = vrcp.pop 8.0
    %v125 = vmul.f32 %v116, %v124
    %v126 = vmul.f32 %v123, %v124
    %v127 = vld [vmem:[#allocation7] sm:$0xff]
    %v128 = vld [vmem:[#allocation7 + $0x8] sm:$0xff]
    %v129 = vld [vmem:[#allocation7 + $0x10] sm:$0xff]
    %v130 = vld [vmem:[#allocation7 + $0x18] sm:$0xff]
    %v131 = vld [vmem:[#allocation7 + $0x20] sm:$0xff]
    %v132 = vld [vmem:[#allocation7 + $0x28] sm:$0xff]
    %v133 = vld [vmem:[#allocation7 + $0x30] sm:$0xff]
    %v134 = vld [vmem:[#allocation7 + $0x38] sm:$0xff]
    %vm137 = vcmask 1041409
    %v138 = vsel %vm137, %v126, %v125
    %v139 = vsel %vm109, %v138, 0
    %141 = vmatprep.subr.mxu0 0.0
    %142 = vmatpush1.msra.mxu0 %v127
    %143 = vmatprep.subr.mxu0 0.0
    %144 = vmatpush1.msra.mxu0 %v128
    %145 = vmatprep.subr.mxu0 0.0
    %146 = vmatpush1.msra.mxu0 %v129
    %147 = vmatprep.subr.mxu0 0.0
    %148 = vmatpush1.msra.mxu0 %v130
    %149 = vmatprep.subr.mxu0 0.0
    %150 = vmatpush1.msra.mxu0 %v131
    %151 = vmatprep.subr.mxu0 0.0
    %152 = vmatpush1.msra.mxu0 %v132
    %153 = vmatprep.subr.mxu0 0.0
    %154 = vmatpush1.msra.mxu0 %v133
    %155 = vmatprep.subr.mxu0 0.0
    %156 = vmatpush1.msra.mxu0 %v134
    %157 = vmatprep.subr.mxu0 0.0
    %158 = vmatpush1.msra.mxu0 0.0
    %159 = vmatprep.subr.mxu0 0.0
    %160 = vmatpush1.msra.mxu0 0.0
    %161 = vmatprep.subr.mxu0 0.0
    %162 = vmatpush1.msra.mxu0 0.0
    %163 = vmatprep.subr.mxu0 0.0
    %164 = vmatpush1.msra.mxu0 0.0
    %165 = vmatprep.subr.mxu0 0.0
    %166 = vmatpush1.msra.mxu0 0.0
    %167 = vmatprep.subr.mxu0 0.0
    %168 = vmatpush1.msra.mxu0 0.0
    %169 = vmatprep.subr.mxu0 0.0
    %170 = vmatpush1.msra.mxu0 0.0
    %171 = vmatprep.subr.mxu0 0.0
    %172 = vmatpush1.msra.mxu0 0.0
    %173 = vmatprep.subr.mxu0 0.0
    %174 = vmatpush1.msra.mxu0 0.0
    %175 = vmatprep.subr.mxu0 0.0
    %176 = vmatpush1.msra.mxu0 0.0
    %177 = vmatprep.subr.mxu0 0.0
    %178 = vmatpush1.msra.mxu0 0.0
    %179 = vmatprep.subr.mxu0 0.0
    %180 = vmatpush1.msra.mxu0 0.0
    %181 = vmatprep.subr.mxu0 0.0
    %182 = vmatpush1.msra.mxu0 0.0
    %183 = vmatprep.subr.mxu0 0.0
    %184 = vmatpush1.msra.mxu0 0.0
    %185 = vmatprep.subr.mxu0 0.0
    %186 = vmatpush1.msra.mxu0 0.0
    %187 = vmatprep.subr.mxu0 0.0
    %188 = vmatpush1.msra.mxu0 0.0
    %189 = vmatprep.subr.mxu0 0.0
    %190 = vmatpush1.msra.mxu0 0.0
    %191 = vmatprep.subr.mxu0 0.0
    %192 = vmatpush1.msra.mxu0 0.0
    %193 = vmatprep.subr.mxu0 0.0
    %194 = vmatpush1.msra.mxu0 0.0
    %195 = vmatprep.subr.mxu0 0.0
    %196 = vmatpush1.msra.mxu0 0.0
    %197 = vmatprep.subr.mxu0 0.0
    %198 = vmatpush1.msra.mxu0 0.0
    %199 = vmatprep.subr.mxu0 0.0
    %200 = vmatpush1.msra.mxu0 0.0
    %201 = vmatprep.subr.mxu0 0.0
    %202 = vmatpush1.msra.mxu0 0.0
    %203 = vmatprep.subr.mxu0 0.0
    %204 = vmatpush1.msra.mxu0 0.0
    %205 = vmatprep.mubr.f32.mxu0 0.0
    %206 = vmatmul.mubr.f32.gmra.mrb[0].mxu0 %v139
    %v207 = vpop.f32.mrb[0].mxu0
    %v208 = vadd.f32 0.0, %v207
    %v209 = vpop.f32.mrb[0].mxu0
    %210 = vdwg.mxu0
    %212 = vrot.lane.b32.xlu0 %v208, 64
    %v213 = vpop.permute.xlu0 %212
    %v215 = vld [vmem:[#allocation8] sm:$0xff]
    %v216 = vld [vmem:[#allocation8 + $0x8] sm:$0xff]
    %v217 = vld [vmem:[#allocation8 + $0x10] sm:$0xff]
    %v218 = vld [vmem:[#allocation8 + $0x18] sm:$0xff]
    %v219 = vld [vmem:[#allocation8 + $0x20] sm:$0xff]
    %v220 = vld [vmem:[#allocation8 + $0x28] sm:$0xff]
    %v221 = vld [vmem:[#allocation8 + $0x30] sm:$0xff]
    %v222 = vld [vmem:[#allocation8 + $0x38] sm:$0xff]
    %231 = vrot.lane.b32.xlu0 %v215, 64
    %v232 = vpop.permute.xlu0 %231
    %233 = vrot.lane.b32.xlu0 %v216, 64
    %v234 = vpop.permute.xlu0 %233
    %235 = vrot.lane.b32.xlu0 %v217, 64
    %v236 = vpop.permute.xlu0 %235
    %237 = vrot.lane.b32.xlu0 %v218, 64
    %v238 = vpop.permute.xlu0 %237
    %239 = vrot.lane.b32.xlu0 %v219, 64
    %v240 = vpop.permute.xlu0 %239
    %241 = vrot.lane.b32.xlu0 %v220, 64
    %v242 = vpop.permute.xlu0 %241
    %243 = vrot.lane.b32.xlu0 %v221, 64
    %v244 = vpop.permute.xlu0 %243
    %245 = vrot.lane.b32.xlu0 %v222, 64
    %v246 = vpop.permute.xlu0 %245
    %247 = vxpose.xlu0.b32.start [1/16] %v208, 128
    %248 = vxpose.xlu0.b32.cont [2/16] 0.0, 128
    %249 = vxpose.xlu0.b32.cont [3/16] 0.0, 128
    %250 = vxpose.xlu0.b32.cont [4/16] 0.0, 128
    %251 = vxpose.xlu0.b32.cont [5/16] 0.0, 128
    %252 = vxpose.xlu0.b32.cont [6/16] 0.0, 128
    %253 = vxpose.xlu0.b32.cont [7/16] 0.0, 128
    %254 = vxpose.xlu0.b32.cont [8/16] 0.0, 128
    %255 = vxpose.xlu0.b32.cont [9/16] 0.0, 128
    %256 = vxpose.xlu0.b32.cont [10/16] 0.0, 128
    %257 = vxpose.xlu0.b32.cont [11/16] 0.0, 128
    %258 = vxpose.xlu0.b32.cont [12/16] 0.0, 128
    %259 = vxpose.xlu0.b32.cont [13/16] 0.0, 128
    %260 = vxpose.xlu0.b32.cont [14/16] 0.0, 128
    %261 = vxpose.xlu0.b32.cont [15/16] 0.0, 128
    %262 = vxpose.xlu0.b32.end [16/16] 0.0, 128
    %v263 = vpop.trf.xlu0
    %v264 = vpop.trf.xlu0
    %v265 = vpop.trf.xlu0
    %v266 = vpop.trf.xlu0
    %v267 = vpop.trf.xlu0
    %v268 = vpop.trf.xlu0
    %v269 = vpop.trf.xlu0
    %v270 = vpop.trf.xlu0
    %v271 = vpop.trf.xlu0
    %v272 = vpop.trf.xlu0
    %v273 = vpop.trf.xlu0
    %v274 = vpop.trf.xlu0
    %v275 = vpop.trf.xlu0
    %v276 = vpop.trf.xlu0
    %v277 = vpop.trf.xlu0
    %v278 = vpop.trf.xlu0
    %279 = vxpose.xlu0.b32.start [1/16] %v213, 128
    %280 = vxpose.xlu0.b32.cont [2/16] 0.0, 128
    %281 = vxpose.xlu0.b32.cont [3/16] 0.0, 128
    %282 = vxpose.xlu0.b32.cont [4/16] 0.0, 128
    %283 = vxpose.xlu0.b32.cont [5/16] 0.0, 128
    %284 = vxpose.xlu0.b32.cont [6/16] 0.0, 128
    %285 = vxpose.xlu0.b32.cont [7/16] 0.0, 128
    %286 = vxpose.xlu0.b32.cont [8/16] 0.0, 128
    %287 = vxpose.xlu0.b32.cont [9/16] 0.0, 128
    %288 = vxpose.xlu0.b32.cont [10/16] 0.0, 128
    %289 = vxpose.xlu0.b32.cont [11/16] 0.0, 128
    %290 = vxpose.xlu0.b32.cont [12/16] 0.0, 128
    %291 = vxpose.xlu0.b32.cont [13/16] 0.0, 128
    %292 = vxpose.xlu0.b32.cont [14/16] 0.0, 128
    %293 = vxpose.xlu0.b32.cont [15/16] 0.0, 128
    %294 = vxpose.xlu0.b32.end [16/16] 0.0, 128
    %v295 = vpop.trf.xlu0
    %v296 = vpop.trf.xlu0
    %v297 = vpop.trf.xlu0
    %v298 = vpop.trf.xlu0
    %v299 = vpop.trf.xlu0
    %v300 = vpop.trf.xlu0
    %v301 = vpop.trf.xlu0
    %v302 = vpop.trf.xlu0
    %v303 = vpop.trf.xlu0
    %v304 = vpop.trf.xlu0
    %v305 = vpop.trf.xlu0
    %v306 = vpop.trf.xlu0
    %v307 = vpop.trf.xlu0
    %v308 = vpop.trf.xlu0
    %v309 = vpop.trf.xlu0
    %v310 = vpop.trf.xlu0
    %v311 = vsel %vm109, %v215, 0
    %v313 = vsel %vm109, %v216, 0
    %v315 = vsel %vm109, %v217, 0
    %v317 = vsel %vm109, %v218, 0
    %v319 = vsel %vm109, %v219, 0
    %v321 = vsel %vm109, %v220, 0
    %v323 = vsel %vm109, %v221, 0
    %v325 = vsel %vm109, %v222, 0
    %327 = vmatprep.subr.mxu0 0.0
    %328 = vmatpush1.msra.mxu0 %v263
    %329 = vmatprep.subr.mxu0 0.0
    %330 = vmatpush1.msra.mxu0 %v264
    %331 = vmatprep.subr.mxu0 0.0
    %332 = vmatpush1.msra.mxu0 %v265
    %333 = vmatprep.subr.mxu0 0.0
    %334 = vmatpush1.msra.mxu0 %v266
    %335 = vmatprep.subr.mxu0 0.0
    %336 = vmatpush1.msra.mxu0 %v267
    %337 = vmatprep.subr.mxu0 0.0
    %338 = vmatpush1.msra.mxu0 %v268
    %339 = vmatprep.subr.mxu0 0.0
    %340 = vmatpush1.msra.mxu0 %v269
    %341 = vmatprep.subr.mxu0 0.0
    %342 = vmatpush1.msra.mxu0 %v270
    %343 = vmatprep.subr.mxu0 0.0
    %344 = vmatpush1.msra.mxu0 0.0
    %345 = vmatprep.subr.mxu0 0.0
    %346 = vmatpush1.msra.mxu0 0.0
    %347 = vmatprep.subr.mxu0 0.0
    %348 = vmatpush1.msra.mxu0 0.0
    %349 = vmatprep.subr.mxu0 0.0
    %350 = vmatpush1.msra.mxu0 0.0
    %351 = vmatprep.subr.mxu0 0.0
    %352 = vmatpush1.msra.mxu0 0.0
    %353 = vmatprep.subr.mxu0 0.0
    %354 = vmatpush1.msra.mxu0 0.0
    %355 = vmatprep.subr.mxu0 0.0
    %356 = vmatpush1.msra.mxu0 0.0
    %357 = vmatprep.subr.mxu0 0.0
    %358 = vmatpush1.msra.mxu0 0.0
    %359 = vmatprep.subr.mxu0 0.0
    %360 = vmatpush1.msra.mxu0 0.0
    %361 = vmatprep.subr.mxu0 0.0
    %362 = vmatpush1.msra.mxu0 0.0
    %363 = vmatprep.subr.mxu0 0.0
    %364 = vmatpush1.msra.mxu0 0.0
    %365 = vmatprep.subr.mxu0 0.0
    %366 = vmatpush1.msra.mxu0 0.0
    %367 = vmatprep.subr.mxu0 0.0
    %368 = vmatpush1.msra.mxu0 0.0
    %369 = vmatprep.subr.mxu0 0.0
    %370 = vmatpush1.msra.mxu0 0.0
    %371 = vmatprep.subr.mxu0 0.0
    %372 = vmatpush1.msra.mxu0 0.0
    %373 = vmatprep.subr.mxu0 0.0
    %374 = vmatpush1.msra.mxu0 0.0
    %375 = vmatprep.subr.mxu0 0.0
    %376 = vmatpush1.msra.mxu0 0.0
    %377 = vmatprep.subr.mxu0 0.0
    %378 = vmatpush1.msra.mxu0 0.0
    %379 = vmatprep.subr.mxu0 0.0
    %380 = vmatpush1.msra.mxu0 0.0
    %381 = vmatprep.subr.mxu0 0.0
    %382 = vmatpush1.msra.mxu0 0.0
    %383 = vmatprep.subr.mxu0 0.0
    %384 = vmatpush1.msra.mxu0 0.0
    %385 = vmatprep.subr.mxu0 0.0
    %386 = vmatpush1.msra.mxu0 0.0
    %387 = vmatprep.subr.mxu0 0.0
    %388 = vmatpush1.msra.mxu0 0.0
    %389 = vmatprep.subr.mxu0 0.0
    %390 = vmatpush1.msra.mxu0 0.0
    %391 = vmatprep.mubr.f32.mxu0 0.0
    %392 = vmatmul.mubr.f32.gmra.mrb[0].mxu0 %v311
    %v393 = vpop.f32.mrb[0].mxu0
    %v394 = vadd.f32 0.0, %v393
    %v395 = vpop.f32.mrb[0].mxu0
    %396 = vmatprep.mubr.f32.mxu0 0.0
    %397 = vmatmul.mubr.f32.gmra.mrb[0].mxu0 %v313
    %v398 = vpop.f32.mrb[0].mxu0
    %v399 = vadd.f32 0.0, %v398
    %v400 = vpop.f32.mrb[0].mxu0
    %401 = vmatprep.mubr.f32.mxu0 0.0
    %402 = vmatmul.mubr.f32.gmra.mrb[0].mxu0 %v315
    %v403 = vpop.f32.mrb[0].mxu0
    %v404 = vadd.f32 0.0, %v403
    %v405 = vpop.f32.mrb[0].mxu0
    %406 = vmatprep.mubr.f32.mxu0 0.0
    %407 = vmatmul.mubr.f32.gmra.mrb[0].mxu0 %v317
    %v408 = vpop.f32.mrb[0].mxu0
    %v409 = vadd.f32 0.0, %v408
    %v410 = vpop.f32.mrb[0].mxu0
    %411 = vmatprep.mubr.f32.mxu0 0.0
    %412 = vmatmul.mubr.f32.gmra.mrb[0].mxu0 %v319
    %v413 = vpop.f32.mrb[0].mxu0
    %v414 = vadd.f32 0.0, %v413
    %v415 = vpop.f32.mrb[0].mxu0
    %416 = vmatprep.mubr.f32.mxu0 0.0
    %417 = vmatmul.mubr.f32.gmra.mrb[0].mxu0 %v321
    %v418 = vpop.f32.mrb[0].mxu0
    %v419 = vadd.f32 0.0, %v418
    %v420 = vpop.f32.mrb[0].mxu0
    %421 = vmatprep.mubr.f32.mxu0 0.0
    %422 = vmatmul.mubr.f32.gmra.mrb[0].mxu0 %v323
    %v423 = vpop.f32.mrb[0].mxu0
    %v424 = vadd.f32 0.0, %v423
    %v425 = vpop.f32.mrb[0].mxu0
    %426 = vmatprep.mubr.f32.mxu0 0.0
    %427 = vmatmul.mubr.f32.gmra.mrb[0].mxu0 %v325
    %v428 = vpop.f32.mrb[0].mxu0
    %v429 = vadd.f32 0.0, %v428
    %v430 = vpop.f32.mrb[0].mxu0
    %431 = vdwg.mxu0
    %v432 = vsel %vm109, %v232, 0
    %v434 = vsel %vm109, %v234, 0
    %v436 = vsel %vm109, %v236, 0
    %v438 = vsel %vm109, %v238, 0
    %v440 = vsel %vm109, %v240, 0
    %v442 = vsel %vm109, %v242, 0
    %v444 = vsel %vm109, %v244, 0
    %v446 = vsel %vm109, %v246, 0
    %448 = vmatprep.subr.mxu0 0.0
    %449 = vmatpush1.msra.mxu0 %v295
    %450 = vmatprep.subr.mxu0 0.0
    %451 = vmatpush1.msra.mxu0 %v296
    %452 = vmatprep.subr.mxu0 0.0
    %453 = vmatpush1.msra.mxu0 %v297
    %454 = vmatprep.subr.mxu0 0.0
    %455 = vmatpush1.msra.mxu0 %v298
    %456 = vmatprep.subr.mxu0 0.0
    %457 = vmatpush1.msra.mxu0 %v299
    %458 = vmatprep.subr.mxu0 0.0
    %459 = vmatpush1.msra.mxu0 %v300
    %460 = vmatprep.subr.mxu0 0.0
    %461 = vmatpush1.msra.mxu0 %v301
    %462 = vmatprep.subr.mxu0 0.0
    %463 = vmatpush1.msra.mxu0 %v302
    %464 = vmatprep.subr.mxu0 0.0
    %465 = vmatpush1.msra.mxu0 0.0
    %466 = vmatprep.subr.mxu0 0.0
    %467 = vmatpush1.msra.mxu0 0.0
    %468 = vmatprep.subr.mxu0 0.0
    %469 = vmatpush1.msra.mxu0 0.0
    %470 = vmatprep.subr.mxu0 0.0
    %471 = vmatpush1.msra.mxu0 0.0
    %472 = vmatprep.subr.mxu0 0.0
    %473 = vmatpush1.msra.mxu0 0.0
    %474 = vmatprep.subr.mxu0 0.0
    %475 = vmatpush1.msra.mxu0 0.0
    %476 = vmatprep.subr.mxu0 0.0
    %477 = vmatpush1.msra.mxu0 0.0
    %478 = vmatprep.subr.mxu0 0.0
    %479 = vmatpush1.msra.mxu0 0.0
    %480 = vmatprep.subr.mxu0 0.0
    %481 = vmatpush1.msra.mxu0 0.0
    %482 = vmatprep.subr.mxu0 0.0
    %483 = vmatpush1.msra.mxu0 0.0
    %484 = vmatprep.subr.mxu0 0.0
    %485 = vmatpush1.msra.mxu0 0.0
    %486 = vmatprep.subr.mxu0 0.0
    %487 = vmatpush1.msra.mxu0 0.0
    %488 = vmatprep.subr.mxu0 0.0
    %489 = vmatpush1.msra.mxu0 0.0
    %490 = vmatprep.subr.mxu0 0.0
    %491 = vmatpush1.msra.mxu0 0.0
    %492 = vmatprep.subr.mxu0 0.0
    %493 = vmatpush1.msra.mxu0 0.0
    %494 = vmatprep.subr.mxu0 0.0
    %495 = vmatpush1.msra.mxu0 0.0
    %496 = vmatprep.subr.mxu0 0.0
    %497 = vmatpush1.msra.mxu0 0.0
    %498 = vmatprep.subr.mxu0 0.0
    %499 = vmatpush1.msra.mxu0 0.0
    %500 = vmatprep.subr.mxu0 0.0
    %501 = vmatpush1.msra.mxu0 0.0
    %502 = vmatprep.subr.mxu0 0.0
    %503 = vmatpush1.msra.mxu0 0.0
    %504 = vmatprep.subr.mxu0 0.0
    %505 = vmatpush1.msra.mxu0 0.0
    %506 = vmatprep.subr.mxu0 0.0
    %507 = vmatpush1.msra.mxu0 0.0
    %508 = vmatprep.subr.mxu0 0.0
    %509 = vmatpush1.msra.mxu0 0.0
    %510 = vmatprep.subr.mxu0 0.0
    %511 = vmatpush1.msra.mxu0 0.0
    %512 = vmatprep.mubr.f32.mxu0 0.0
    %513 = vmatmul.mubr.f32.gmra.mrb[0].mxu0 %v432
    %v514 = vpop.f32.mrb[0].mxu0
    %v515 = vadd.f32 0.0, %v514
    %v516 = vpop.f32.mrb[0].mxu0
    %517 = vmatprep.mubr.f32.mxu0 0.0
    %518 = vmatmul.mubr.f32.gmra.mrb[0].mxu0 %v434
    %v519 = vpop.f32.mrb[0].mxu0
    %v520 = vadd.f32 0.0, %v519
    %v521 = vpop.f32.mrb[0].mxu0
    %522 = vmatprep.mubr.f32.mxu0 0.0
    %523 = vmatmul.mubr.f32.gmra.mrb[0].mxu0 %v436
    %v524 = vpop.f32.mrb[0].mxu0
    %v525 = vadd.f32 0.0, %v524
    %v526 = vpop.f32.mrb[0].mxu0
    %527 = vmatprep.mubr.f32.mxu0 0.0
    %528 = vmatmul.mubr.f32.gmra.mrb[0].mxu0 %v438
    %v529 = vpop.f32.mrb[0].mxu0
    %v530 = vadd.f32 0.0, %v529
    %v531 = vpop.f32.mrb[0].mxu0
    %532 = vmatprep.mubr.f32.mxu0 0.0
    %533 = vmatmul.mubr.f32.gmra.mrb[0].mxu0 %v440
    %v534 = vpop.f32.mrb[0].mxu0
    %v535 = vadd.f32 0.0, %v534
    %v536 = vpop.f32.mrb[0].mxu0
    %537 = vmatprep.mubr.f32.mxu0 0.0
    %538 = vmatmul.mubr.f32.gmra.mrb[0].mxu0 %v442
    %v539 = vpop.f32.mrb[0].mxu0
    %v540 = vadd.f32 0.0, %v539
    %v541 = vpop.f32.mrb[0].mxu0
    %542 = vmatprep.mubr.f32.mxu0 0.0
    %543 = vmatmul.mubr.f32.gmra.mrb[0].mxu0 %v444
    %v544 = vpop.f32.mrb[0].mxu0
    %v545 = vadd.f32 0.0, %v544
    %v546 = vpop.f32.mrb[0].mxu0
    %547 = vmatprep.mubr.f32.mxu0 0.0
    %548 = vmatmul.mubr.f32.gmra.mrb[0].mxu0 %v446
    %v549 = vpop.f32.mrb[0].mxu0
    %v550 = vadd.f32 0.0, %v549
    %v551 = vpop.f32.mrb[0].mxu0
    %552 = vdwg.mxu0
    %553 = vxpose.xlu0.b32.start [1/16] %v394, 128
    %554 = vxpose.xlu0.b32.cont [2/16] %v399, 128
    %555 = vxpose.xlu0.b32.cont [3/16] %v404, 128
    %556 = vxpose.xlu0.b32.cont [4/16] %v409, 128
    %557 = vxpose.xlu0.b32.cont [5/16] %v414, 128
    %558 = vxpose.xlu0.b32.cont [6/16] %v419, 128
    %559 = vxpose.xlu0.b32.cont [7/16] %v424, 128
    %560 = vxpose.xlu0.b32.cont [8/16] %v429, 128
    %561 = vxpose.xlu0.b32.cont [9/16] 0.0, 128
    %562 = vxpose.xlu0.b32.cont [10/16] 0.0, 128
    %563 = vxpose.xlu0.b32.cont [11/16] 0.0, 128
    %564 = vxpose.xlu0.b32.cont [12/16] 0.0, 128
    %565 = vxpose.xlu0.b32.cont [13/16] 0.0, 128
    %566 = vxpose.xlu0.b32.cont [14/16] 0.0, 128
    %567 = vxpose.xlu0.b32.cont [15/16] 0.0, 128
    %568 = vxpose.xlu0.b32.end [16/16] 0.0, 128
    %v569 = vpop.trf.xlu0
    %v570 = vpop.trf.xlu0
    %v571 = vpop.trf.xlu0
    %v572 = vpop.trf.xlu0
    %v573 = vpop.trf.xlu0
    %v574 = vpop.trf.xlu0
    %v575 = vpop.trf.xlu0
    %v576 = vpop.trf.xlu0
    %v577 = vpop.trf.xlu0
    %v578 = vpop.trf.xlu0
    %v579 = vpop.trf.xlu0
    %v580 = vpop.trf.xlu0
    %v581 = vpop.trf.xlu0
    %v582 = vpop.trf.xlu0
    %v583 = vpop.trf.xlu0
    %v584 = vpop.trf.xlu0
    %585 = vxpose.xlu0.b32.start [1/16] %v515, 128
    %586 = vxpose.xlu0.b32.cont [2/16] %v520, 128
    %587 = vxpose.xlu0.b32.cont [3/16] %v525, 128
    %588 = vxpose.xlu0.b32.cont [4/16] %v530, 128
    %589 = vxpose.xlu0.b32.cont [5/16] %v535, 128
    %590 = vxpose.xlu0.b32.cont [6/16] %v540, 128
    %591 = vxpose.xlu0.b32.cont [7/16] %v545, 128
    %592 = vxpose.xlu0.b32.cont [8/16] %v550, 128
    %593 = vxpose.xlu0.b32.cont [9/16] 0.0, 128
    %594 = vxpose.xlu0.b32.cont [10/16] 0.0, 128
    %595 = vxpose.xlu0.b32.cont [11/16] 0.0, 128
    %596 = vxpose.xlu0.b32.cont [12/16] 0.0, 128
    %597 = vxpose.xlu0.b32.cont [13/16] 0.0, 128
    %598 = vxpose.xlu0.b32.cont [14/16] 0.0, 128
    %599 = vxpose.xlu0.b32.cont [15/16] 0.0, 128
    %600 = vxpose.xlu0.b32.end [16/16] 0.0, 128
    %v601 = vpop.trf.xlu0
    %v602 = vpop.trf.xlu0
    %v603 = vpop.trf.xlu0
    %v604 = vpop.trf.xlu0
    %v605 = vpop.trf.xlu0
    %v606 = vpop.trf.xlu0
    %v607 = vpop.trf.xlu0
    %v608 = vpop.trf.xlu0
    %v609 = vpop.trf.xlu0
    %v610 = vpop.trf.xlu0
    %v611 = vpop.trf.xlu0
    %v612 = vpop.trf.xlu0
    %v613 = vpop.trf.xlu0
    %v614 = vpop.trf.xlu0
    %v615 = vpop.trf.xlu0
    %v616 = vpop.trf.xlu0
    %v617 = vcombine.low %v569, %v601
    %v619 = vunpack.c.l.s4 1934713408
    %v620 = vunpack.c.0.s8 %v619
    %v621 = vlaneseq
    %v622 = vshrl.u32 %v621, 7
    %v623 = vsub.s32 %v620, %v622
    %v624 = vrot.slane %v617, %v623
    %v625 = vcombine.high %v624, 0.0
    %v627 = vsel %vm109, %v624, 0
    %v630 = vsel %vm109, %v107, 0
    %632 = vmatprep.subr.mxu0 0.0
    %633 = vmatpush1.xpose.msra.mxu0 %v630
    %634 = vmatprep.subr.mxu0 0.0
    %635 = vmatpush1.xpose.msra.mxu0 0.0
    %636 = vmatprep.subr.mxu0 0.0
    %637 = vmatpush1.xpose.msra.mxu0 0.0
    %638 = vmatprep.subr.mxu0 0.0
    %639 = vmatpush1.xpose.msra.mxu0 0.0
    %640 = vmatprep.subr.mxu0 0.0
    %641 = vmatpush1.xpose.msra.mxu0 0.0
    %642 = vmatprep.subr.mxu0 0.0
    %643 = vmatpush1.xpose.msra.mxu0 0.0
    %644 = vmatprep.subr.mxu0 0.0
    %645 = vmatpush1.xpose.msra.mxu0 0.0
    %646 = vmatprep.subr.mxu0 0.0
    %647 = vmatpush1.xpose.msra.mxu0 0.0
    %648 = vmatprep.subr.mxu0 0.0
    %649 = vmatpush1.xpose.msra.mxu0 0.0
    %650 = vmatprep.subr.mxu0 0.0
    %651 = vmatpush1.xpose.msra.mxu0 0.0
    %652 = vmatprep.subr.mxu0 0.0
    %653 = vmatpush1.xpose.msra.mxu0 0.0
    %654 = vmatprep.subr.mxu0 0.0
    %655 = vmatpush1.xpose.msra.mxu0 0.0
    %656 = vmatprep.subr.mxu0 0.0
    %657 = vmatpush1.xpose.msra.mxu0 0.0
    %658 = vmatprep.subr.mxu0 0.0
    %659 = vmatpush1.xpose.msra.mxu0 0.0
    %660 = vmatprep.subr.mxu0 0.0
    %661 = vmatpush1.xpose.msra.mxu0 0.0
    %662 = vmatprep.subr.mxu0 0.0
    %663 = vmatpush1.xpose.msra.mxu0 0.0
    %664 = vmatprep.subr.mxu0 0.0
    %665 = vmatpush1.xpose.msra.mxu0 0.0
    %666 = vmatprep.subr.mxu0 0.0
    %667 = vmatpush1.xpose.msra.mxu0 0.0
    %668 = vmatprep.subr.mxu0 0.0
    %669 = vmatpush1.xpose.msra.mxu0 0.0
    %670 = vmatprep.subr.mxu0 0.0
    %671 = vmatpush1.xpose.msra.mxu0 0.0
    %672 = vmatprep.subr.mxu0 0.0
    %673 = vmatpush1.xpose.msra.mxu0 0.0
    %674 = vmatprep.subr.mxu0 0.0
    %675 = vmatpush1.xpose.msra.mxu0 0.0
    %676 = vmatprep.subr.mxu0 0.0
    %677 = vmatpush1.xpose.msra.mxu0 0.0
    %678 = vmatprep.subr.mxu0 0.0
    %679 = vmatpush1.xpose.msra.mxu0 0.0
    %680 = vmatprep.subr.mxu0 0.0
    %681 = vmatpush1.xpose.msra.mxu0 0.0
    %682 = vmatprep.subr.mxu0 0.0
    %683 = vmatpush1.xpose.msra.mxu0 0.0
    %684 = vmatprep.subr.mxu0 0.0
    %685 = vmatpush1.xpose.msra.mxu0 0.0
    %686 = vmatprep.subr.mxu0 0.0
    %687 = vmatpush1.xpose.msra.mxu0 0.0
    %688 = vmatprep.subr.mxu0 0.0
    %689 = vmatpush1.xpose.msra.mxu0 0.0
    %690 = vmatprep.subr.mxu0 0.0
    %691 = vmatpush1.xpose.msra.mxu0 0.0
    %692 = vmatprep.subr.mxu0 0.0
    %693 = vmatpush1.xpose.msra.mxu0 0.0
    %694 = vmatprep.subr.mxu0 0.0
    %695 = vmatpush1.xpose.msra.mxu0 0.0
    %696 = vmatprep.mubr.f32.mxu0 0.0
    %697 = vmatmul.mubr.f32.gmra.mrb[0].mxu0 %v627
    %v698 = vpop.f32.mrb[0].mxu0
    %v699 = vadd.f32 0.0, %v698
    %v700 = vpop.f32.mrb[0].mxu0
    %701 = vdwg.mxu0
    %v703 = vsel %vm109, %v625, 0
    %v706 = vsel %vm109, %v108, 0
    %708 = vmatprep.subr.mxu0 0.0
    %709 = vmatpush1.xpose.msra.mxu0 %v706
    %710 = vmatprep.subr.mxu0 0.0
    %711 = vmatpush1.xpose.msra.mxu0 0.0
    %712 = vmatprep.subr.mxu0 0.0
    %713 = vmatpush1.xpose.msra.mxu0 0.0
    %714 = vmatprep.subr.mxu0 0.0
    %715 = vmatpush1.xpose.msra.mxu0 0.0
    %716 = vmatprep.subr.mxu0 0.0
    %717 = vmatpush1.xpose.msra.mxu0 0.0
    %718 = vmatprep.subr.mxu0 0.0
    %719 = vmatpush1.xpose.msra.mxu0 0.0
    %720 = vmatprep.subr.mxu0 0.0
    %721 = vmatpush1.xpose.msra.mxu0 0.0
    %722 = vmatprep.subr.mxu0 0.0
    %723 = vmatpush1.xpose.msra.mxu0 0.0
    %724 = vmatprep.subr.mxu0 0.0
    %725 = vmatpush1.xpose.msra.mxu0 0.0
    %726 = vmatprep.subr.mxu0 0.0
    %727 = vmatpush1.xpose.msra.mxu0 0.0
    %728 = vmatprep.subr.mxu0 0.0
    %729 = vmatpush1.xpose.msra.mxu0 0.0
    %730 = vmatprep.subr.mxu0 0.0
    %731 = vmatpush1.xpose.msra.mxu0 0.0
    %732 = vmatprep.subr.mxu0 0.0
    %733 = vmatpush1.xpose.msra.mxu0 0.0
    %734 = vmatprep.subr.mxu0 0.0
    %735 = vmatpush1.xpose.msra.mxu0 0.0
    %736 = vmatprep.subr.mxu0 0.0
    %737 = vmatpush1.xpose.msra.mxu0 0.0
    %738 = vmatprep.subr.mxu0 0.0
    %739 = vmatpush1.xpose.msra.mxu0 0.0
    %740 = vmatprep.subr.mxu0 0.0
    %741 = vmatpush1.xpose.msra.mxu0 0.0
    %742 = vmatprep.subr.mxu0 0.0
    %743 = vmatpush1.xpose.msra.mxu0 0.0
    %744 = vmatprep.subr.mxu0 0.0
    %745 = vmatpush1.xpose.msra.mxu0 0.0
    %746 = vmatprep.subr.mxu0 0.0
    %747 = vmatpush1.xpose.msra.mxu0 0.0
    %748 = vmatprep.subr.mxu0 0.0
    %749 = vmatpush1.xpose.msra.mxu0 0.0
    %750 = vmatprep.subr.mxu0 0.0
    %751 = vmatpush1.xpose.msra.mxu0 0.0
    %752 = vmatprep.subr.mxu0 0.0
    %753 = vmatpush1.xpose.msra.mxu0 0.0
    %754 = vmatprep.subr.mxu0 0.0
    %755 = vmatpush1.xpose.msra.mxu0 0.0
    %756 = vmatprep.subr.mxu0 0.0
    %757 = vmatpush1.xpose.msra.mxu0 0.0
    %758 = vmatprep.subr.mxu0 0.0
    %759 = vmatpush1.xpose.msra.mxu0 0.0
    %760 = vmatprep.subr.mxu0 0.0
    %761 = vmatpush1.xpose.msra.mxu0 0.0
    %762 = vmatprep.subr.mxu0 0.0
    %763 = vmatpush1.xpose.msra.mxu0 0.0
    %764 = vmatprep.subr.mxu0 0.0
    %765 = vmatpush1.xpose.msra.mxu0 0.0
    %766 = vmatprep.subr.mxu0 0.0
    %767 = vmatpush1.xpose.msra.mxu0 0.0
    %768 = vmatprep.subr.mxu0 0.0
    %769 = vmatpush1.xpose.msra.mxu0 0.0
    %770 = vmatprep.subr.mxu0 0.0
    %771 = vmatpush1.xpose.msra.mxu0 0.0
    %772 = vmatprep.mubr.f32.mxu0 0.0
    %773 = vmatmul.mubr.f32.gmra.mrb[0].mxu0 %v703
    %v774 = vpop.f32.mrb[0].mxu0
    %v775 = vadd.f32 0.0, %v774
    %v776 = vpop.f32.mrb[0].mxu0
    %777 = vdwg.mxu0
    %v778 = vmul.f32 %v699, 0.125
    %v779 = vmul.f32 %v775, 0.125
    %v780 = vld [vmem:[%s2] sm:$0x3]
    %vm781 = vcmp.ne.s32.totalorder %v780, 0
    %v782 = vsel %vm781, 1, 0
    %v784 = vunpack.c.l.s4 1966171168
    %v785 = vunpack.c.0.s8 %v784
    %v786 = vlaneseq
    %v787 = vshrl.u32 %v786, 7
    %v788 = vsub.s32 %v785, %v787
    %v789 = vrot.slane %v782, %v788
    %v790 = vcombine.high %v789, %v789
    %v792 = vunpack.c.l.s4 1966171168
    %v793 = vunpack.c.0.s8 %v792
    %v794 = vlaneseq
    %v795 = vshrl.u32 %v794, 7
    %v796 = vsub.s32 %v793, %v795
    %v797 = vrot.slane %v789, %v796
    %v799 = vunpack.c.l.s4 1966171168
    %v800 = vunpack.c.0.s8 %v799
    %v801 = vlaneseq
    %v802 = vshrl.u32 %v801, 7
    %v803 = vsub.s32 %v800, %v802
    %v804 = vrot.slane %v790, %v803
    %vm805 = vcmp.ne.s32.totalorder %v797, 0
    %vm806 = vcmp.ne.s32.totalorder %v804, 0
    %v807 = vsel %vm805, 1, 0
    %v808 = vsel %vm806, 1, 0
    %v809 = vlaneseq
    %v810 = vshrl.u32 %v809, 7
    %v811 = vsub.s32 0, %v810
    %v812 = vrot.slane %v807, %v811
    %v813 = vlaneseq
    %v814 = vshrl.u32 %v813, 7
    %v815 = vsub.s32 0, %v814
    %v816 = vrot.slane %v808, %v815
    %vm817 = vcmp.eq.s32.totalorder %v812, 1
    %vm818 = vcmp.eq.s32.totalorder %v816, 1
    %v819 = vsel %vm817, %v778, -3.4028235e+38
    %v820 = vsel %vm818, %v779, -3.4028235e+38
    %vm821 = vcmask 58368
    %v822 = vsel %vm821, %v819, -inf
    %823 = vmax.xlane.f32.xlu0 %v822
    %v824 = vpop.xlane.xlu0 %823
    %v825 = vsel %vm821, %v820, -inf
    %826 = vmax.xlane.f32.xlu0 %v825
    %v827 = vpop.xlane.xlu0 %826
    %v828 = vsub.f32 %v819, %v824
    %v829 = vsub.f32 %v820, %v827
    %v830 = vmul.f32 %v828, 1.442695
    %v831 = vpow.pop %v830
    %v832 = vmul.f32 %v829, 1.442695
    %v833 = vpow.pop %v832
    %v834 = vsel %vm821, %v831, 0.0
    %835 = vadd.xlane.f32.xlu0 %v834
    %v836 = vpop.xlane.xlu0 %835
    %v837 = vsel %vm821, %v833, 0.0
    %838 = vadd.xlane.f32.xlu0 %v837
    %v839 = vpop.xlane.xlu0 %838
    %vm840 = vcmask 64512
    %v842 = vsel %vm840, %v831, 0
    %844 = vmatprep.subr.mxu0 0.0
    %845 = vmatpush1.msra.mxu0 %v107
    %846 = vmatprep.subr.mxu0 0.0
    %847 = vmatpush1.msra.mxu0 0.0
    %848 = vmatprep.subr.mxu0 0.0
    %849 = vmatpush1.msra.mxu0 0.0
    %850 = vmatprep.subr.mxu0 0.0
    %851 = vmatpush1.msra.mxu0 0.0
    %852 = vmatprep.subr.mxu0 0.0
    %853 = vmatpush1.msra.mxu0 0.0
    %854 = vmatprep.subr.mxu0 0.0
    %855 = vmatpush1.msra.mxu0 0.0
    %856 = vmatprep.subr.mxu0 0.0
    %857 = vmatpush1.msra.mxu0 0.0
    %858 = vmatprep.subr.mxu0 0.0
    %859 = vmatpush1.msra.mxu0 0.0
    %860 = vmatprep.subr.mxu0 0.0
    %861 = vmatpush1.msra.mxu0 0.0
    %862 = vmatprep.subr.mxu0 0.0
    %863 = vmatpush1.msra.mxu0 0.0
    %864 = vmatprep.subr.mxu0 0.0
    %865 = vmatpush1.msra.mxu0 0.0
    %866 = vmatprep.subr.mxu0 0.0
    %867 = vmatpush1.msra.mxu0 0.0
    %868 = vmatprep.subr.mxu0 0.0
    %869 = vmatpush1.msra.mxu0 0.0
    %870 = vmatprep.subr.mxu0 0.0
    %871 = vmatpush1.msra.mxu0 0.0
    %872 = vmatprep.subr.mxu0 0.0
    %873 = vmatpush1.msra.mxu0 0.0
    %874 = vmatprep.subr.mxu0 0.0
    %875 = vmatpush1.msra.mxu0 0.0
    %876 = vmatprep.subr.mxu0 0.0
    %877 = vmatpush1.msra.mxu0 0.0
    %878 = vmatprep.subr.mxu0 0.0
    %879 = vmatpush1.msra.mxu0 0.0
    %880 = vmatprep.subr.mxu0 0.0
    %881 = vmatpush1.msra.mxu0 0.0
    %882 = vmatprep.subr.mxu0 0.0
    %883 = vmatpush1.msra.mxu0 0.0
    %884 = vmatprep.subr.mxu0 0.0
    %885 = vmatpush1.msra.mxu0 0.0
    %886 = vmatprep.subr.mxu0 0.0
    %887 = vmatpush1.msra.mxu0 0.0
    %888 = vmatprep.subr.mxu0 0.0
    %889 = vmatpush1.msra.mxu0 0.0
    %890 = vmatprep.subr.mxu0 0.0
    %891 = vmatpush1.msra.mxu0 0.0
    %892 = vmatprep.subr.mxu0 0.0
    %893 = vmatpush1.msra.mxu0 0.0
    %894 = vmatprep.subr.mxu0 0.0
    %895 = vmatpush1.msra.mxu0 0.0
    %896 = vmatprep.subr.mxu0 0.0
    %897 = vmatpush1.msra.mxu0 0.0
    %898 = vmatprep.subr.mxu0 0.0
    %899 = vmatpush1.msra.mxu0 0.0
    %900 = vmatprep.subr.mxu0 0.0
    %901 = vmatpush1.msra.mxu0 0.0
    %902 = vmatprep.subr.mxu0 0.0
    %903 = vmatpush1.msra.mxu0 0.0
    %904 = vmatprep.subr.mxu0 0.0
    %905 = vmatpush1.msra.mxu0 0.0
    %906 = vmatprep.subr.mxu0 0.0
    %907 = vmatpush1.msra.mxu0 0.0
    %908 = vmatprep.mubr.f32.mxu0 0.0
    %909 = vmatmul.mubr.f32.gmra.mrb[0].mxu0 %v842
    %v910 = vpop.f32.mrb[0].mxu0
    %v911 = vadd.f32 0.0, %v910
    %v912 = vpop.f32.mrb[0].mxu0
    %913 = vdwg.mxu0
    %v915 = vsel %vm840, %v833, 0
    %917 = vmatprep.subr.mxu0 0.0
    %918 = vmatpush1.msra.mxu0 %v108
    %919 = vmatprep.subr.mxu0 0.0
    %920 = vmatpush1.msra.mxu0 0.0
    %921 = vmatprep.subr.mxu0 0.0
    %922 = vmatpush1.msra.mxu0 0.0
    %923 = vmatprep.subr.mxu0 0.0
    %924 = vmatpush1.msra.mxu0 0.0
    %925 = vmatprep.subr.mxu0 0.0
    %926 = vmatpush1.msra.mxu0 0.0
    %927 = vmatprep.subr.mxu0 0.0
    %928 = vmatpush1.msra.mxu0 0.0
    %929 = vmatprep.subr.mxu0 0.0
    %930 = vmatpush1.msra.mxu0 0.0
    %931 = vmatprep.subr.mxu0 0.0
    %932 = vmatpush1.msra.mxu0 0.0
    %933 = vmatprep.subr.mxu0 0.0
    %934 = vmatpush1.msra.mxu0 0.0
    %935 = vmatprep.subr.mxu0 0.0
    %936 = vmatpush1.msra.mxu0 0.0
    %937 = vmatprep.subr.mxu0 0.0
    %938 = vmatpush1.msra.mxu0 0.0
    %939 = vmatprep.subr.mxu0 0.0
    %940 = vmatpush1.msra.mxu0 0.0
    %941 = vmatprep.subr.mxu0 0.0
    %942 = vmatpush1.msra.mxu0 0.0
    %943 = vmatprep.subr.mxu0 0.0
    %944 = vmatpush1.msra.mxu0 0.0
    %945 = vmatprep.subr.mxu0 0.0
    %946 = vmatpush1.msra.mxu0 0.0
    %947 = vmatprep.subr.mxu0 0.0
    %948 = vmatpush1.msra.mxu0 0.0
    %949 = vmatprep.subr.mxu0 0.0
    %950 = vmatpush1.msra.mxu0 0.0
    %951 = vmatprep.subr.mxu0 0.0
    %952 = vmatpush1.msra.mxu0 0.0
    %953 = vmatprep.subr.mxu0 0.0
    %954 = vmatpush1.msra.mxu0 0.0
    %955 = vmatprep.subr.mxu0 0.0
    %956 = vmatpush1.msra.mxu0 0.0
    %957 = vmatprep.subr.mxu0 0.0
    %958 = vmatpush1.msra.mxu0 0.0
    %959 = vmatprep.subr.mxu0 0.0
    %960 = vmatpush1.msra.mxu0 0.0
    %961 = vmatprep.subr.mxu0 0.0
    %962 = vmatpush1.msra.mxu0 0.0
    %963 = vmatprep.subr.mxu0 0.0
    %964 = vmatpush1.msra.mxu0 0.0
    %965 = vmatprep.subr.mxu0 0.0
    %966 = vmatpush1.msra.mxu0 0.0
    %967 = vmatprep.subr.mxu0 0.0
    %968 = vmatpush1.msra.mxu0 0.0
    %969 = vmatprep.subr.mxu0 0.0
    %970 = vmatpush1.msra.mxu0 0.0
    %971 = vmatprep.subr.mxu0 0.0
    %972 = vmatpush1.msra.mxu0 0.0
    %973 = vmatprep.subr.mxu0 0.0
    %974 = vmatpush1.msra.mxu0 0.0
    %975 = vmatprep.subr.mxu0 0.0
    %976 = vmatpush1.msra.mxu0 0.0
    %977 = vmatprep.subr.mxu0 0.0
    %978 = vmatpush1.msra.mxu0 0.0
    %979 = vmatprep.subr.mxu0 0.0
    %980 = vmatpush1.msra.mxu0 0.0
    %981 = vmatprep.mubr.f32.mxu0 0.0
    %982 = vmatmul.mubr.f32.gmra.mrb[0].mxu0 %v915
    %v983 = vpop.f32.mrb[0].mxu0
    %v984 = vadd.f32 0.0, %v983
    %v985 = vpop.f32.mrb[0].mxu0
    %986 = vdwg.mxu0
    %v987 = vrcp.pop %v836
    %v988 = vrcp.pop %v839
    %v989 = vmul.f32 %v911, %v987
    %v990 = vmul.f32 %v984, %v988
    %v991 = vld [vmem:[#allocation10] sm:$0xff]
    %v992 = vld [vmem:[#allocation10 + $0x8] sm:$0xff]
    %v993 = vld [vmem:[#allocation10 + $0x10] sm:$0xff]
    %v994 = vld [vmem:[#allocation10 + $0x18] sm:$0xff]
    %v995 = vld [vmem:[#allocation10 + $0x20] sm:$0xff]
    %v996 = vld [vmem:[#allocation10 + $0x28] sm:$0xff]
    %v997 = vld [vmem:[#allocation10 + $0x30] sm:$0xff]
    %v998 = vld [vmem:[#allocation10 + $0x38] sm:$0xff]
    %1007 = vrot.lane.b32.xlu0 %v991, 64
    %v1008 = vpop.permute.xlu0 %1007
    %1009 = vrot.lane.b32.xlu0 %v992, 64
    %v1010 = vpop.permute.xlu0 %1009
    %1011 = vrot.lane.b32.xlu0 %v993, 64
    %v1012 = vpop.permute.xlu0 %1011
    %1013 = vrot.lane.b32.xlu0 %v994, 64
    %v1014 = vpop.permute.xlu0 %1013
    %1015 = vrot.lane.b32.xlu0 %v995, 64
    %v1016 = vpop.permute.xlu0 %1015
    %1017 = vrot.lane.b32.xlu0 %v996, 64
    %v1018 = vpop.permute.xlu0 %1017
    %1019 = vrot.lane.b32.xlu0 %v997, 64
    %v1020 = vpop.permute.xlu0 %1019
    %1021 = vrot.lane.b32.xlu0 %v998, 64
    %v1022 = vpop.permute.xlu0 %1021
    %1031 = vxpose.xlu0.b32.start [1/16] %v991, 128
    %1032 = vxpose.xlu0.b32.cont [2/16] %v992, 128
    %1033 = vxpose.xlu0.b32.cont [3/16] %v993, 128
    %1034 = vxpose.xlu0.b32.cont [4/16] %v994, 128
    %1035 = vxpose.xlu0.b32.cont [5/16] %v995, 128
    %1036 = vxpose.xlu0.b32.cont [6/16] %v996, 128
    %1037 = vxpose.xlu0.b32.cont [7/16] %v997, 128
    %1038 = vxpose.xlu0.b32.cont [8/16] %v998, 128
    %1039 = vxpose.xlu0.b32.cont [9/16] 0.0, 128
    %1040 = vxpose.xlu0.b32.cont [10/16] 0.0, 128
    %1041 = vxpose.xlu0.b32.cont [11/16] 0.0, 128
    %1042 = vxpose.xlu0.b32.cont [12/16] 0.0, 128
    %1043 = vxpose.xlu0.b32.cont [13/16] 0.0, 128
    %1044 = vxpose.xlu0.b32.cont [14/16] 0.0, 128
    %1045 = vxpose.xlu0.b32.cont [15/16] 0.0, 128
    %1046 = vxpose.xlu0.b32.end [16/16] 0.0, 128
    %v1047 = vpop.trf.xlu0
    %v1048 = vpop.trf.xlu0
    %v1049 = vpop.trf.xlu0
    %v1050 = vpop.trf.xlu0
    %v1051 = vpop.trf.xlu0
    %v1052 = vpop.trf.xlu0
    %v1053 = vpop.trf.xlu0
    %v1054 = vpop.trf.xlu0
    %v1055 = vpop.trf.xlu0
    %v1056 = vpop.trf.xlu0
    %v1057 = vpop.trf.xlu0
    %v1058 = vpop.trf.xlu0
    %v1059 = vpop.trf.xlu0
    %v1060 = vpop.trf.xlu0
    %v1061 = vpop.trf.xlu0
    %v1062 = vpop.trf.xlu0
    %1063 = vxpose.xlu0.b32.start [1/16] %v1008, 128
    %1064 = vxpose.xlu0.b32.cont [2/16] %v1010, 128
    %1065 = vxpose.xlu0.b32.cont [3/16] %v1012, 128
    %1066 = vxpose.xlu0.b32.cont [4/16] %v1014, 128
    %1067 = vxpose.xlu0.b32.cont [5/16] %v1016, 128
    %1068 = vxpose.xlu0.b32.cont [6/16] %v1018, 128
    %1069 = vxpose.xlu0.b32.cont [7/16] %v1020, 128
    %1070 = vxpose.xlu0.b32.cont [8/16] %v1022, 128
    %1071 = vxpose.xlu0.b32.cont [9/16] 0.0, 128
    %1072 = vxpose.xlu0.b32.cont [10/16] 0.0, 128
    %1073 = vxpose.xlu0.b32.cont [11/16] 0.0, 128
    %1074 = vxpose.xlu0.b32.cont [12/16] 0.0, 128
    %1075 = vxpose.xlu0.b32.cont [13/16] 0.0, 128
    %1076 = vxpose.xlu0.b32.cont [14/16] 0.0, 128
    %1077 = vxpose.xlu0.b32.cont [15/16] 0.0, 128
    %1078 = vxpose.xlu0.b32.end [16/16] 0.0, 128
    %v1079 = vpop.trf.xlu0
    %v1080 = vpop.trf.xlu0
    %v1081 = vpop.trf.xlu0
    %v1082 = vpop.trf.xlu0
    %v1083 = vpop.trf.xlu0
    %v1084 = vpop.trf.xlu0
    %v1085 = vpop.trf.xlu0
    %v1086 = vpop.trf.xlu0
    %v1087 = vpop.trf.xlu0
    %v1088 = vpop.trf.xlu0
    %v1089 = vpop.trf.xlu0
    %v1090 = vpop.trf.xlu0
    %v1091 = vpop.trf.xlu0
    %v1092 = vpop.trf.xlu0
    %v1093 = vpop.trf.xlu0
    %v1094 = vpop.trf.xlu0
    %1095 = vxpose.xlu0.b32.start [1/16] %v989, 128
    %1096 = vxpose.xlu0.b32.cont [2/16] 0.0, 128
    %1097 = vxpose.xlu0.b32.cont [3/16] 0.0, 128
    %1098 = vxpose.xlu0.b32.cont [4/16] 0.0, 128
    %1099 = vxpose.xlu0.b32.cont [5/16] 0.0, 128
    %1100 = vxpose.xlu0.b32.cont [6/16] 0.0, 128
    %1101 = vxpose.xlu0.b32.cont [7/16] 0.0, 128
    %1102 = vxpose.xlu0.b32.cont [8/16] 0.0, 128
    %1103 = vxpose.xlu0.b32.cont [9/16] 0.0, 128
    %1104 = vxpose.xlu0.b32.cont [10/16] 0.0, 128
    %1105 = vxpose.xlu0.b32.cont [11/16] 0.0, 128
    %1106 = vxpose.xlu0.b32.cont [12/16] 0.0, 128
    %1107 = vxpose.xlu0.b32.cont [13/16] 0.0, 128
    %1108 = vxpose.xlu0.b32.cont [14/16] 0.0, 128
    %1109 = vxpose.xlu0.b32.cont [15/16] 0.0, 128
    %1110 = vxpose.xlu0.b32.end [16/16] 0.0, 128
    %v1111 = vpop.trf.xlu0
    %v1112 = vpop.trf.xlu0
    %v1113 = vpop.trf.xlu0
    %v1114 = vpop.trf.xlu0
    %v1115 = vpop.trf.xlu0
    %v1116 = vpop.trf.xlu0
    %v1117 = vpop.trf.xlu0
    %v1118 = vpop.trf.xlu0
    %v1119 = vpop.trf.xlu0
    %v1120 = vpop.trf.xlu0
    %v1121 = vpop.trf.xlu0
    %v1122 = vpop.trf.xlu0
    %v1123 = vpop.trf.xlu0
    %v1124 = vpop.trf.xlu0
    %v1125 = vpop.trf.xlu0
    %v1126 = vpop.trf.xlu0
    %1127 = vxpose.xlu0.b32.start [1/16] %v990, 128
    %1128 = vxpose.xlu0.b32.cont [2/16] 0.0, 128
    %1129 = vxpose.xlu0.b32.cont [3/16] 0.0, 128
    %1130 = vxpose.xlu0.b32.cont [4/16] 0.0, 128
    %1131 = vxpose.xlu0.b32.cont [5/16] 0.0, 128
    %1132 = vxpose.xlu0.b32.cont [6/16] 0.0, 128
    %1133 = vxpose.xlu0.b32.cont [7/16] 0.0, 128
    %1134 = vxpose.xlu0.b32.cont [8/16] 0.0, 128
    %1135 = vxpose.xlu0.b32.cont [9/16] 0.0, 128
    %1136 = vxpose.xlu0.b32.cont [10/16] 0.0, 128
    %1137 = vxpose.xlu0.b32.cont [11/16] 0.0, 128
    %1138 = vxpose.xlu0.b32.cont [12/16] 0.0, 128
    %1139 = vxpose.xlu0.b32.cont [13/16] 0.0, 128
    %1140 = vxpose.xlu0.b32.cont [14/16] 0.0, 128
    %1141 = vxpose.xlu0.b32.cont [15/16] 0.0, 128
    %1142 = vxpose.xlu0.b32.end [16/16] 0.0, 128
    %v1143 = vpop.trf.xlu0
    %v1144 = vpop.trf.xlu0
    %v1145 = vpop.trf.xlu0
    %v1146 = vpop.trf.xlu0
    %v1147 = vpop.trf.xlu0
    %v1148 = vpop.trf.xlu0
    %v1149 = vpop.trf.xlu0
    %v1150 = vpop.trf.xlu0
    %v1151 = vpop.trf.xlu0
    %v1152 = vpop.trf.xlu0
    %v1153 = vpop.trf.xlu0
    %v1154 = vpop.trf.xlu0
    %v1155 = vpop.trf.xlu0
    %v1156 = vpop.trf.xlu0
    %v1157 = vpop.trf.xlu0
    %v1158 = vpop.trf.xlu0
    %v1159 = vcombine.high %v1111, 0.0
    %v1161 = vunpack.c.l.s4 1983009808
    %v1162 = vunpack.c.0.s8 %v1161
    %v1163 = vlaneseq
    %v1164 = vshrl.u32 %v1163, 7
    %v1165 = vsub.s32 %v1162, %v1164
    %v1166 = vrot.slane %v1111, %v1165
    %v1168 = vunpack.c.l.s4 1983009808
    %v1169 = vunpack.c.0.s8 %v1168
    %v1170 = vlaneseq
    %v1171 = vshrl.u32 %v1170, 7
    %v1172 = vsub.s32 %v1169, %v1171
    %v1173 = vrot.slane %v1159, %v1172
    %v1174 = vcombine.high %v1143, 0.0
    %v1176 = vunpack.c.l.s4 1983009808
    %v1177 = vunpack.c.0.s8 %v1176
    %v1178 = vlaneseq
    %v1179 = vshrl.u32 %v1178, 7
    %v1180 = vsub.s32 %v1177, %v1179
    %v1181 = vrot.slane %v1143, %v1180
    %v1183 = vunpack.c.l.s4 1983009808
    %v1184 = vunpack.c.0.s8 %v1183
    %v1185 = vlaneseq
    %v1186 = vshrl.u32 %v1185, 7
    %v1187 = vsub.s32 %v1184, %v1186
    %v1188 = vrot.slane %v1174, %v1187
    %v1189 = vcombine.low %v1166, %v1181
    %v1190 = vcombine.high %v1166, %v1181
    %v1192 = vunpack.c.l.s4 1934713408
    %v1193 = vunpack.c.0.s8 %v1192
    %v1194 = vlaneseq
    %v1195 = vshrl.u32 %v1194, 7
    %v1196 = vsub.s32 %v1193, %v1195
    %v1197 = vrot.slane %v1189, %v1196
    %v1199 = vunpack.c.l.s4 1934713408
    %v1200 = vunpack.c.0.s8 %v1199
    %v1201 = vlaneseq
    %v1202 = vshrl.u32 %v1201, 7
    %v1203 = vsub.s32 %v1200, %v1202
    %v1204 = vrot.slane %v1190, %v1203
    %v1205 = vcombine.low %v1173, %v1188
    %v1206 = vcombine.high %v1173, %v1188
    %v1208 = vunpack.c.l.s4 1934713408
    %v1209 = vunpack.c.0.s8 %v1208
    %v1210 = vlaneseq
    %v1211 = vshrl.u32 %v1210, 7
    %v1212 = vsub.s32 %v1209, %v1211
    %v1213 = vrot.slane %v1205, %v1212
    %v1215 = vunpack.c.l.s4 1934713408
    %v1216 = vunpack.c.0.s8 %v1215
    %v1217 = vlaneseq
    %v1218 = vshrl.u32 %v1217, 7
    %v1219 = vsub.s32 %v1216, %v1218
    %v1220 = vrot.slane %v1206, %v1219
    %v1221 = vcombine.high %v1197, 0.0
    %v1222 = vcombine.high %v1204, 0.0
    %v1223 = vcombine.high %v1213, 0.0
    %v1224 = vcombine.high %v1220, 0.0
    %v1225 = vcombine.high %v1112, 0.0
    %v1227 = vunpack.c.l.s4 1983009808
    %v1228 = vunpack.c.0.s8 %v1227
    %v1229 = vlaneseq
    %v1230 = vshrl.u32 %v1229, 7
    %v1231 = vsub.s32 %v1228, %v1230
    %v1232 = vrot.slane %v1112, %v1231
    %v1234 = vunpack.c.l.s4 1983009808
    %v1235 = vunpack.c.0.s8 %v1234
    %v1236 = vlaneseq
    %v1237 = vshrl.u32 %v1236, 7
    %v1238 = vsub.s32 %v1235, %v1237
    %v1239 = vrot.slane %v1225, %v1238
    %v1240 = vcombine.high %v1144, 0.0
    %v1242 = vunpack.c.l.s4 1983009808
    %v1243 = vunpack.c.0.s8 %v1242
    %v1244 = vlaneseq
    %v1245 = vshrl.u32 %v1244, 7
    %v1246 = vsub.s32 %v1243, %v1245
    %v1247 = vrot.slane %v1144, %v1246
    %v1249 = vunpack.c.l.s4 1983009808
    %v1250 = vunpack.c.0.s8 %v1249
    %v1251 = vlaneseq
    %v1252 = vshrl.u32 %v1251, 7
    %v1253 = vsub.s32 %v1250, %v1252
    %v1254 = vrot.slane %v1240, %v1253
    %v1255 = vcombine.low %v1232, %v1247
    %v1256 = vcombine.high %v1232, %v1247
    %v1258 = vunpack.c.l.s4 1934713408
    %v1259 = vunpack.c.0.s8 %v1258
    %v1260 = vlaneseq
    %v1261 = vshrl.u32 %v1260, 7
    %v1262 = vsub.s32 %v1259, %v1261
    %v1263 = vrot.slane %v1255, %v1262
    %v1265 = vunpack.c.l.s4 1934713408
    %v1266 = vunpack.c.0.s8 %v1265
    %v1267 = vlaneseq
    %v1268 = vshrl.u32 %v1267, 7
    %v1269 = vsub.s32 %v1266, %v1268
    %v1270 = vrot.slane %v1256, %v1269
    %v1271 = vcombine.low %v1239, %v1254
    %v1272 = vcombine.high %v1239, %v1254
    %v1274 = vunpack.c.l.s4 1934713408
    %v1275 = vunpack.c.0.s8 %v1274
    %v1276 = vlaneseq
    %v1277 = vshrl.u32 %v1276, 7
    %v1278 = vsub.s32 %v1275, %v1277
    %v1279 = vrot.slane %v1271, %v1278
    %v1281 = vunpack.c.l.s4 1934713408
    %v1282 = vunpack.c.0.s8 %v1281
    %v1283 = vlaneseq
    %v1284 = vshrl.u32 %v1283, 7
    %v1285 = vsub.s32 %v1282, %v1284
    %v1286 = vrot.slane %v1272, %v1285
    %v1287 = vcombine.high %v1263, 0.0
    %v1288 = vcombine.high %v1270, 0.0
    %v1289 = vcombine.high %v1279, 0.0
    %v1290 = vcombine.high %v1286, 0.0
    %v1291 = vcombine.high %v1113, 0.0
    %v1293 = vunpack.c.l.s4 1983009808
    %v1294 = vunpack.c.0.s8 %v1293
    %v1295 = vlaneseq
    %v1296 = vshrl.u32 %v1295, 7
    %v1297 = vsub.s32 %v1294, %v1296
    %v1298 = vrot.slane %v1113, %v1297
    %v1300 = vunpack.c.l.s4 1983009808
    %v1301 = vunpack.c.0.s8 %v1300
    %v1302 = vlaneseq
    %v1303 = vshrl.u32 %v1302, 7
    %v1304 = vsub.s32 %v1301, %v1303
    %v1305 = vrot.slane %v1291, %v1304
    %v1306 = vcombine.high %v1145, 0.0
    %v1308 = vunpack.c.l.s4 1983009808
    %v1309 = vunpack.c.0.s8 %v1308
    %v1310 = vlaneseq
    %v1311 = vshrl.u32 %v1310, 7
    %v1312 = vsub.s32 %v1309, %v1311
    %v1313 = vrot.slane %v1145, %v1312
    %v1315 = vunpack.c.l.s4 1983009808
    %v1316 = vunpack.c.0.s8 %v1315
    %v1317 = vlaneseq
    %v1318 = vshrl.u32 %v1317, 7
    %v1319 = vsub.s32 %v1316, %v1318
    %v1320 = vrot.slane %v1306, %v1319
    %v1321 = vcombine.low %v1298, %v1313
    %v1322 = vcombine.high %v1298, %v1313
    %v1324 = vunpack.c.l.s4 1934713408
    %v1325 = vunpack.c.0.s8 %v1324
    %v1326 = vlaneseq
    %v1327 = vshrl.u32 %v1326, 7
    %v1328 = vsub.s32 %v1325, %v1327
    %v1329 = vrot.slane %v1321, %v1328
    %v1331 = vunpack.c.l.s4 1934713408
    %v1332 = vunpack.c.0.s8 %v1331
    %v1333 = vlaneseq
    %v1334 = vshrl.u32 %v1333, 7
    %v1335 = vsub.s32 %v1332, %v1334
    %v1336 = vrot.slane %v1322, %v1335
    %v1337 = vcombine.low %v1305, %v1320
    %v1338 = vcombine.high %v1305, %v1320
    %v1340 = vunpack.c.l.s4 1934713408
    %v1341 = vunpack.c.0.s8 %v1340
    %v1342 = vlaneseq
    %v1343 = vshrl.u32 %v1342, 7
    %v1344 = vsub.s32 %v1341, %v1343
    %v1345 = vrot.slane %v1337, %v1344
    %v1347 = vunpack.c.l.s4 1934713408
    %v1348 = vunpack.c.0.s8 %v1347
    %v1349 = vlaneseq
    %v1350 = vshrl.u32 %v1349, 7
    %v1351 = vsub.s32 %v1348, %v1350
    %v1352 = vrot.slane %v1338, %v1351
    %v1353 = vcombine.high %v1329, 0.0
    %v1354 = vcombine.high %v1336, 0.0
    %v1355 = vcombine.high %v1345, 0.0
    %v1356 = vcombine.high %v1352, 0.0
    %v1357 = vcombine.high %v1114, 0.0
    %v1359 = vunpack.c.l.s4 1983009808
    %v1360 = vunpack.c.0.s8 %v1359
    %v1361 = vlaneseq
    %v1362 = vshrl.u32 %v1361, 7
    %v1363 = vsub.s32 %v1360, %v1362
    %v1364 = vrot.slane %v1114, %v1363
    %v1366 = vunpack.c.l.s4 1983009808
    %v1367 = vunpack.c.0.s8 %v1366
    %v1368 = vlaneseq
    %v1369 = vshrl.u32 %v1368, 7
    %v1370 = vsub.s32 %v1367, %v1369
    %v1371 = vrot.slane %v1357, %v1370
    %v1372 = vcombine.high %v1146, 0.0
    %v1374 = vunpack.c.l.s4 1983009808
    %v1375 = vunpack.c.0.s8 %v1374
    %v1376 = vlaneseq
    %v1377 = vshrl.u32 %v1376, 7
    %v1378 = vsub.s32 %v1375, %v1377
    %v1379 = vrot.slane %v1146, %v1378
    %v1381 = vunpack.c.l.s4 1983009808
    %v1382 = vunpack.c.0.s8 %v1381
    %v1383 = vlaneseq
    %v1384 = vshrl.u32 %v1383, 7
    %v1385 = vsub.s32 %v1382, %v1384
    %v1386 = vrot.slane %v1372, %v1385
    %v1387 = vcombine.low %v1364, %v1379
    %v1388 = vcombine.high %v1364, %v1379
    %v1390 = vunpack.c.l.s4 1934713408
    %v1391 = vunpack.c.0.s8 %v1390
    %v1392 = vlaneseq
    %v1393 = vshrl.u32 %v1392, 7
    %v1394 = vsub.s32 %v1391, %v1393
    %v1395 = vrot.slane %v1387, %v1394
    %v1397 = vunpack.c.l.s4 1934713408
    %v1398 = vunpack.c.0.s8 %v1397
    %v1399 = vlaneseq
    %v1400 = vshrl.u32 %v1399, 7
    %v1401 = vsub.s32 %v1398, %v1400
    %v1402 = vrot.slane %v1388, %v1401
    %v1403 = vcombine.low %v1371, %v1386
    %v1404 = vcombine.high %v1371, %v1386
    %v1406 = vunpack.c.l.s4 1934713408
    %v1407 = vunpack.c.0.s8 %v1406
    %v1408 = vlaneseq
    %v1409 = vshrl.u32 %v1408, 7
    %v1410 = vsub.s32 %v1407, %v1409
    %v1411 = vrot.slane %v1403, %v1410
    %v1413 = vunpack.c.l.s4 1934713408
    %v1414 = vunpack.c.0.s8 %v1413
    %v1415 = vlaneseq
    %v1416 = vshrl.u32 %v1415, 7
    %v1417 = vsub.s32 %v1414, %v1416
    %v1418 = vrot.slane %v1404, %v1417
    %v1419 = vcombine.high %v1395, 0.0
    %v1420 = vcombine.high %v1402, 0.0
    %v1421 = vcombine.high %v1411, 0.0
    %v1422 = vcombine.high %v1418, 0.0
    %v1423 = vcombine.high %v1115, 0.0
    %v1425 = vunpack.c.l.s4 1983009808
    %v1426 = vunpack.c.0.s8 %v1425
    %v1427 = vlaneseq
    %v1428 = vshrl.u32 %v1427, 7
    %v1429 = vsub.s32 %v1426, %v1428
    %v1430 = vrot.slane %v1115, %v1429
    %v1432 = vunpack.c.l.s4 1983009808
    %v1433 = vunpack.c.0.s8 %v1432
    %v1434 = vlaneseq
    %v1435 = vshrl.u32 %v1434, 7
    %v1436 = vsub.s32 %v1433, %v1435
    %v1437 = vrot.slane %v1423, %v1436
    %v1438 = vcombine.high %v1147, 0.0
    %v1440 = vunpack.c.l.s4 1983009808
    %v1441 = vunpack.c.0.s8 %v1440
    %v1442 = vlaneseq
    %v1443 = vshrl.u32 %v1442, 7
    %v1444 = vsub.s32 %v1441, %v1443
    %v1445 = vrot.slane %v1147, %v1444
    %v1447 = vunpack.c.l.s4 1983009808
    %v1448 = vunpack.c.0.s8 %v1447
    %v1449 = vlaneseq
    %v1450 = vshrl.u32 %v1449, 7
    %v1451 = vsub.s32 %v1448, %v1450
    %v1452 = vrot.slane %v1438, %v1451
    %v1453 = vcombine.low %v1430, %v1445
    %v1454 = vcombine.high %v1430, %v1445
    %v1456 = vunpack.c.l.s4 1934713408
    %v1457 = vunpack.c.0.s8 %v1456
    %v1458 = vlaneseq
    %v1459 = vshrl.u32 %v1458, 7
    %v1460 = vsub.s32 %v1457, %v1459
    %v1461 = vrot.slane %v1453, %v1460
    %v1463 = vunpack.c.l.s4 1934713408
    %v1464 = vunpack.c.0.s8 %v1463
    %v1465 = vlaneseq
    %v1466 = vshrl.u32 %v1465, 7
    %v1467 = vsub.s32 %v1464, %v1466
    %v1468 = vrot.slane %v1454, %v1467
    %v1469 = vcombine.low %v1437, %v1452
    %v1470 = vcombine.high %v1437, %v1452
    %v1472 = vunpack.c.l.s4 1934713408
    %v1473 = vunpack.c.0.s8 %v1472
    %v1474 = vlaneseq
    %v1475 = vshrl.u32 %v1474, 7
    %v1476 = vsub.s32 %v1473, %v1475
    %v1477 = vrot.slane %v1469, %v1476
    %v1479 = vunpack.c.l.s4 1934713408
    %v1480 = vunpack.c.0.s8 %v1479
    %v1481 = vlaneseq
    %v1482 = vshrl.u32 %v1481, 7
    %v1483 = vsub.s32 %v1480, %v1482
    %v1484 = vrot.slane %v1470, %v1483
    %v1485 = vcombine.high %v1461, 0.0
    %v1486 = vcombine.high %v1468, 0.0
    %v1487 = vcombine.high %v1477, 0.0
    %v1488 = vcombine.high %v1484, 0.0
    %v1489 = vcombine.high %v1116, 0.0
    %v1491 = vunpack.c.l.s4 1983009808
    %v1492 = vunpack.c.0.s8 %v1491
    %v1493 = vlaneseq
    %v1494 = vshrl.u32 %v1493, 7
    %v1495 = vsub.s32 %v1492, %v1494
    %v1496 = vrot.slane %v1116, %v1495
    %v1498 = vunpack.c.l.s4 1983009808
    %v1499 = vunpack.c.0.s8 %v1498
    %v1500 = vlaneseq
    %v1501 = vshrl.u32 %v1500, 7
    %v1502 = vsub.s32 %v1499, %v1501
    %v1503 = vrot.slane %v1489, %v1502
    %v1504 = vcombine.high %v1148, 0.0
    %v1506 = vunpack.c.l.s4 1983009808
    %v1507 = vunpack.c.0.s8 %v1506
    %v1508 = vlaneseq
    %v1509 = vshrl.u32 %v1508, 7
    %v1510 = vsub.s32 %v1507, %v1509
    %v1511 = vrot.slane %v1148, %v1510
    %v1513 = vunpack.c.l.s4 1983009808
    %v1514 = vunpack.c.0.s8 %v1513
    %v1515 = vlaneseq
    %v1516 = vshrl.u32 %v1515, 7
    %v1517 = vsub.s32 %v1514, %v1516
    %v1518 = vrot.slane %v1504, %v1517
    %v1519 = vcombine.low %v1496, %v1511
    %v1520 = vcombine.high %v1496, %v1511
    %v1522 = vunpack.c.l.s4 1934713408
    %v1523 = vunpack.c.0.s8 %v1522
    %v1524 = vlaneseq
    %v1525 = vshrl.u32 %v1524, 7
    %v1526 = vsub.s32 %v1523, %v1525
    %v1527 = vrot.slane %v1519, %v1526
    %v1529 = vunpack.c.l.s4 1934713408
    %v1530 = vunpack.c.0.s8 %v1529
    %v1531 = vlaneseq
    %v1532 = vshrl.u32 %v1531, 7
    %v1533 = vsub.s32 %v1530, %v1532
    %v1534 = vrot.slane %v1520, %v1533
    %v1535 = vcombine.low %v1503, %v1518
    %v1536 = vcombine.high %v1503, %v1518
    %v1538 = vunpack.c.l.s4 1934713408
    %v1539 = vunpack.c.0.s8 %v1538
    %v1540 = vlaneseq
    %v1541 = vshrl.u32 %v1540, 7
    %v1542 = vsub.s32 %v1539, %v1541
    %v1543 = vrot.slane %v1535, %v1542
    %v1545 = vunpack.c.l.s4 1934713408
    %v1546 = vunpack.c.0.s8 %v1545
    %v1547 = vlaneseq
    %v1548 = vshrl.u32 %v1547, 7
    %v1549 = vsub.s32 %v1546, %v1548
    %v1550 = vrot.slane %v1536, %v1549
    %v1551 = vcombine.high %v1527, 0.0
    %v1552 = vcombine.high %v1534, 0.0
    %v1553 = vcombine.high %v1543, 0.0
    %v1554 = vcombine.high %v1550, 0.0
    %v1555 = vcombine.high %v1117, 0.0
    %v1557 = vunpack.c.l.s4 1983009808
    %v1558 = vunpack.c.0.s8 %v1557
    %v1559 = vlaneseq
    %v1560 = vshrl.u32 %v1559, 7
    %v1561 = vsub.s32 %v1558, %v1560
    %v1562 = vrot.slane %v1117, %v1561
    %v1564 = vunpack.c.l.s4 1983009808
    %v1565 = vunpack.c.0.s8 %v1564
    %v1566 = vlaneseq
    %v1567 = vshrl.u32 %v1566, 7
    %v1568 = vsub.s32 %v1565, %v1567
    %v1569 = vrot.slane %v1555, %v1568
    %v1570 = vcombine.high %v1149, 0.0
    %v1572 = vunpack.c.l.s4 1983009808
    %v1573 = vunpack.c.0.s8 %v1572
    %v1574 = vlaneseq
    %v1575 = vshrl.u32 %v1574, 7
    %v1576 = vsub.s32 %v1573, %v1575
    %v1577 = vrot.slane %v1149, %v1576
    %v1579 = vunpack.c.l.s4 1983009808
    %v1580 = vunpack.c.0.s8 %v1579
    %v1581 = vlaneseq
    %v1582 = vshrl.u32 %v1581, 7
    %v1583 = vsub.s32 %v1580, %v1582
    %v1584 = vrot.slane %v1570, %v1583
    %v1585 = vcombine.low %v1562, %v1577
    %v1586 = vcombine.high %v1562, %v1577
    %v1588 = vunpack.c.l.s4 1934713408
    %v1589 = vunpack.c.0.s8 %v1588
    %v1590 = vlaneseq
    %v1591 = vshrl.u32 %v1590, 7
    %v1592 = vsub.s32 %v1589, %v1591
    %v1593 = vrot.slane %v1585, %v1592
    %v1595 = vunpack.c.l.s4 1934713408
    %v1596 = vunpack.c.0.s8 %v1595
    %v1597 = vlaneseq
    %v1598 = vshrl.u32 %v1597, 7
    %v1599 = vsub.s32 %v1596, %v1598
    %v1600 = vrot.slane %v1586, %v1599
    %v1601 = vcombine.low %v1569, %v1584
    %v1602 = vcombine.high %v1569, %v1584
    %v1604 = vunpack.c.l.s4 1934713408
    %v1605 = vunpack.c.0.s8 %v1604
    %v1606 = vlaneseq
    %v1607 = vshrl.u32 %v1606, 7
    %v1608 = vsub.s32 %v1605, %v1607
    %v1609 = vrot.slane %v1601, %v1608
    %v1611 = vunpack.c.l.s4 1934713408
    %v1612 = vunpack.c.0.s8 %v1611
    %v1613 = vlaneseq
    %v1614 = vshrl.u32 %v1613, 7
    %v1615 = vsub.s32 %v1612, %v1614
    %v1616 = vrot.slane %v1602, %v1615
    %v1617 = vcombine.high %v1593, 0.0
    %v1618 = vcombine.high %v1600, 0.0
    %v1619 = vcombine.high %v1609, 0.0
    %v1620 = vcombine.high %v1616, 0.0
    %v1621 = vcombine.high %v1118, 0.0
    %v1623 = vunpack.c.l.s4 1983009808
    %v1624 = vunpack.c.0.s8 %v1623
    %v1625 = vlaneseq
    %v1626 = vshrl.u32 %v1625, 7
    %v1627 = vsub.s32 %v1624, %v1626
    %v1628 = vrot.slane %v1118, %v1627
    %v1630 = vunpack.c.l.s4 1983009808
    %v1631 = vunpack.c.0.s8 %v1630
    %v1632 = vlaneseq
    %v1633 = vshrl.u32 %v1632, 7
    %v1634 = vsub.s32 %v1631, %v1633
    %v1635 = vrot.slane %v1621, %v1634
    %v1636 = vcombine.high %v1150, 0.0
    %v1638 = vunpack.c.l.s4 1983009808
    %v1639 = vunpack.c.0.s8 %v1638
    %v1640 = vlaneseq
    %v1641 = vshrl.u32 %v1640, 7
    %v1642 = vsub.s32 %v1639, %v1641
    %v1643 = vrot.slane %v1150, %v1642
    %v1645 = vunpack.c.l.s4 1983009808
    %v1646 = vunpack.c.0.s8 %v1645
    %v1647 = vlaneseq
    %v1648 = vshrl.u32 %v1647, 7
    %v1649 = vsub.s32 %v1646, %v1648
    %v1650 = vrot.slane %v1636, %v1649
    %v1651 = vcombine.low %v1628, %v1643
    %v1652 = vcombine.high %v1628, %v1643
    %v1654 = vunpack.c.l.s4 1934713408
    %v1655 = vunpack.c.0.s8 %v1654
    %v1656 = vlaneseq
    %v1657 = vshrl.u32 %v1656, 7
    %v1658 = vsub.s32 %v1655, %v1657
    %v1659 = vrot.slane %v1651, %v1658
    %v1661 = vunpack.c.l.s4 1934713408
    %v1662 = vunpack.c.0.s8 %v1661
    %v1663 = vlaneseq
    %v1664 = vshrl.u32 %v1663, 7
    %v1665 = vsub.s32 %v1662, %v1664
    %v1666 = vrot.slane %v1652, %v1665
    %v1667 = vcombine.low %v1635, %v1650
    %v1668 = vcombine.high %v1635, %v1650
    %v1670 = vunpack.c.l.s4 1934713408
    %v1671 = vunpack.c.0.s8 %v1670
    %v1672 = vlaneseq
    %v1673 = vshrl.u32 %v1672, 7
    %v1674 = vsub.s32 %v1671, %v1673
    %v1675 = vrot.slane %v1667, %v1674
    %v1677 = vunpack.c.l.s4 1934713408
    %v1678 = vunpack.c.0.s8 %v1677
    %v1679 = vlaneseq
    %v1680 = vshrl.u32 %v1679, 7
    %v1681 = vsub.s32 %v1678, %v1680
    %v1682 = vrot.slane %v1668, %v1681
    %v1683 = vcombine.high %v1659, 0.0
    %v1684 = vcombine.high %v1666, 0.0
    %v1685 = vcombine.high %v1675, 0.0
    %v1686 = vcombine.high %v1682, 0.0
    %1687 = vxpose.xlu0.b32.start [1/16] %v1197, 128
    %1688 = vxpose.xlu0.b32.cont [2/16] 0.0, 128
    %1689 = vxpose.xlu0.b32.cont [3/16] 0.0, 128
    %1690 = vxpose.xlu0.b32.cont [4/16] 0.0, 128
    %1691 = vxpose.xlu0.b32.cont [5/16] 0.0, 128
    %1692 = vxpose.xlu0.b32.cont [6/16] 0.0, 128
    %1693 = vxpose.xlu0.b32.cont [7/16] 0.0, 128
    %1694 = vxpose.xlu0.b32.cont [8/16] 0.0, 128
    %1695 = vxpose.xlu0.b32.cont [9/16] 0.0, 128
    %1696 = vxpose.xlu0.b32.cont [10/16] 0.0, 128
    %1697 = vxpose.xlu0.b32.cont [11/16] 0.0, 128
    %1698 = vxpose.xlu0.b32.cont [12/16] 0.0, 128
    %1699 = vxpose.xlu0.b32.cont [13/16] 0.0, 128
    %1700 = vxpose.xlu0.b32.cont [14/16] 0.0, 128
    %1701 = vxpose.xlu0.b32.cont [15/16] 0.0, 128
    %1702 = vxpose.xlu0.b32.end [16/16] 0.0, 128
    %v1703 = vpop.trf.xlu0
    %v1704 = vpop.trf.xlu0
    %v1705 = vpop.trf.xlu0
    %v1706 = vpop.trf.xlu0
    %v1707 = vpop.trf.xlu0
    %v1708 = vpop.trf.xlu0
    %v1709 = vpop.trf.xlu0
    %v1710 = vpop.trf.xlu0
    %v1711 = vpop.trf.xlu0
    %v1712 = vpop.trf.xlu0
    %v1713 = vpop.trf.xlu0
    %v1714 = vpop.trf.xlu0
    %v1715 = vpop.trf.xlu0
    %v1716 = vpop.trf.xlu0
    %v1717 = vpop.trf.xlu0
    %v1718 = vpop.trf.xlu0
    %1719 = vxpose.xlu0.b32.start [1/16] %v1221, 128
    %1720 = vxpose.xlu0.b32.cont [2/16] 0.0, 128
    %1721 = vxpose.xlu0.b32.cont [3/16] 0.0, 128
    %1722 = vxpose.xlu0.b32.cont [4/16] 0.0, 128
    %1723 = vxpose.xlu0.b32.cont [5/16] 0.0, 128
    %1724 = vxpose.xlu0.b32.cont [6/16] 0.0, 128
    %1725 = vxpose.xlu0.b32.cont [7/16] 0.0, 128
    %1726 = vxpose.xlu0.b32.cont [8/16] 0.0, 128
    %1727 = vxpose.xlu0.b32.cont [9/16] 0.0, 128
    %1728 = vxpose.xlu0.b32.cont [10/16] 0.0, 128
    %1729 = vxpose.xlu0.b32.cont [11/16] 0.0, 128
    %1730 = vxpose.xlu0.b32.cont [12/16] 0.0, 128
    %1731 = vxpose.xlu0.b32.cont [13/16] 0.0, 128
    %1732 = vxpose.xlu0.b32.cont [14/16] 0.0, 128
    %1733 = vxpose.xlu0.b32.cont [15/16] 0.0, 128
    %1734 = vxpose.xlu0.b32.end [16/16] 0.0, 128
    %v1735 = vpop.trf.xlu0
    %v1736 = vpop.trf.xlu0
    %v1737 = vpop.trf.xlu0
    %v1738 = vpop.trf.xlu0
    %v1739 = vpop.trf.xlu0
    %v1740 = vpop.trf.xlu0
    %v1741 = vpop.trf.xlu0
    %v1742 = vpop.trf.xlu0
    %v1743 = vpop.trf.xlu0
    %v1744 = vpop.trf.xlu0
    %v1745 = vpop.trf.xlu0
    %v1746 = vpop.trf.xlu0
    %v1747 = vpop.trf.xlu0
    %v1748 = vpop.trf.xlu0
    %v1749 = vpop.trf.xlu0
    %v1750 = vpop.trf.xlu0
    %1751 = vxpose.xlu0.b32.start [1/16] %v1204, 128
    %1752 = vxpose.xlu0.b32.cont [2/16] 0.0, 128
    %1753 = vxpose.xlu0.b32.cont [3/16] 0.0, 128
    %1754 = vxpose.xlu0.b32.cont [4/16] 0.0, 128
    %1755 = vxpose.xlu0.b32.cont [5/16] 0.0, 128
    %1756 = vxpose.xlu0.b32.cont [6/16] 0.0, 128
    %1757 = vxpose.xlu0.b32.cont [7/16] 0.0, 128
    %1758 = vxpose.xlu0.b32.cont [8/16] 0.0, 128
    %1759 = vxpose.xlu0.b32.cont [9/16] 0.0, 128
    %1760 = vxpose.xlu0.b32.cont [10/16] 0.0, 128
    %1761 = vxpose.xlu0.b32.cont [11/16] 0.0, 128
    %1762 = vxpose.xlu0.b32.cont [12/16] 0.0, 128
    %1763 = vxpose.xlu0.b32.cont [13/16] 0.0, 128
    %1764 = vxpose.xlu0.b32.cont [14/16] 0.0, 128
    %1765 = vxpose.xlu0.b32.cont [15/16] 0.0, 128
    %1766 = vxpose.xlu0.b32.end [16/16] 0.0, 128
    %v1767 = vpop.trf.xlu0
    %v1768 = vpop.trf.xlu0
    %v1769 = vpop.trf.xlu0
    %v1770 = vpop.trf.xlu0
    %v1771 = vpop.trf.xlu0
    %v1772 = vpop.trf.xlu0
    %v1773 = vpop.trf.xlu0
    %v1774 = vpop.trf.xlu0
    %v1775 = vpop.trf.xlu0
    %v1776 = vpop.trf.xlu0
    %v1777 = vpop.trf.xlu0
    %v1778 = vpop.trf.xlu0
    %v1779 = vpop.trf.xlu0
    %v1780 = vpop.trf.xlu0
    %v1781 = vpop.trf.xlu0
    %v1782 = vpop.trf.xlu0
    %1783 = vxpose.xlu0.b32.start [1/16] %v1222, 128
    %1784 = vxpose.xlu0.b32.cont [2/16] 0.0, 128
    %1785 = vxpose.xlu0.b32.cont [3/16] 0.0, 128
    %1786 = vxpose.xlu0.b32.cont [4/16] 0.0, 128
    %1787 = vxpose.xlu0.b32.cont [5/16] 0.0, 128
    %1788 = vxpose.xlu0.b32.cont [6/16] 0.0, 128
    %1789 = vxpose.xlu0.b32.cont [7/16] 0.0, 128
    %1790 = vxpose.xlu0.b32.cont [8/16] 0.0, 128
    %1791 = vxpose.xlu0.b32.cont [9/16] 0.0, 128
    %1792 = vxpose.xlu0.b32.cont [10/16] 0.0, 128
    %1793 = vxpose.xlu0.b32.cont [11/16] 0.0, 128
    %1794 = vxpose.xlu0.b32.cont [12/16] 0.0, 128
    %1795 = vxpose.xlu0.b32.cont [13/16] 0.0, 128
    %1796 = vxpose.xlu0.b32.cont [14/16] 0.0, 128
    %1797 = vxpose.xlu0.b32.cont [15/16] 0.0, 128
    %1798 = vxpose.xlu0.b32.end [16/16] 0.0, 128
    %v1799 = vpop.trf.xlu0
    %v1800 = vpop.trf.xlu0
    %v1801 = vpop.trf.xlu0
    %v1802 = vpop.trf.xlu0
    %v1803 = vpop.trf.xlu0
    %v1804 = vpop.trf.xlu0
    %v1805 = vpop.trf.xlu0
    %v1806 = vpop.trf.xlu0
    %v1807 = vpop.trf.xlu0
    %v1808 = vpop.trf.xlu0
    %v1809 = vpop.trf.xlu0
    %v1810 = vpop.trf.xlu0
    %v1811 = vpop.trf.xlu0
    %v1812 = vpop.trf.xlu0
    %v1813 = vpop.trf.xlu0
    %v1814 = vpop.trf.xlu0
    %1815 = vxpose.xlu0.b32.start [1/16] %v1213, 128
    %1816 = vxpose.xlu0.b32.cont [2/16] 0.0, 128
    %1817 = vxpose.xlu0.b32.cont [3/16] 0.0, 128
    %1818 = vxpose.xlu0.b32.cont [4/16] 0.0, 128
    %1819 = vxpose.xlu0.b32.cont [5/16] 0.0, 128
    %1820 = vxpose.xlu0.b32.cont [6/16] 0.0, 128
    %1821 = vxpose.xlu0.b32.cont [7/16] 0.0, 128
    %1822 = vxpose.xlu0.b32.cont [8/16] 0.0, 128
    %1823 = vxpose.xlu0.b32.cont [9/16] 0.0, 128
    %1824 = vxpose.xlu0.b32.cont [10/16] 0.0, 128
    %1825 = vxpose.xlu0.b32.cont [11/16] 0.0, 128
    %1826 = vxpose.xlu0.b32.cont [12/16] 0.0, 128
    %1827 = vxpose.xlu0.b32.cont [13/16] 0.0, 128
    %1828 = vxpose.xlu0.b32.cont [14/16] 0.0, 128
    %1829 = vxpose.xlu0.b32.cont [15/16] 0.0, 128
    %1830 = vxpose.xlu0.b32.end [16/16] 0.0, 128
    %v1831 = vpop.trf.xlu0
    %v1832 = vpop.trf.xlu0
    %v1833 = vpop.trf.xlu0
    %v1834 = vpop.trf.xlu0
    %v1835 = vpop.trf.xlu0
    %v1836 = vpop.trf.xlu0
    %v1837 = vpop.trf.xlu0
    %v1838 = vpop.trf.xlu0
    %v1839 = vpop.trf.xlu0
    %v1840 = vpop.trf.xlu0
    %v1841 = vpop.trf.xlu0
    %v1842 = vpop.trf.xlu0
    %v1843 = vpop.trf.xlu0
    %v1844 = vpop.trf.xlu0
    %v1845 = vpop.trf.xlu0
    %v1846 = vpop.trf.xlu0
    %1847 = vxpose.xlu0.b32.start [1/16] %v1223, 128
    %1848 = vxpose.xlu0.b32.cont [2/16] 0.0, 128
    %1849 = vxpose.xlu0.b32.cont [3/16] 0.0, 128
    %1850 = vxpose.xlu0.b32.cont [4/16] 0.0, 128
    %1851 = vxpose.xlu0.b32.cont [5/16] 0.0, 128
    %1852 = vxpose.xlu0.b32.cont [6/16] 0.0, 128
    %1853 = vxpose.xlu0.b32.cont [7/16] 0.0, 128
    %1854 = vxpose.xlu0.b32.cont [8/16] 0.0, 128
    %1855 = vxpose.xlu0.b32.cont [9/16] 0.0, 128
    %1856 = vxpose.xlu0.b32.cont [10/16] 0.0, 128
    %1857 = vxpose.xlu0.b32.cont [11/16] 0.0, 128
    %1858 = vxpose.xlu0.b32.cont [12/16] 0.0, 128
    %1859 = vxpose.xlu0.b32.cont [13/16] 0.0, 128
    %1860 = vxpose.xlu0.b32.cont [14/16] 0.0, 128
    %1861 = vxpose.xlu0.b32.cont [15/16] 0.0, 128
    %1862 = vxpose.xlu0.b32.end [16/16] 0.0, 128
    %v1863 = vpop.trf.xlu0
    %v1864 = vpop.trf.xlu0
    %v1865 = vpop.trf.xlu0
    %v1866 = vpop.trf.xlu0
    %v1867 = vpop.trf.xlu0
    %v1868 = vpop.trf.xlu0
    %v1869 = vpop.trf.xlu0
    %v1870 = vpop.trf.xlu0
    %v1871 = vpop.trf.xlu0
    %v1872 = vpop.trf.xlu0
    %v1873 = vpop.trf.xlu0
    %v1874 = vpop.trf.xlu0
    %v1875 = vpop.trf.xlu0
    %v1876 = vpop.trf.xlu0
    %v1877 = vpop.trf.xlu0
    %v1878 = vpop.trf.xlu0
    %1879 = vxpose.xlu0.b32.start [1/16] %v1220, 128
    %1880 = vxpose.xlu0.b32.cont [2/16] 0.0, 128
    %1881 = vxpose.xlu0.b32.cont [3/16] 0.0, 128
    %1882 = vxpose.xlu0.b32.cont [4/16] 0.0, 128
    %1883 = vxpose.xlu0.b32.cont [5/16] 0.0, 128
    %1884 = vxpose.xlu0.b32.cont [6/16] 0.0, 128
    %1885 = vxpose.xlu0.b32.cont [7/16] 0.0, 128
    %1886 = vxpose.xlu0.b32.cont [8/16] 0.0, 128
    %1887 = vxpose.xlu0.b32.cont [9/16] 0.0, 128
    %1888 = vxpose.xlu0.b32.cont [10/16] 0.0, 128
    %1889 = vxpose.xlu0.b32.cont [11/16] 0.0, 128
    %1890 = vxpose.xlu0.b32.cont [12/16] 0.0, 128
    %1891 = vxpose.xlu0.b32.cont [13/16] 0.0, 128
    %1892 = vxpose.xlu0.b32.cont [14/16] 0.0, 128
    %1893 = vxpose.xlu0.b32.cont [15/16] 0.0, 128
    %1894 = vxpose.xlu0.b32.end [16/16] 0.0, 128
    %v1895 = vpop.trf.xlu0
    %v1896 = vpop.trf.xlu0
    %v1897 = vpop.trf.xlu0
    %v1898 = vpop.trf.xlu0
    %v1899 = vpop.trf.xlu0
    %v1900 = vpop.trf.xlu0
    %v1901 = vpop.trf.xlu0
    %v1902 = vpop.trf.xlu0
    %v1903 = vpop.trf.xlu0
    %v1904 = vpop.trf.xlu0
    %v1905 = vpop.trf.xlu0
    %v1906 = vpop.trf.xlu0
    %v1907 = vpop.trf.xlu0
    %v1908 = vpop.trf.xlu0
    %v1909 = vpop.trf.xlu0
    %v1910 = vpop.trf.xlu0
    %1911 = vxpose.xlu0.b32.start [1/16] %v1224, 128
    %1912 = vxpose.xlu0.b32.cont [2/16] 0.0, 128
    %1913 = vxpose.xlu0.b32.cont [3/16] 0.0, 128
    %1914 = vxpose.xlu0.b32.cont [4/16] 0.0, 128
    %1915 = vxpose.xlu0.b32.cont [5/16] 0.0, 128
    %1916 = vxpose.xlu0.b32.cont [6/16] 0.0, 128
    %1917 = vxpose.xlu0.b32.cont [7/16] 0.0, 128
    %1918 = vxpose.xlu0.b32.cont [8/16] 0.0, 128
    %1919 = vxpose.xlu0.b32.cont [9/16] 0.0, 128
    %1920 = vxpose.xlu0.b32.cont [10/16] 0.0, 128
    %1921 = vxpose.xlu0.b32.cont [11/16] 0.0, 128
    %1922 = vxpose.xlu0.b32.cont [12/16] 0.0, 128
    %1923 = vxpose.xlu0.b32.cont [13/16] 0.0, 128
    %1924 = vxpose.xlu0.b32.cont [14/16] 0.0, 128
    %1925 = vxpose.xlu0.b32.cont [15/16] 0.0, 128
    %1926 = vxpose.xlu0.b32.end [16/16] 0.0, 128
    %v1927 = vpop.trf.xlu0
    %v1928 = vpop.trf.xlu0
    %v1929 = vpop.trf.xlu0
    %v1930 = vpop.trf.xlu0
    %v1931 = vpop.trf.xlu0
    %v1932 = vpop.trf.xlu0
    %v1933 = vpop.trf.xlu0
    %v1934 = vpop.trf.xlu0
    %v1935 = vpop.trf.xlu0
    %v1936 = vpop.trf.xlu0
    %v1937 = vpop.trf.xlu0
    %v1938 = vpop.trf.xlu0
    %v1939 = vpop.trf.xlu0
    %v1940 = vpop.trf.xlu0
    %v1941 = vpop.trf.xlu0
    %v1942 = vpop.trf.xlu0
    %1943 = vxpose.xlu0.b32.start [1/16] %v1263, 128
    %1944 = vxpose.xlu0.b32.cont [2/16] 0.0, 128
    %1945 = vxpose.xlu0.b32.cont [3/16] 0.0, 128
    %1946 = vxpose.xlu0.b32.cont [4/16] 0.0, 128
    %1947 = vxpose.xlu0.b32.cont [5/16] 0.0, 128
    %1948 = vxpose.xlu0.b32.cont [6/16] 0.0, 128
    %1949 = vxpose.xlu0.b32.cont [7/16] 0.0, 128
    %1950 = vxpose.xlu0.b32.cont [8/16] 0.0, 128
    %1951 = vxpose.xlu0.b32.cont [9/16] 0.0, 128
    %1952 = vxpose.xlu0.b32.cont [10/16] 0.0, 128
    %1953 = vxpose.xlu0.b32.cont [11/16] 0.0, 128
    %1954 = vxpose.xlu0.b32.cont [12/16] 0.0, 128
    %1955 = vxpose.xlu0.b32.cont [13/16] 0.0, 128
    %1956 = vxpose.xlu0.b32.cont [14/16] 0.0, 128
    %1957 = vxpose.xlu0.b32.cont [15/16] 0.0, 128
    %1958 = vxpose.xlu0.b32.end [16/16] 0.0, 128
    %v1959 = vpop.trf.xlu0
    %v1960 = vpop.trf.xlu0
    %v1961 = vpop.trf.xlu0
    %v1962 = vpop.trf.xlu0
    %v1963 = vpop.trf.xlu0
    %v1964 = vpop.trf.xlu0
    %v1965 = vpop.trf.xlu0
    %v1966 = vpop.trf.xlu0
    %v1967 = vpop.trf.xlu0
    %v1968 = vpop.trf.xlu0
    %v1969 = vpop.trf.xlu0
    %v1970 = vpop.trf.xlu0
    %v1971 = vpop.trf.xlu0
    %v1972 = vpop.trf.xlu0
    %v1973 = vpop.trf.xlu0
    %v1974 = vpop.trf.xlu0
    %1975 = vxpose.xlu0.b32.start [1/16] %v1287, 128
    %1976 = vxpose.xlu0.b32.cont [2/16] 0.0, 128
    %1977 = vxpose.xlu0.b32.cont [3/16] 0.0, 128
    %1978 = vxpose.xlu0.b32.cont [4/16] 0.0, 128
    %1979 = vxpose.xlu0.b32.cont [5/16] 0.0, 128
    %1980 = vxpose.xlu0.b32.cont [6/16] 0.0, 128
    %1981 = vxpose.xlu0.b32.cont [7/16] 0.0, 128
    %1982 = vxpose.xlu0.b32.cont [8/16] 0.0, 128
    %1983 = vxpose.xlu0.b32.cont [9/16] 0.0, 128
    %1984 = vxpose.xlu0.b32.cont [10/16] 0.0, 128
    %1985 = vxpose.xlu0.b32.cont [11/16] 0.0, 128
    %1986 = vxpose.xlu0.b32.cont [12/16] 0.0, 128
    %1987 = vxpose.xlu0.b32.cont [13/16] 0.0, 128
    %1988 = vxpose.xlu0.b32.cont [14/16] 0.0, 128
    %1989 = vxpose.xlu0.b32.cont [15/16] 0.0, 128
    %1990 = vxpose.xlu0.b32.end [16/16] 0.0, 128
    %v1991 = vpop.trf.xlu0
    %v1992 = vpop.trf.xlu0
    %v1993 = vpop.trf.xlu0
    %v1994 = vpop.trf.xlu0
    %v1995 = vpop.trf.xlu0
    %v1996 = vpop.trf.xlu0
    %v1997 = vpop.trf.xlu0
    %v1998 = vpop.trf.xlu0
    %v1999 = vpop.trf.xlu0
    %v2000 = vpop.trf.xlu0
    %v2001 = vpop.trf.xlu0
    %v2002 = vpop.trf.xlu0
    %v2003 = vpop.trf.xlu0
    %v2004 = vpop.trf.xlu0
    %v2005 = vpop.trf.xlu0
    %v2006 = vpop.trf.xlu0
    %2007 = vxpose.xlu0.b32.start [1/16] %v1270, 128
    %2008 = vxpose.xlu0.b32.cont [2/16] 0.0, 128
    %2009 = vxpose.xlu0.b32.cont [3/16] 0.0, 128
    %2010 = vxpose.xlu0.b32.cont [4/16] 0.0, 128
    %2011 = vxpose.xlu0.b32.cont [5/16] 0.0, 128
    %2012 = vxpose.xlu0.b32.cont [6/16] 0.0, 128
    %2013 = vxpose.xlu0.b32.cont [7/16] 0.0, 128
    %2014 = vxpose.xlu0.b32.cont [8/16] 0.0, 128
    %2015 = vxpose.xlu0.b32.cont [9/16] 0.0, 128
    %2016 = vxpose.xlu0.b32.cont [10/16] 0.0, 128
    %2017 = vxpose.xlu0.b32.cont [11/16] 0.0, 128
    %2018 = vxpose.xlu0.b32.cont [12/16] 0.0, 128
    %2019 = vxpose.xlu0.b32.cont [13/16] 0.0, 128
    %2020 = vxpose.xlu0.b32.cont [14/16] 0.0, 128
    %2021 = vxpose.xlu0.b32.cont [15/16] 0.0, 128
    %2022 = vxpose.xlu0.b32.end [16/16] 0.0, 128
    %v2023 = vpop.trf.xlu0
    %v2024 = vpop.trf.xlu0
    %v2025 = vpop.trf.xlu0
    %v2026 = vpop.trf.xlu0
    %v2027 = vpop.trf.xlu0
    %v2028 = vpop.trf.xlu0
    %v2029 = vpop.trf.xlu0
    %v2030 = vpop.trf.xlu0
    %v2031 = vpop.trf.xlu0
    %v2032 = vpop.trf.xlu0
    %v2033 = vpop.trf.xlu0
    %v2034 = vpop.trf.xlu0
    %v2035 = vpop.trf.xlu0
    %v2036 = vpop.trf.xlu0
    %v2037 = vpop.trf.xlu0
    %v2038 = vpop.trf.xlu0
    %2039 = vxpose.xlu0.b32.start [1/16] %v1288, 128
    %2040 = vxpose.xlu0.b32.cont [2/16] 0.0, 128
    %2041 = vxpose.xlu0.b32.cont [3/16] 0.0, 128
    %2042 = vxpose.xlu0.b32.cont [4/16] 0.0, 128
    %2043 = vxpose.xlu0.b32.cont [5/16] 0.0, 128
    %2044 = vxpose.xlu0.b32.cont [6/16] 0.0, 128
    %2045 = vxpose.xlu0.b32.cont [7/16] 0.0, 128
    %2046 = vxpose.xlu0.b32.cont [8/16] 0.0, 128
    %2047 = vxpose.xlu0.b32.cont [9/16] 0.0, 128
    %2048 = vxpose.xlu0.b32.cont [10/16] 0.0, 128
    %2049 = vxpose.xlu0.b32.cont [11/16] 0.0, 128
    %2050 = vxpose.xlu0.b32.cont [12/16] 0.0, 128
    %2051 = vxpose.xlu0.b32.cont [13/16] 0.0, 128
    %2052 = vxpose.xlu0.b32.cont [14/16] 0.0, 128
    %2053 = vxpose.xlu0.b32.cont [15/16] 0.0, 128
    %2054 = vxpose.xlu0.b32.end [16/16] 0.0, 128
    %v2055 = vpop.trf.xlu0
    %v2056 = vpop.trf.xlu0
    %v2057 = vpop.trf.xlu0
    %v2058 = vpop.trf.xlu0
    %v2059 = vpop.trf.xlu0
    %v2060 = vpop.trf.xlu0
    %v2061 = vpop.trf.xlu0
    %v2062 = vpop.trf.xlu0
    %v2063 = vpop.trf.xlu0
    %v2064 = vpop.trf.xlu0
    %v2065 = vpop.trf.xlu0
    %v2066 = vpop.trf.xlu0
    %v2067 = vpop.trf.xlu0
    %v2068 = vpop.trf.xlu0
    %v2069 = vpop.trf.xlu0
    %v2070 = vpop.trf.xlu0
    %2071 = vxpose.xlu0.b32.start [1/16] %v1279, 128
    %2072 = vxpose.xlu0.b32.cont [2/16] 0.0, 128
    %2073 = vxpose.xlu0.b32.cont [3/16] 0.0, 128
    %2074 = vxpose.xlu0.b32.cont [4/16] 0.0, 128
    %2075 = vxpose.xlu0.b32.cont [5/16] 0.0, 128
    %2076 = vxpose.xlu0.b32.cont [6/16] 0.0, 128
    %2077 = vxpose.xlu0.b32.cont [7/16] 0.0, 128
    %2078 = vxpose.xlu0.b32.cont [8/16] 0.0, 128
    %2079 = vxpose.xlu0.b32.cont [9/16] 0.0, 128
    %2080 = vxpose.xlu0.b32.cont [10/16] 0.0, 128
    %2081 = vxpose.xlu0.b32.cont [11/16] 0.0, 128
    %2082 = vxpose.xlu0.b32.cont [12/16] 0.0, 128
    %2083 = vxpose.xlu0.b32.cont [13/16] 0.0, 128
    %2084 = vxpose.xlu0.b32.cont [14/16] 0.0, 128
    %2085 = vxpose.xlu0.b32.cont [15/16] 0.0, 128
    %2086 = vxpose.xlu0.b32.end [16/16] 0.0, 128
    %v2087 = vpop.trf.xlu0
    %v2088 = vpop.trf.xlu0
    %v2089 = vpop.trf.xlu0
    %v2090 = vpop.trf.xlu0
    %v2091 = vpop.trf.xlu0
    %v2092 = vpop.trf.xlu0
    %v2093 = vpop.trf.xlu0
    %v2094 = vpop.trf.xlu0
    %v2095 = vpop.trf.xlu0
    %v2096 = vpop.trf.xlu0
    %v2097 = vpop.trf.xlu0
    %v2098 = vpop.trf.xlu0
    %v2099 = vpop.trf.xlu0
    %v2100 = vpop.trf.xlu0
    %v2101 = vpop.trf.xlu0
    %v2102 = vpop.trf.xlu0
    %2103 = vxpose.xlu0.b32.start [1/16] %v1289, 128
    %2104 = vxpose.xlu0.b32.cont [2/16] 0.0, 128
    %2105 = vxpose.xlu0.b32.cont [3/16] 0.0, 128
    %2106 = vxpose.xlu0.b32.cont [4/16] 0.0, 128
    %2107 = vxpose.xlu0.b32.cont [5/16] 0.0, 128
    %2108 = vxpose.xlu0.b32.cont [6/16] 0.0, 128
    %2109 = vxpose.xlu0.b32.cont [7/16] 0.0, 128
    %2110 = vxpose.xlu0.b32.cont [8/16] 0.0, 128
    %2111 = vxpose.xlu0.b32.cont [9/16] 0.0, 128
    %2112 = vxpose.xlu0.b32.cont [10/16] 0.0, 128
    %2113 = vxpose.xlu0.b32.cont [11/16] 0.0, 128
    %2114 = vxpose.xlu0.b32.cont [12/16] 0.0, 128
    %2115 = vxpose.xlu0.b32.cont [13/16] 0.0, 128
    %2116 = vxpose.xlu0.b32.cont [14/16] 0.0, 128
    %2117 = vxpose.xlu0.b32.cont [15/16] 0.0, 128
    %2118 = vxpose.xlu0.b32.end [16/16] 0.0, 128
    %v2119 = vpop.trf.xlu0
    %v2120 = vpop.trf.xlu0
    %v2121 = vpop.trf.xlu0
    %v2122 = vpop.trf.xlu0
    %v2123 = vpop.trf.xlu0
    %v2124 = vpop.trf.xlu0
    %v2125 = vpop.trf.xlu0
    %v2126 = vpop.trf.xlu0
    %v2127 = vpop.trf.xlu0
    %v2128 = vpop.trf.xlu0
    %v2129 = vpop.trf.xlu0
    %v2130 = vpop.trf.xlu0
    %v2131 = vpop.trf.xlu0
    %v2132 = vpop.trf.xlu0
    %v2133 = vpop.trf.xlu0
    %v2134 = vpop.trf.xlu0
    %2135 = vxpose.xlu0.b32.start [1/16] %v1286, 128
    %2136 = vxpose.xlu0.b32.cont [2/16] 0.0, 128
    %2137 = vxpose.xlu0.b32.cont [3/16] 0.0, 128
    %2138 = vxpose.xlu0.b32.cont [4/16] 0.0, 128
    %2139 = vxpose.xlu0.b32.cont [5/16] 0.0, 128
    %2140 = vxpose.xlu0.b32.cont [6/16] 0.0, 128
    %2141 = vxpose.xlu0.b32.cont [7/16] 0.0, 128
    %2142 = vxpose.xlu0.b32.cont [8/16] 0.0, 128
    %2143 = vxpose.xlu0.b32.cont [9/16] 0.0, 128
    %2144 = vxpose.xlu0.b32.cont [10/16] 0.0, 128
    %2145 = vxpose.xlu0.b32.cont [11/16] 0.0, 128
    %2146 = vxpose.xlu0.b32.cont [12/16] 0.0, 128
    %2147 = vxpose.xlu0.b32.cont [13/16] 0.0, 128
    %2148 = vxpose.xlu0.b32.cont [14/16] 0.0, 128
    %2149 = vxpose.xlu0.b32.cont [15/16] 0.0, 128
    %2150 = vxpose.xlu0.b32.end [16/16] 0.0, 128
    %v2151 = vpop.trf.xlu0
    %v2152 = vpop.trf.xlu0
    %v2153 = vpop.trf.xlu0
    %v2154 = vpop.trf.xlu0
    %v2155 = vpop.trf.xlu0
    %v2156 = vpop.trf.xlu0
    %v2157 = vpop.trf.xlu0
    %v2158 = vpop.trf.xlu0
    %v2159 = vpop.trf.xlu0
    %v2160 = vpop.trf.xlu0
    %v2161 = vpop.trf.xlu0
    %v2162 = vpop.trf.xlu0
    %v2163 = vpop.trf.xlu0
    %v2164 = vpop.trf.xlu0
    %v2165 = vpop.trf.xlu0
    %v2166 = vpop.trf.xlu0
    %2167 = vxpose.xlu0.b32.start [1/16] %v1290, 128
    %2168 = vxpose.xlu0.b32.cont [2/16] 0.0, 128
    %2169 = vxpose.xlu0.b32.cont [3/16] 0.0, 128
    %2170 = vxpose.xlu0.b32.cont [4/16] 0.0, 128
    %2171 = vxpose.xlu0.b32.cont [5/16] 0.0, 128
    %2172 = vxpose.xlu0.b32.cont [6/16] 0.0, 128
    %2173 = vxpose.xlu0.b32.cont [7/16] 0.0, 128
    %2174 = vxpose.xlu0.b32.cont [8/16] 0.0, 128
    %2175 = vxpose.xlu0.b32.cont [9/16] 0.0, 128
    %2176 = vxpose.xlu0.b32.cont [10/16] 0.0, 128
    %2177 = vxpose.xlu0.b32.cont [11/16] 0.0, 128
    %2178 = vxpose.xlu0.b32.cont [12/16] 0.0, 128
    %2179 = vxpose.xlu0.b32.cont [13/16] 0.0, 128
    %2180 = vxpose.xlu0.b32.cont [14/16] 0.0, 128
    %2181 = vxpose.xlu0.b32.cont [15/16] 0.0, 128
    %2182 = vxpose.xlu0.b32.end [16/16] 0.0, 128
    %v2183 = vpop.trf.xlu0
    %v2184 = vpop.trf.xlu0
    %v2185 = vpop.trf.xlu0
    %v2186 = vpop.trf.xlu0
    %v2187 = vpop.trf.xlu0
    %v2188 = vpop.trf.xlu0
    %v2189 = vpop.trf.xlu0
    %v2190 = vpop.trf.xlu0
    %v2191 = vpop.trf.xlu0
    %v2192 = vpop.trf.xlu0
    %v2193 = vpop.trf.xlu0
    %v2194 = vpop.trf.xlu0
    %v2195 = vpop.trf.xlu0
    %v2196 = vpop.trf.xlu0
    %v2197 = vpop.trf.xlu0
    %v2198 = vpop.trf.xlu0
    %2199 = vxpose.xlu0.b32.start [1/16] %v1329, 128
    %2200 = vxpose.xlu0.b32.cont [2/16] 0.0, 128
    %2201 = vxpose.xlu0.b32.cont [3/16] 0.0, 128
    %2202 = vxpose.xlu0.b32.cont [4/16] 0.0, 128
    %2203 = vxpose.xlu0.b32.cont [5/16] 0.0, 128
    %2204 = vxpose.xlu0.b32.cont [6/16] 0.0, 128
    %2205 = vxpose.xlu0.b32.cont [7/16] 0.0, 128
    %2206 = vxpose.xlu0.b32.cont [8/16] 0.0, 128
    %2207 = vxpose.xlu0.b32.cont [9/16] 0.0, 128
    %2208 = vxpose.xlu0.b32.cont [10/16] 0.0, 128
    %2209 = vxpose.xlu0.b32.cont [11/16] 0.0, 128
    %2210 = vxpose.xlu0.b32.cont [12/16] 0.0, 128
    %2211 = vxpose.xlu0.b32.cont [13/16] 0.0, 128
    %2212 = vxpose.xlu0.b32.cont [14/16] 0.0, 128
    %2213 = vxpose.xlu0.b32.cont [15/16] 0.0, 128
    %2214 = vxpose.xlu0.b32.end [16/16] 0.0, 128
    %v2215 = vpop.trf.xlu0
    %v2216 = vpop.trf.xlu0
    %v2217 = vpop.trf.xlu0
    %v2218 = vpop.trf.xlu0
    %v2219 = vpop.trf.xlu0
    %v2220 = vpop.trf.xlu0
    %v2221 = vpop.trf.xlu0
    %v2222 = vpop.trf.xlu0
    %v2223 = vpop.trf.xlu0
    %v2224 = vpop.trf.xlu0
    %v2225 = vpop.trf.xlu0
    %v2226 = vpop.trf.xlu0
    %v2227 = vpop.trf.xlu0
    %v2228 = vpop.trf.xlu0
    %v2229 = vpop.trf.xlu0
    %v2230 = vpop.trf.xlu0
    %2231 = vxpose.xlu0.b32.start [1/16] %v1353, 128
    %2232 = vxpose.xlu0.b32.cont [2/16] 0.0, 128
    %2233 = vxpose.xlu0.b32.cont [3/16] 0.0, 128
    %2234 = vxpose.xlu0.b32.cont [4/16] 0.0, 128
    %2235 = vxpose.xlu0.b32.cont [5/16] 0.0, 128
    %2236 = vxpose.xlu0.b32.cont [6/16] 0.0, 128
    %2237 = vxpose.xlu0.b32.cont [7/16] 0.0, 128
    %2238 = vxpose.xlu0.b32.cont [8/16] 0.0, 128
    %2239 = vxpose.xlu0.b32.cont [9/16] 0.0, 128
    %2240 = vxpose.xlu0.b32.cont [10/16] 0.0, 128
    %2241 = vxpose.xlu0.b32.cont [11/16] 0.0, 128
    %2242 = vxpose.xlu0.b32.cont [12/16] 0.0, 128
    %2243 = vxpose.xlu0.b32.cont [13/16] 0.0, 128
    %2244 = vxpose.xlu0.b32.cont [14/16] 0.0, 128
    %2245 = vxpose.xlu0.b32.cont [15/16] 0.0, 128
    %2246 = vxpose.xlu0.b32.end [16/16] 0.0, 128
    %v2247 = vpop.trf.xlu0
    %v2248 = vpop.trf.xlu0
    %v2249 = vpop.trf.xlu0
    %v2250 = vpop.trf.xlu0
    %v2251 = vpop.trf.xlu0
    %v2252 = vpop.trf.xlu0
    %v2253 = vpop.trf.xlu0
    %v2254 = vpop.trf.xlu0
    %v2255 = vpop.trf.xlu0
    %v2256 = vpop.trf.xlu0
    %v2257 = vpop.trf.xlu0
    %v2258 = vpop.trf.xlu0
    %v2259 = vpop.trf.xlu0
    %v2260 = vpop.trf.xlu0
    %v2261 = vpop.trf.xlu0
    %v2262 = vpop.trf.xlu0
    %2263 = vxpose.xlu0.b32.start [1/16] %v1336, 128
    %2264 = vxpose.xlu0.b32.cont [2/16] 0.0, 128
    %2265 = vxpose.xlu0.b32.cont [3/16] 0.0, 128
    %2266 = vxpose.xlu0.b32.cont [4/16] 0.0, 128
    %2267 = vxpose.xlu0.b32.cont [5/16] 0.0, 128
    %2268 = vxpose.xlu0.b32.cont [6/16] 0.0, 128
    %2269 = vxpose.xlu0.b32.cont [7/16] 0.0, 128
    %2270 = vxpose.xlu0.b32.cont [8/16] 0.0, 128
    %2271 = vxpose.xlu0.b32.cont [9/16] 0.0, 128
    %2272 = vxpose.xlu0.b32.cont [10/16] 0.0, 128
    %2273 = vxpose.xlu0.b32.cont [11/16] 0.0, 128
    %2274 = vxpose.xlu0.b32.cont [12/16] 0.0, 128
    %2275 = vxpose.xlu0.b32.cont [13/16] 0.0, 128
    %2276 = vxpose.xlu0.b32.cont [14/16] 0.0, 128
    %2277 = vxpose.xlu0.b32.cont [15/16] 0.0, 128
    %2278 = vxpose.xlu0.b32.end [16/16] 0.0, 128
    %v2279 = vpop.trf.xlu0
    %v2280 = vpop.trf.xlu0
    %v2281 = vpop.trf.xlu0
    %v2282 = vpop.trf.xlu0
    %v2283 = vpop.trf.xlu0
    %v2284 = vpop.trf.xlu0
    %v2285 = vpop.trf.xlu0
    %v2286 = vpop.trf.xlu0
    %v2287 = vpop.trf.xlu0
    %v2288 = vpop.trf.xlu0
    %v2289 = vpop.trf.xlu0
    %v2290 = vpop.trf.xlu0
    %v2291 = vpop.trf.xlu0
    %v2292 = vpop.trf.xlu0
    %v2293 = vpop.trf.xlu0
    %v2294 = vpop.trf.xlu0
    %2295 = vxpose.xlu0.b32.start [1/16] %v1354, 128
    %2296 = vxpose.xlu0.b32.cont [2/16] 0.0, 128
    %2297 = vxpose.xlu0.b32.cont [3/16] 0.0, 128
    %2298 = vxpose.xlu0.b32.cont [4/16] 0.0, 128
    %2299 = vxpose.xlu0.b32.cont [5/16] 0.0, 128
    %2300 = vxpose.xlu0.b32.cont [6/16] 0.0, 128
    %2301 = vxpose.xlu0.b32.cont [7/16] 0.0, 128
    %2302 = vxpose.xlu0.b32.cont [8/16] 0.0, 128
    %2303 = vxpose.xlu0.b32.cont [9/16] 0.0, 128
    %2304 = vxpose.xlu0.b32.cont [10/16] 0.0, 128
    %2305 = vxpose.xlu0.b32.cont [11/16] 0.0, 128
    %2306 = vxpose.xlu0.b32.cont [12/16] 0.0, 128
    %2307 = vxpose.xlu0.b32.cont [13/16] 0.0, 128
    %2308 = vxpose.xlu0.b32.cont [14/16] 0.0, 128
    %2309 = vxpose.xlu0.b32.cont [15/16] 0.0, 128
    %2310 = vxpose.xlu0.b32.end [16/16] 0.0, 128
    %v2311 = vpop.trf.xlu0
    %v2312 = vpop.trf.xlu0
    %v2313 = vpop.trf.xlu0
    %v2314 = vpop.trf.xlu0
    %v2315 = vpop.trf.xlu0
    %v2316 = vpop.trf.xlu0
    %v2317 = vpop.trf.xlu0
    %v2318 = vpop.trf.xlu0
    %v2319 = vpop.trf.xlu0
    %v2320 = vpop.trf.xlu0
    %v2321 = vpop.trf.xlu0
    %v2322 = vpop.trf.xlu0
    %v2323 = vpop.trf.xlu0
    %v2324 = vpop.trf.xlu0
    %v2325 = vpop.trf.xlu0
    %v2326 = vpop.trf.xlu0
    %2327 = vxpose.xlu0.b32.start [1/16] %v1345, 128
    %2328 = vxpose.xlu0.b32.cont [2/16] 0.0, 128
    %2329 = vxpose.xlu0.b32.cont [3/16] 0.0, 128
    %2330 = vxpose.xlu0.b32.cont [4/16] 0.0, 128
    %2331 = vxpose.xlu0.b32.cont [5/16] 0.0, 128
    %2332 = vxpose.xlu0.b32.cont [6/16] 0.0, 128
    %2333 = vxpose.xlu0.b32.cont [7/16] 0.0, 128
    %2334 = vxpose.xlu0.b32.cont [8/16] 0.0, 128
    %2335 = vxpose.xlu0.b32.cont [9/16] 0.0, 128
    %2336 = vxpose.xlu0.b32.cont [10/16] 0.0, 128
    %2337 = vxpose.xlu0.b32.cont [11/16] 0.0, 128
    %2338 = vxpose.xlu0.b32.cont [12/16] 0.0, 128
    %2339 = vxpose.xlu0.b32.cont [13/16] 0.0, 128
    %2340 = vxpose.xlu0.b32.cont [14/16] 0.0, 128
    %2341 = vxpose.xlu0.b32.cont [15/16] 0.0, 128
    %2342 = vxpose.xlu0.b32.end [16/16] 0.0, 128
    %v2343 = vpop.trf.xlu0
    %v2344 = vpop.trf.xlu0
    %v2345 = vpop.trf.xlu0
    %v2346 = vpop.trf.xlu0
    %v2347 = vpop.trf.xlu0
    %v2348 = vpop.trf.xlu0
    %v2349 = vpop.trf.xlu0
    %v2350 = vpop.trf.xlu0
    %v2351 = vpop.trf.xlu0
    %v2352 = vpop.trf.xlu0
    %v2353 = vpop.trf.xlu0
    %v2354 = vpop.trf.xlu0
    %v2355 = vpop.trf.xlu0
    %v2356 = vpop.trf.xlu0
    %v2357 = vpop.trf.xlu0
    %v2358 = vpop.trf.xlu0
    %2359 = vxpose.xlu0.b32.start [1/16] %v1355, 128
    %2360 = vxpose.xlu0.b32.cont [2/16] 0.0, 128
    %2361 = vxpose.xlu0.b32.cont [3/16] 0.0, 128
    %2362 = vxpose.xlu0.b32.cont [4/16] 0.0, 128
    %2363 = vxpose.xlu0.b32.cont [5/16] 0.0, 128
    %2364 = vxpose.xlu0.b32.cont [6/16] 0.0, 128
    %2365 = vxpose.xlu0.b32.cont [7/16] 0.0, 128
    %2366 = vxpose.xlu0.b32.cont [8/16] 0.0, 128
    %2367 = vxpose.xlu0.b32.cont [9/16] 0.0, 128
    %2368 = vxpose.xlu0.b32.cont [10/16] 0.0, 128
    %2369 = vxpose.xlu0.b32.cont [11/16] 0.0, 128
    %2370 = vxpose.xlu0.b32.cont [12/16] 0.0, 128
    %2371 = vxpose.xlu0.b32.cont [13/16] 0.0, 128
    %2372 = vxpose.xlu0.b32.cont [14/16] 0.0, 128
    %2373 = vxpose.xlu0.b32.cont [15/16] 0.0, 128
    %2374 = vxpose.xlu0.b32.end [16/16] 0.0, 128
    %v2375 = vpop.trf.xlu0
    %v2376 = vpop.trf.xlu0
    %v2377 = vpop.trf.xlu0
    %v2378 = vpop.trf.xlu0
    %v2379 = vpop.trf.xlu0
    %v2380 = vpop.trf.xlu0
    %v2381 = vpop.trf.xlu0
    %v2382 = vpop.trf.xlu0
    %v2383 = vpop.trf.xlu0
    %v2384 = vpop.trf.xlu0
    %v2385 = vpop.trf.xlu0
    %v2386 = vpop.trf.xlu0
    %v2387 = vpop.trf.xlu0
    %v2388 = vpop.trf.xlu0
    %v2389 = vpop.trf.xlu0
    %v2390 = vpop.trf.xlu0
    %2391 = vxpose.xlu0.b32.start [1/16] %v1352, 128
    %2392 = vxpose.xlu0.b32.cont [2/16] 0.0, 128
    %2393 = vxpose.xlu0.b32.cont [3/16] 0.0, 128
    %2394 = vxpose.xlu0.b32.cont [4/16] 0.0, 128
    %2395 = vxpose.xlu0.b32.cont [5/16] 0.0, 128
    %2396 = vxpose.xlu0.b32.cont [6/16] 0.0, 128
    %2397 = vxpose.xlu0.b32.cont [7/16] 0.0, 128
    %2398 = vxpose.xlu0.b32.cont [8/16] 0.0, 128
    %2399 = vxpose.xlu0.b32.cont [9/16] 0.0, 128
    %2400 = vxpose.xlu0.b32.cont [10/16] 0.0, 128
    %2401 = vxpose.xlu0.b32.cont [11/16] 0.0, 128
    %2402 = vxpose.xlu0.b32.cont [12/16] 0.0, 128
    %2403 = vxpose.xlu0.b32.cont [13/16] 0.0, 128
    %2404 = vxpose.xlu0.b32.cont [14/16] 0.0, 128
    %2405 = vxpose.xlu0.b32.cont [15/16] 0.0, 128
    %2406 = vxpose.xlu0.b32.end [16/16] 0.0, 128
    %v2407 = vpop.trf.xlu0
    %v2408 = vpop.trf.xlu0
    %v2409 = vpop.trf.xlu0
    %v2410 = vpop.trf.xlu0
    %v2411 = vpop.trf.xlu0
    %v2412 = vpop.trf.xlu0
    %v2413 = vpop.trf.xlu0
    %v2414 = vpop.trf.xlu0
    %v2415 = vpop.trf.xlu0
    %v2416 = vpop.trf.xlu0
    %v2417 = vpop.trf.xlu0
    %v2418 = vpop.trf.xlu0
    %v2419 = vpop.trf.xlu0
    %v2420 = vpop.trf.xlu0
    %v2421 = vpop.trf.xlu0
    %v2422 = vpop.trf.xlu0
    %2423 = vxpose.xlu0.b32.start [1/16] %v1356, 128
    %2424 = vxpose.xlu0.b32.cont [2/16] 0.0, 128
    %2425 = vxpose.xlu0.b32.cont [3/16] 0.0, 128
    %2426 = vxpose.xlu0.b32.cont [4/16] 0.0, 128
    %2427 = vxpose.xlu0.b32.cont [5/16] 0.0, 128
    %2428 = vxpose.xlu0.b32.cont [6/16] 0.0, 128
    %2429 = vxpose.xlu0.b32.cont [7/16] 0.0, 128
    %2430 = vxpose.xlu0.b32.cont [8/16] 0.0, 128
    %2431 = vxpose.xlu0.b32.cont [9/16] 0.0, 128
    %2432 = vxpose.xlu0.b32.cont [10/16] 0.0, 128
    %2433 = vxpose.xlu0.b32.cont [11/16] 0.0, 128
    %2434 = vxpose.xlu0.b32.cont [12/16] 0.0, 128
    %2435 = vxpose.xlu0.b32.cont [13/16] 0.0, 128
    %2436 = vxpose.xlu0.b32.cont [14/16] 0.0, 128
    %2437 = vxpose.xlu0.b32.cont [15/16] 0.0, 128
    %2438 = vxpose.xlu0.b32.end [16/16] 0.0, 128
    %v2439 = vpop.trf.xlu0
    %v2440 = vpop.trf.xlu0
    %v2441 = vpop.trf.xlu0
    %v2442 = vpop.trf.xlu0
    %v2443 = vpop.trf.xlu0
    %v2444 = vpop.trf.xlu0
    %v2445 = vpop.trf.xlu0
    %v2446 = vpop.trf.xlu0
    %v2447 = vpop.trf.xlu0
    %v2448 = vpop.trf.xlu0
    %v2449 = vpop.trf.xlu0
    %v2450 = vpop.trf.xlu0
    %v2451 = vpop.trf.xlu0
    %v2452 = vpop.trf.xlu0
    %v2453 = vpop.trf.xlu0
    %v2454 = vpop.trf.xlu0
    %2455 = vxpose.xlu0.b32.start [1/16] %v1395, 128
    %2456 = vxpose.xlu0.b32.cont [2/16] 0.0, 128
    %2457 = vxpose.xlu0.b32.cont [3/16] 0.0, 128
    %2458 = vxpose.xlu0.b32.cont [4/16] 0.0, 128
    %2459 = vxpose.xlu0.b32.cont [5/16] 0.0, 128
    %2460 = vxpose.xlu0.b32.cont [6/16] 0.0, 128
    %2461 = vxpose.xlu0.b32.cont [7/16] 0.0, 128
    %2462 = vxpose.xlu0.b32.cont [8/16] 0.0, 128
    %2463 = vxpose.xlu0.b32.cont [9/16] 0.0, 128
    %2464 = vxpose.xlu0.b32.cont [10/16] 0.0, 128
    %2465 = vxpose.xlu0.b32.cont [11/16] 0.0, 128
    %2466 = vxpose.xlu0.b32.cont [12/16] 0.0, 128
    %2467 = vxpose.xlu0.b32.cont [13/16] 0.0, 128
    %2468 = vxpose.xlu0.b32.cont [14/16] 0.0, 128
    %2469 = vxpose.xlu0.b32.cont [15/16] 0.0, 128
    %2470 = vxpose.xlu0.b32.end [16/16] 0.0, 128
    %v2471 = vpop.trf.xlu0
    %v2472 = vpop.trf.xlu0
    %v2473 = vpop.trf.xlu0
    %v2474 = vpop.trf.xlu0
    %v2475 = vpop.trf.xlu0
    %v2476 = vpop.trf.xlu0
    %v2477 = vpop.trf.xlu0
    %v2478 = vpop.trf.xlu0
    %v2479 = vpop.trf.xlu0
    %v2480 = vpop.trf.xlu0
    %v2481 = vpop.trf.xlu0
    %v2482 = vpop.trf.xlu0
    %v2483 = vpop.trf.xlu0
    %v2484 = vpop.trf.xlu0
    %v2485 = vpop.trf.xlu0
    %v2486 = vpop.trf.xlu0
    %2487 = vxpose.xlu0.b32.start [1/16] %v1419, 128
    %2488 = vxpose.xlu0.b32.cont [2/16] 0.0, 128
    %2489 = vxpose.xlu0.b32.cont [3/16] 0.0, 128
    %2490 = vxpose.xlu0.b32.cont [4/16] 0.0, 128
    %2491 = vxpose.xlu0.b32.cont [5/16] 0.0, 128
    %2492 = vxpose.xlu0.b32.cont [6/16] 0.0, 128
    %2493 = vxpose.xlu0.b32.cont [7/16] 0.0, 128
    %2494 = vxpose.xlu0.b32.cont [8/16] 0.0, 128
    %2495 = vxpose.xlu0.b32.cont [9/16] 0.0, 128
    %2496 = vxpose.xlu0.b32.cont [10/16] 0.0, 128
    %2497 = vxpose.xlu0.b32.cont [11/16] 0.0, 128
    %2498 = vxpose.xlu0.b32.cont [12/16] 0.0, 128
    %2499 = vxpose.xlu0.b32.cont [13/16] 0.0, 128
    %2500 = vxpose.xlu0.b32.cont [14/16] 0.0, 128
    %2501 = vxpose.xlu0.b32.cont [15/16] 0.0, 128
    %2502 = vxpose.xlu0.b32.end [16/16] 0.0, 128
    %v2503 = vpop.trf.xlu0
    %v2504 = vpop.trf.xlu0
    %v2505 = vpop.trf.xlu0
    %v2506 = vpop.trf.xlu0
    %v2507 = vpop.trf.xlu0
    %v2508 = vpop.trf.xlu0
    %v2509 = vpop.trf.xlu0
    %v2510 = vpop.trf.xlu0
    %v2511 = vpop.trf.xlu0
    %v2512 = vpop.trf.xlu0
    %v2513 = vpop.trf.xlu0
    %v2514 = vpop.trf.xlu0
    %v2515 = vpop.trf.xlu0
    %v2516 = vpop.trf.xlu0
    %v2517 = vpop.trf.xlu0
    %v2518 = vpop.trf.xlu0
    %2519 = vxpose.xlu0.b32.start [1/16] %v1402, 128
    %2520 = vxpose.xlu0.b32.cont [2/16] 0.0, 128
    %2521 = vxpose.xlu0.b32.cont [3/16] 0.0, 128
    %2522 = vxpose.xlu0.b32.cont [4/16] 0.0, 128
    %2523 = vxpose.xlu0.b32.cont [5/16] 0.0, 128
    %2524 = vxpose.xlu0.b32.cont [6/16] 0.0, 128
    %2525 = vxpose.xlu0.b32.cont [7/16] 0.0, 128
    %2526 = vxpose.xlu0.b32.cont [8/16] 0.0, 128
    %2527 = vxpose.xlu0.b32.cont [9/16] 0.0, 128
    %2528 = vxpose.xlu0.b32.cont [10/16] 0.0, 128
    %2529 = vxpose.xlu0.b32.cont [11/16] 0.0, 128
    %2530 = vxpose.xlu0.b32.cont [12/16] 0.0, 128
    %2531 = vxpose.xlu0.b32.cont [13/16] 0.0, 128
    %2532 = vxpose.xlu0.b32.cont [14/16] 0.0, 128
    %2533 = vxpose.xlu0.b32.cont [15/16] 0.0, 128
    %2534 = vxpose.xlu0.b32.end [16/16] 0.0, 128
    %v2535 = vpop.trf.xlu0
    %v2536 = vpop.trf.xlu0
    %v2537 = vpop.trf.xlu0
    %v2538 = vpop.trf.xlu0
    %v2539 = vpop.trf.xlu0
    %v2540 = vpop.trf.xlu0
    %v2541 = vpop.trf.xlu0
    %v2542 = vpop.trf.xlu0
    %v2543 = vpop.trf.xlu0
    %v2544 = vpop.trf.xlu0
    %v2545 = vpop.trf.xlu0
    %v2546 = vpop.trf.xlu0
    %v2547 = vpop.trf.xlu0
    %v2548 = vpop.trf.xlu0
    %v2549 = vpop.trf.xlu0
    %v2550 = vpop.trf.xlu0
    %2551 = vxpose.xlu0.b32.start [1/16] %v1420, 128
    %2552 = vxpose.xlu0.b32.cont [2/16] 0.0, 128
    %2553 = vxpose.xlu0.b32.cont [3/16] 0.0, 128
    %2554 = vxpose.xlu0.b32.cont [4/16] 0.0, 128
    %2555 = vxpose.xlu0.b32.cont [5/16] 0.0, 128
    %2556 = vxpose.xlu0.b32.cont [6/16] 0.0, 128
    %2557 = vxpose.xlu0.b32.cont [7/16] 0.0, 128
    %2558 = vxpose.xlu0.b32.cont [8/16] 0.0, 128
    %2559 = vxpose.xlu0.b32.cont [9/16] 0.0, 128
    %2560 = vxpose.xlu0.b32.cont [10/16] 0.0, 128
    %2561 = vxpose.xlu0.b32.cont [11/16] 0.0, 128
    %2562 = vxpose.xlu0.b32.cont [12/16] 0.0, 128
    %2563 = vxpose.xlu0.b32.cont [13/16] 0.0, 128
    %2564 = vxpose.xlu0.b32.cont [14/16] 0.0, 128
    %2565 = vxpose.xlu0.b32.cont [15/16] 0.0, 128
    %2566 = vxpose.xlu0.b32.end [16/16] 0.0, 128
    %v2567 = vpop.trf.xlu0
    %v2568 = vpop.trf.xlu0
    %v2569 = vpop.trf.xlu0
    %v2570 = vpop.trf.xlu0
    %v2571 = vpop.trf.xlu0
    %v2572 = vpop.trf.xlu0
    %v2573 = vpop.trf.xlu0
    %v2574 = vpop.trf.xlu0
    %v2575 = vpop.trf.xlu0
    %v2576 = vpop.trf.xlu0
    %v2577 = vpop.trf.xlu0
    %v2578 = vpop.trf.xlu0
    %v2579 = vpop.trf.xlu0
    %v2580 = vpop.trf.xlu0
    %v2581 = vpop.trf.xlu0
    %v2582 = vpop.trf.xlu0
    %2583 = vxpose.xlu0.b32.start [1/16] %v1411, 128
    %2584 = vxpose.xlu0.b32.cont [2/16] 0.0, 128
    %2585 = vxpose.xlu0.b32.cont [3/16] 0.0, 128
    %2586 = vxpose.xlu0.b32.cont [4/16] 0.0, 128
    %2587 = vxpose.xlu0.b32.cont [5/16] 0.0, 128
    %2588 = vxpose.xlu0.b32.cont [6/16] 0.0, 128
    %2589 = vxpose.xlu0.b32.cont [7/16] 0.0, 128
    %2590 = vxpose.xlu0.b32.cont [8/16] 0.0, 128
    %2591 = vxpose.xlu0.b32.cont [9/16] 0.0, 128
    %2592 = vxpose.xlu0.b32.cont [10/16] 0.0, 128
    %2593 = vxpose.xlu0.b32.cont [11/16] 0.0, 128
    %2594 = vxpose.xlu0.b32.cont [12/16] 0.0, 128
    %2595 = vxpose.xlu0.b32.cont [13/16] 0.0, 128
    %2596 = vxpose.xlu0.b32.cont [14/16] 0.0, 128
    %2597 = vxpose.xlu0.b32.cont [15/16] 0.0, 128
    %2598 = vxpose.xlu0.b32.end [16/16] 0.0, 128
    %v2599 = vpop.trf.xlu0
    %v2600 = vpop.trf.xlu0
    %v2601 = vpop.trf.xlu0
    %v2602 = vpop.trf.xlu0
    %v2603 = vpop.trf.xlu0
    %v2604 = vpop.trf.xlu0
    %v2605 = vpop.trf.xlu0
    %v2606 = vpop.trf.xlu0
    %v2607 = vpop.trf.xlu0
    %v2608 = vpop.trf.xlu0
    %v2609 = vpop.trf.xlu0
    %v2610 = vpop.trf.xlu0
    %v2611 = vpop.trf.xlu0
    %v2612 = vpop.trf.xlu0
    %v2613 = vpop.trf.xlu0
    %v2614 = vpop.trf.xlu0
    %2615 = vxpose.xlu0.b32.start [1/16] %v1421, 128
    %2616 = vxpose.xlu0.b32.cont [2/16] 0.0, 128
    %2617 = vxpose.xlu0.b32.cont [3/16] 0.0, 128
    %2618 = vxpose.xlu0.b32.cont [4/16] 0.0, 128
    %2619 = vxpose.xlu0.b32.cont [5/16] 0.0, 128
    %2620 = vxpose.xlu0.b32.cont [6/16] 0.0, 128
    %2621 = vxpose.xlu0.b32.cont [7/16] 0.0, 128
    %2622 = vxpose.xlu0.b32.cont [8/16] 0.0, 128
    %2623 = vxpose.xlu0.b32.cont [9/16] 0.0, 128
    %2624 = vxpose.xlu0.b32.cont [10/16] 0.0, 128
    %2625 = vxpose.xlu0.b32.cont [11/16] 0.0, 128
    %2626 = vxpose.xlu0.b32.cont [12/16] 0.0, 128
    %2627 = vxpose.xlu0.b32.cont [13/16] 0.0, 128
    %2628 = vxpose.xlu0.b32.cont [14/16] 0.0, 128
    %2629 = vxpose.xlu0.b32.cont [15/16] 0.0, 128
    %2630 = vxpose.xlu0.b32.end [16/16] 0.0, 128
    %v2631 = vpop.trf.xlu0
    %v2632 = vpop.trf.xlu0
    %v2633 = vpop.trf.xlu0
    %v2634 = vpop.trf.xlu0
    %v2635 = vpop.trf.xlu0
    %v2636 = vpop.trf.xlu0
    %v2637 = vpop.trf.xlu0
    %v2638 = vpop.trf.xlu0
    %v2639 = vpop.trf.xlu0
    %v2640 = vpop.trf.xlu0
    %v2641 = vpop.trf.xlu0
    %v2642 = vpop.trf.xlu0
    %v2643 = vpop.trf.xlu0
    %v2644 = vpop.trf.xlu0
    %v2645 = vpop.trf.xlu0
    %v2646 = vpop.trf.xlu0
    %2647 = vxpose.xlu0.b32.start [1/16] %v1418, 128
    %2648 = vxpose.xlu0.b32.cont [2/16] 0.0, 128
    %2649 = vxpose.xlu0.b32.cont [3/16] 0.0, 128
    %2650 = vxpose.xlu0.b32.cont [4/16] 0.0, 128
    %2651 = vxpose.xlu0.b32.cont [5/16] 0.0, 128
    %2652 = vxpose.xlu0.b32.cont [6/16] 0.0, 128
    %2653 = vxpose.xlu0.b32.cont [7/16] 0.0, 128
    %2654 = vxpose.xlu0.b32.cont [8/16] 0.0, 128
    %2655 = vxpose.xlu0.b32.cont [9/16] 0.0, 128
    %2656 = vxpose.xlu0.b32.cont [10/16] 0.0, 128
    %2657 = vxpose.xlu0.b32.cont [11/16] 0.0, 128
    %2658 = vxpose.xlu0.b32.cont [12/16] 0.0, 128
    %2659 = vxpose.xlu0.b32.cont [13/16] 0.0, 128
    %2660 = vxpose.xlu0.b32.cont [14/16] 0.0, 128
    %2661 = vxpose.xlu0.b32.cont [15/16] 0.0, 128
    %2662 = vxpose.xlu0.b32.end [16/16] 0.0, 128
    %v2663 = vpop.trf.xlu0
    %v2664 = vpop.trf.xlu0
    %v2665 = vpop.trf.xlu0
    %v2666 = vpop.trf.xlu0
    %v2667 = vpop.trf.xlu0
    %v2668 = vpop.trf.xlu0
    %v2669 = vpop.trf.xlu0
    %v2670 = vpop.trf.xlu0
    %v2671 = vpop.trf.xlu0
    %v2672 = vpop.trf.xlu0
    %v2673 = vpop.trf.xlu0
    %v2674 = vpop.trf.xlu0
    %v2675 = vpop.trf.xlu0
    %v2676 = vpop.trf.xlu0
    %v2677 = vpop.trf.xlu0
    %v2678 = vpop.trf.xlu0
    %2679 = vxpose.xlu0.b32.start [1/16] %v1422, 128
    %2680 = vxpose.xlu0.b32.cont [2/16] 0.0, 128
    %2681 = vxpose.xlu0.b32.cont [3/16] 0.0, 128
    %2682 = vxpose.xlu0.b32.cont [4/16] 0.0, 128
    %2683 = vxpose.xlu0.b32.cont [5/16] 0.0, 128
    %2684 = vxpose.xlu0.b32.cont [6/16] 0.0, 128
    %2685 = vxpose.xlu0.b32.cont [7/16] 0.0, 128
    %2686 = vxpose.xlu0.b32.cont [8/16] 0.0, 128
    %2687 = vxpose.xlu0.b32.cont [9/16] 0.0, 128
    %2688 = vxpose.xlu0.b32.cont [10/16] 0.0, 128
    %2689 = vxpose.xlu0.b32.cont [11/16] 0.0, 128
    %2690 = vxpose.xlu0.b32.cont [12/16] 0.0, 128
    %2691 = vxpose.xlu0.b32.cont [13/16] 0.0, 128
    %2692 = vxpose.xlu0.b32.cont [14/16] 0.0, 128
    %2693 = vxpose.xlu0.b32.cont [15/16] 0.0, 128
    %2694 = vxpose.xlu0.b32.end [16/16] 0.0, 128
    %v2695 = vpop.trf.xlu0
    %v2696 = vpop.trf.xlu0
    %v2697 = vpop.trf.xlu0
    %v2698 = vpop.trf.xlu0
    %v2699 = vpop.trf.xlu0
    %v2700 = vpop.trf.xlu0
    %v2701 = vpop.trf.xlu0
    %v2702 = vpop.trf.xlu0
    %v2703 = vpop.trf.xlu0
    %v2704 = vpop.trf.xlu0
    %v2705 = vpop.trf.xlu0
    %v2706 = vpop.trf.xlu0
    %v2707 = vpop.trf.xlu0
    %v2708 = vpop.trf.xlu0
    %v2709 = vpop.trf.xlu0
    %v2710 = vpop.trf.xlu0
    %2711 = vxpose.xlu0.b32.start [1/16] %v1461, 128
    %2712 = vxpose.xlu0.b32.cont [2/16] 0.0, 128
    %2713 = vxpose.xlu0.b32.cont [3/16] 0.0, 128
    %2714 = vxpose.xlu0.b32.cont [4/16] 0.0, 128
    %2715 = vxpose.xlu0.b32.cont [5/16] 0.0, 128
    %2716 = vxpose.xlu0.b32.cont [6/16] 0.0, 128
    %2717 = vxpose.xlu0.b32.cont [7/16] 0.0, 128
    %2718 = vxpose.xlu0.b32.cont [8/16] 0.0, 128
    %2719 = vxpose.xlu0.b32.cont [9/16] 0.0, 128
    %2720 = vxpose.xlu0.b32.cont [10/16] 0.0, 128
    %2721 = vxpose.xlu0.b32.cont [11/16] 0.0, 128
    %2722 = vxpose.xlu0.b32.cont [12/16] 0.0, 128
    %2723 = vxpose.xlu0.b32.cont [13/16] 0.0, 128
    %2724 = vxpose.xlu0.b32.cont [14/16] 0.0, 128
    %2725 = vxpose.xlu0.b32.cont [15/16] 0.0, 128
    %2726 = vxpose.xlu0.b32.end [16/16] 0.0, 128
    %v2727 = vpop.trf.xlu0
    %v2728 = vpop.trf.xlu0
    %v2729 = vpop.trf.xlu0
    %v2730 = vpop.trf.xlu0
    %v2731 = vpop.trf.xlu0
    %v2732 = vpop.trf.xlu0
    %v2733 = vpop.trf.xlu0
    %v2734 = vpop.trf.xlu0
    %v2735 = vpop.trf.xlu0
    %v2736 = vpop.trf.xlu0
    %v2737 = vpop.trf.xlu0
    %v2738 = vpop.trf.xlu0
    %v2739 = vpop.trf.xlu0
    %v2740 = vpop.trf.xlu0
    %v2741 = vpop.trf.xlu0
    %v2742 = vpop.trf.xlu0
    %2743 = vxpose.xlu0.b32.start [1/16] %v1485, 128
    %2744 = vxpose.xlu0.b32.cont [2/16] 0.0, 128
    %2745 = vxpose.xlu0.b32.cont [3/16] 0.0, 128
    %2746 = vxpose.xlu0.b32.cont [4/16] 0.0, 128
    %2747 = vxpose.xlu0.b32.cont [5/16] 0.0, 128
    %2748 = vxpose.xlu0.b32.cont [6/16] 0.0, 128
    %2749 = vxpose.xlu0.b32.cont [7/16] 0.0, 128
    %2750 = vxpose.xlu0.b32.cont [8/16] 0.0, 128
    %2751 = vxpose.xlu0.b32.cont [9/16] 0.0, 128
    %2752 = vxpose.xlu0.b32.cont [10/16] 0.0, 128
    %2753 = vxpose.xlu0.b32.cont [11/16] 0.0, 128
    %2754 = vxpose.xlu0.b32.cont [12/16] 0.0, 128
    %2755 = vxpose.xlu0.b32.cont [13/16] 0.0, 128
    %2756 = vxpose.xlu0.b32.cont [14/16] 0.0, 128
    %2757 = vxpose.xlu0.b32.cont [15/16] 0.0, 128
    %2758 = vxpose.xlu0.b32.end [16/16] 0.0, 128
    %v2759 = vpop.trf.xlu0
    %v2760 = vpop.trf.xlu0
    %v2761 = vpop.trf.xlu0
    %v2762 = vpop.trf.xlu0
    %v2763 = vpop.trf.xlu0
    %v2764 = vpop.trf.xlu0
    %v2765 = vpop.trf.xlu0
    %v2766 = vpop.trf.xlu0
    %v2767 = vpop.trf.xlu0
    %v2768 = vpop.trf.xlu0
    %v2769 = vpop.trf.xlu0
    %v2770 = vpop.trf.xlu0
    %v2771 = vpop.trf.xlu0
    %v2772 = vpop.trf.xlu0
    %v2773 = vpop.trf.xlu0
    %v2774 = vpop.trf.xlu0
    %2775 = vxpose.xlu0.b32.start [1/16] %v1468, 128
    %2776 = vxpose.xlu0.b32.cont [2/16] 0.0, 128
    %2777 = vxpose.xlu0.b32.cont [3/16] 0.0, 128
    %2778 = vxpose.xlu0.b32.cont [4/16] 0.0, 128
    %2779 = vxpose.xlu0.b32.cont [5/16] 0.0, 128
    %2780 = vxpose.xlu0.b32.cont [6/16] 0.0, 128
    %2781 = vxpose.xlu0.b32.cont [7/16] 0.0, 128
    %2782 = vxpose.xlu0.b32.cont [8/16] 0.0, 128
    %2783 = vxpose.xlu0.b32.cont [9/16] 0.0, 128
    %2784 = vxpose.xlu0.b32.cont [10/16] 0.0, 128
    %2785 = vxpose.xlu0.b32.cont [11/16] 0.0, 128
    %2786 = vxpose.xlu0.b32.cont [12/16] 0.0, 128
    %2787 = vxpose.xlu0.b32.cont [13/16] 0.0, 128
    %2788 = vxpose.xlu0.b32.cont [14/16] 0.0, 128
    %2789 = vxpose.xlu0.b32.cont [15/16] 0.0, 128
    %2790 = vxpose.xlu0.b32.end [16/16] 0.0, 128
    %v2791 = vpop.trf.xlu0
    %v2792 = vpop.trf.xlu0
    %v2793 = vpop.trf.xlu0
    %v2794 = vpop.trf.xlu0
    %v2795 = vpop.trf.xlu0
    %v2796 = vpop.trf.xlu0
    %v2797 = vpop.trf.xlu0
    %v2798 = vpop.trf.xlu0
    %v2799 = vpop.trf.xlu0
    %v2800 = vpop.trf.xlu0
    %v2801 = vpop.trf.xlu0
    %v2802 = vpop.trf.xlu0
    %v2803 = vpop.trf.xlu0
    %v2804 = vpop.trf.xlu0
    %v2805 = vpop.trf.xlu0
    %v2806 = vpop.trf.xlu0
    %2807 = vxpose.xlu0.b32.start [1/16] %v1486, 128
    %2808 = vxpose.xlu0.b32.cont [2/16] 0.0, 128
    %2809 = vxpose.xlu0.b32.cont [3/16] 0.0, 128
    %2810 = vxpose.xlu0.b32.cont [4/16] 0.0, 128
    %2811 = vxpose.xlu0.b32.cont [5/16] 0.0, 128
    %2812 = vxpose.xlu0.b32.cont [6/16] 0.0, 128
    %2813 = vxpose.xlu0.b32.cont [7/16] 0.0, 128
    %2814 = vxpose.xlu0.b32.cont [8/16] 0.0, 128
    %2815 = vxpose.xlu0.b32.cont [9/16] 0.0, 128
    %2816 = vxpose.xlu0.b32.cont [10/16] 0.0, 128
    %2817 = vxpose.xlu0.b32.cont [11/16] 0.0, 128
    %2818 = vxpose.xlu0.b32.cont [12/16] 0.0, 128
    %2819 = vxpose.xlu0.b32.cont [13/16] 0.0, 128
    %2820 = vxpose.xlu0.b32.cont [14/16] 0.0, 128
    %2821 = vxpose.xlu0.b32.cont [15/16] 0.0, 128
    %2822 = vxpose.xlu0.b32.end [16/16] 0.0, 128
    %v2823 = vpop.trf.xlu0
    %v2824 = vpop.trf.xlu0
    %v2825 = vpop.trf.xlu0
    %v2826 = vpop.trf.xlu0
    %v2827 = vpop.trf.xlu0
    %v2828 = vpop.trf.xlu0
    %v2829 = vpop.trf.xlu0
    %v2830 = vpop.trf.xlu0
    %v2831 = vpop.trf.xlu0
    %v2832 = vpop.trf.xlu0
    %v2833 = vpop.trf.xlu0
    %v2834 = vpop.trf.xlu0
    %v2835 = vpop.trf.xlu0
    %v2836 = vpop.trf.xlu0
    %v2837 = vpop.trf.xlu0
    %v2838 = vpop.trf.xlu0
    %2839 = vxpose.xlu0.b32.start [1/16] %v1477, 128
    %2840 = vxpose.xlu0.b32.cont [2/16] 0.0, 128
    %2841 = vxpose.xlu0.b32.cont [3/16] 0.0, 128
    %2842 = vxpose.xlu0.b32.cont [4/16] 0.0, 128
    %2843 = vxpose.xlu0.b32.cont [5/16] 0.0, 128
    %2844 = vxpose.xlu0.b32.cont [6/16] 0.0, 128
    %2845 = vxpose.xlu0.b32.cont [7/16] 0.0, 128
    %2846 = vxpose.xlu0.b32.cont [8/16] 0.0, 128
    %2847 = vxpose.xlu0.b32.cont [9/16] 0.0, 128
    %2848 = vxpose.xlu0.b32.cont [10/16] 0.0, 128
    %2849 = vxpose.xlu0.b32.cont [11/16] 0.0, 128
    %2850 = vxpose.xlu0.b32.cont [12/16] 0.0, 128
    %2851 = vxpose.xlu0.b32.cont [13/16] 0.0, 128
    %2852 = vxpose.xlu0.b32.cont [14/16] 0.0, 128
    %2853 = vxpose.xlu0.b32.cont [15/16] 0.0, 128
    %2854 = vxpose.xlu0.b32.end [16/16] 0.0, 128
    %v2855 = vpop.trf.xlu0
    %v2856 = vpop.trf.xlu0
    %v2857 = vpop.trf.xlu0
    %v2858 = vpop.trf.xlu0
    %v2859 = vpop.trf.xlu0
    %v2860 = vpop.trf.xlu0
    %v2861 = vpop.trf.xlu0
    %v2862 = vpop.trf.xlu0
    %v2863 = vpop.trf.xlu0
    %v2864 = vpop.trf.xlu0
    %v2865 = vpop.trf.xlu0
    %v2866 = vpop.trf.xlu0
    %v2867 = vpop.trf.xlu0
    %v2868 = vpop.trf.xlu0
    %v2869 = vpop.trf.xlu0
    %v2870 = vpop.trf.xlu0
    %2871 = vxpose.xlu0.b32.start [1/16] %v1487, 128
    %2872 = vxpose.xlu0.b32.cont [2/16] 0.0, 128
    %2873 = vxpose.xlu0.b32.cont [3/16] 0.0, 128
    %2874 = vxpose.xlu0.b32.cont [4/16] 0.0, 128
    %2875 = vxpose.xlu0.b32.cont [5/16] 0.0, 128
    %2876 = vxpose.xlu0.b32.cont [6/16] 0.0, 128
    %2877 = vxpose.xlu0.b32.cont [7/16] 0.0, 128
    %2878 = vxpose.xlu0.b32.cont [8/16] 0.0, 128
    %2879 = vxpose.xlu0.b32.cont [9/16] 0.0, 128
    %2880 = vxpose.xlu0.b32.cont [10/16] 0.0, 128
    %2881 = vxpose.xlu0.b32.cont [11/16] 0.0, 128
    %2882 = vxpose.xlu0.b32.cont [12/16] 0.0, 128
    %2883 = vxpose.xlu0.b32.cont [13/16] 0.0, 128
    %2884 = vxpose.xlu0.b32.cont [14/16] 0.0, 128
    %2885 = vxpose.xlu0.b32.cont [15/16] 0.0, 128
    %2886 = vxpose.xlu0.b32.end [16/16] 0.0, 128
    %v2887 = vpop.trf.xlu0
    %v2888 = vpop.trf.xlu0
    %v2889 = vpop.trf.xlu0
    %v2890 = vpop.trf.xlu0
    %v2891 = vpop.trf.xlu0
    %v2892 = vpop.trf.xlu0
    %v2893 = vpop.trf.xlu0
    %v2894 = vpop.trf.xlu0
    %v2895 = vpop.trf.xlu0
    %v2896 = vpop.trf.xlu0
    %v2897 = vpop.trf.xlu0
    %v2898 = vpop.trf.xlu0
    %v2899 = vpop.trf.xlu0
    %v2900 = vpop.trf.xlu0
    %v2901 = vpop.trf.xlu0
    %v2902 = vpop.trf.xlu0
    %2903 = vxpose.xlu0.b32.start [1/16] %v1484, 128
    %2904 = vxpose.xlu0.b32.cont [2/16] 0.0, 128
    %2905 = vxpose.xlu0.b32.cont [3/16] 0.0, 128
    %2906 = vxpose.xlu0.b32.cont [4/16] 0.0, 128
    %2907 = vxpose.xlu0.b32.cont [5/16] 0.0, 128
    %2908 = vxpose.xlu0.b32.cont [6/16] 0.0, 128
    %2909 = vxpose.xlu0.b32.cont [7/16] 0.0, 128
    %2910 = vxpose.xlu0.b32.cont [8/16] 0.0, 128
    %2911 = vxpose.xlu0.b32.cont [9/16] 0.0, 128
    %2912 = vxpose.xlu0.b32.cont [10/16] 0.0, 128
    %2913 = vxpose.xlu0.b32.cont [11/16] 0.0, 128
    %2914 = vxpose.xlu0.b32.cont [12/16] 0.0, 128
    %2915 = vxpose.xlu0.b32.cont [13/16] 0.0, 128
    %2916 = vxpose.xlu0.b32.cont [14/16] 0.0, 128
    %2917 = vxpose.xlu0.b32.cont [15/16] 0.0, 128
    %2918 = vxpose.xlu0.b32.end [16/16] 0.0, 128
    %v2919 = vpop.trf.xlu0
    %v2920 = vpop.trf.xlu0
    %v2921 = vpop.trf.xlu0
    %v2922 = vpop.trf.xlu0
    %v2923 = vpop.trf.xlu0
    %v2924 = vpop.trf.xlu0
    %v2925 = vpop.trf.xlu0
    %v2926 = vpop.trf.xlu0
    %v2927 = vpop.trf.xlu0
    %v2928 = vpop.trf.xlu0
    %v2929 = vpop.trf.xlu0
    %v2930 = vpop.trf.xlu0
    %v2931 = vpop.trf.xlu0
    %v2932 = vpop.trf.xlu0
    %v2933 = vpop.trf.xlu0
    %v2934 = vpop.trf.xlu0
    %2935 = vxpose.xlu0.b32.start [1/16] %v1488, 128
    %2936 = vxpose.xlu0.b32.cont [2/16] 0.0, 128
    %2937 = vxpose.xlu0.b32.cont [3/16] 0.0, 128
    %2938 = vxpose.xlu0.b32.cont [4/16] 0.0, 128
    %2939 = vxpose.xlu0.b32.cont [5/16] 0.0, 128
    %2940 = vxpose.xlu0.b32.cont [6/16] 0.0, 128
    %2941 = vxpose.xlu0.b32.cont [7/16] 0.0, 128
    %2942 = vxpose.xlu0.b32.cont [8/16] 0.0, 128
    %2943 = vxpose.xlu0.b32.cont [9/16] 0.0, 128
    %2944 = vxpose.xlu0.b32.cont [10/16] 0.0, 128
    %2945 = vxpose.xlu0.b32.cont [11/16] 0.0, 128
    %2946 = vxpose.xlu0.b32.cont [12/16] 0.0, 128
    %2947 = vxpose.xlu0.b32.cont [13/16] 0.0, 128
    %2948 = vxpose.xlu0.b32.cont [14/16] 0.0, 128
    %2949 = vxpose.xlu0.b32.cont [15/16] 0.0, 128
    %2950 = vxpose.xlu0.b32.end [16/16] 0.0, 128
    %v2951 = vpop.trf.xlu0
    %v2952 = vpop.trf.xlu0
    %v2953 = vpop.trf.xlu0
    %v2954 = vpop.trf.xlu0
    %v2955 = vpop.trf.xlu0
    %v2956 = vpop.trf.xlu0
    %v2957 = vpop.trf.xlu0
    %v2958 = vpop.trf.xlu0
    %v2959 = vpop.trf.xlu0
    %v2960 = vpop.trf.xlu0
    %v2961 = vpop.trf.xlu0
    %v2962 = vpop.trf.xlu0
    %v2963 = vpop.trf.xlu0
    %v2964 = vpop.trf.xlu0
    %v2965 = vpop.trf.xlu0
    %v2966 = vpop.trf.xlu0
    %2967 = vxpose.xlu0.b32.start [1/16] %v1527, 128
    %2968 = vxpose.xlu0.b32.cont [2/16] 0.0, 128
    %2969 = vxpose.xlu0.b32.cont [3/16] 0.0, 128
    %2970 = vxpose.xlu0.b32.cont [4/16] 0.0, 128
    %2971 = vxpose.xlu0.b32.cont [5/16] 0.0, 128
    %2972 = vxpose.xlu0.b32.cont [6/16] 0.0, 128
    %2973 = vxpose.xlu0.b32.cont [7/16] 0.0, 128
    %2974 = vxpose.xlu0.b32.cont [8/16] 0.0, 128
    %2975 = vxpose.xlu0.b32.cont [9/16] 0.0, 128
    %2976 = vxpose.xlu0.b32.cont [10/16] 0.0, 128
    %2977 = vxpose.xlu0.b32.cont [11/16] 0.0, 128
    %2978 = vxpose.xlu0.b32.cont [12/16] 0.0, 128
    %2979 = vxpose.xlu0.b32.cont [13/16] 0.0, 128
    %2980 = vxpose.xlu0.b32.cont [14/16] 0.0, 128
    %2981 = vxpose.xlu0.b32.cont [15/16] 0.0, 128
    %2982 = vxpose.xlu0.b32.end [16/16] 0.0, 128
    %v2983 = vpop.trf.xlu0
    %v2984 = vpop.trf.xlu0
    %v2985 = vpop.trf.xlu0
    %v2986 = vpop.trf.xlu0
    %v2987 = vpop.trf.xlu0
    %v2988 = vpop.trf.xlu0
    %v2989 = vpop.trf.xlu0
    %v2990 = vpop.trf.xlu0
    %v2991 = vpop.trf.xlu0
    %v2992 = vpop.trf.xlu0
    %v2993 = vpop.trf.xlu0
    %v2994 = vpop.trf.xlu0
    %v2995 = vpop.trf.xlu0
    %v2996 = vpop.trf.xlu0
    %v2997 = vpop.trf.xlu0
    %v2998 = vpop.trf.xlu0
    %2999 = vxpose.xlu0.b32.start [1/16] %v1551, 128
    %3000 = vxpose.xlu0.b32.cont [2/16] 0.0, 128
    %3001 = vxpose.xlu0.b32.cont [3/16] 0.0, 128
    %3002 = vxpose.xlu0.b32.cont [4/16] 0.0, 128
    %3003 = vxpose.xlu0.b32.cont [5/16] 0.0, 128
    %3004 = vxpose.xlu0.b32.cont [6/16] 0.0, 128
    %3005 = vxpose.xlu0.b32.cont [7/16] 0.0, 128
    %3006 = vxpose.xlu0.b32.cont [8/16] 0.0, 128
    %3007 = vxpose.xlu0.b32.cont [9/16] 0.0, 128
    %3008 = vxpose.xlu0.b32.cont [10/16] 0.0, 128
    %3009 = vxpose.xlu0.b32.cont [11/16] 0.0, 128
    %3010 = vxpose.xlu0.b32.cont [12/16] 0.0, 128
    %3011 = vxpose.xlu0.b32.cont [13/16] 0.0, 128
    %3012 = vxpose.xlu0.b32.cont [14/16] 0.0, 128
    %3013 = vxpose.xlu0.b32.cont [15/16] 0.0, 128
    %3014 = vxpose.xlu0.b32.end [16/16] 0.0, 128
    %v3015 = vpop.trf.xlu0
    %v3016 = vpop.trf.xlu0
    %v3017 = vpop.trf.xlu0
    %v3018 = vpop.trf.xlu0
    %v3019 = vpop.trf.xlu0
    %v3020 = vpop.trf.xlu0
    %v3021 = vpop.trf.xlu0
    %v3022 = vpop.trf.xlu0
    %v3023 = vpop.trf.xlu0
    %v3024 = vpop.trf.xlu0
    %v3025 = vpop.trf.xlu0
    %v3026 = vpop.trf.xlu0
    %v3027 = vpop.trf.xlu0
    %v3028 = vpop.trf.xlu0
    %v3029 = vpop.trf.xlu0
    %v3030 = vpop.trf.xlu0
    %3031 = vxpose.xlu0.b32.start [1/16] %v1534, 128
    %3032 = vxpose.xlu0.b32.cont [2/16] 0.0, 128
    %3033 = vxpose.xlu0.b32.cont [3/16] 0.0, 128
    %3034 = vxpose.xlu0.b32.cont [4/16] 0.0, 128
    %3035 = vxpose.xlu0.b32.cont [5/16] 0.0, 128
    %3036 = vxpose.xlu0.b32.cont [6/16] 0.0, 128
    %3037 = vxpose.xlu0.b32.cont [7/16] 0.0, 128
    %3038 = vxpose.xlu0.b32.cont [8/16] 0.0, 128
    %3039 = vxpose.xlu0.b32.cont [9/16] 0.0, 128
    %3040 = vxpose.xlu0.b32.cont [10/16] 0.0, 128
    %3041 = vxpose.xlu0.b32.cont [11/16] 0.0, 128
    %3042 = vxpose.xlu0.b32.cont [12/16] 0.0, 128
    %3043 = vxpose.xlu0.b32.cont [13/16] 0.0, 128
    %3044 = vxpose.xlu0.b32.cont [14/16] 0.0, 128
    %3045 = vxpose.xlu0.b32.cont [15/16] 0.0, 128
    %3046 = vxpose.xlu0.b32.end [16/16] 0.0, 128
    %v3047 = vpop.trf.xlu0
    %v3048 = vpop.trf.xlu0
    %v3049 = vpop.trf.xlu0
    %v3050 = vpop.trf.xlu0
    %v3051 = vpop.trf.xlu0
    %v3052 = vpop.trf.xlu0
    %v3053 = vpop.trf.xlu0
    %v3054 = vpop.trf.xlu0
    %v3055 = vpop.trf.xlu0
    %v3056 = vpop.trf.xlu0
    %v3057 = vpop.trf.xlu0
    %v3058 = vpop.trf.xlu0
    %v3059 = vpop.trf.xlu0
    %v3060 = vpop.trf.xlu0
    %v3061 = vpop.trf.xlu0
    %v3062 = vpop.trf.xlu0
    %3063 = vxpose.xlu0.b32.start [1/16] %v1552, 128
    %3064 = vxpose.xlu0.b32.cont [2/16] 0.0, 128
    %3065 = vxpose.xlu0.b32.cont [3/16] 0.0, 128
    %3066 = vxpose.xlu0.b32.cont [4/16] 0.0, 128
    %3067 = vxpose.xlu0.b32.cont [5/16] 0.0, 128
    %3068 = vxpose.xlu0.b32.cont [6/16] 0.0, 128
    %3069 = vxpose.xlu0.b32.cont [7/16] 0.0, 128
    %3070 = vxpose.xlu0.b32.cont [8/16] 0.0, 128
    %3071 = vxpose.xlu0.b32.cont [9/16] 0.0, 128
    %3072 = vxpose.xlu0.b32.cont [10/16] 0.0, 128
    %3073 = vxpose.xlu0.b32.cont [11/16] 0.0, 128
    %3074 = vxpose.xlu0.b32.cont [12/16] 0.0, 128
    %3075 = vxpose.xlu0.b32.cont [13/16] 0.0, 128
    %3076 = vxpose.xlu0.b32.cont [14/16] 0.0, 128
    %3077 = vxpose.xlu0.b32.cont [15/16] 0.0, 128
    %3078 = vxpose.xlu0.b32.end [16/16] 0.0, 128
    %v3079 = vpop.trf.xlu0
    %v3080 = vpop.trf.xlu0
    %v3081 = vpop.trf.xlu0
    %v3082 = vpop.trf.xlu0
    %v3083 = vpop.trf.xlu0
    %v3084 = vpop.trf.xlu0
    %v3085 = vpop.trf.xlu0
    %v3086 = vpop.trf.xlu0
    %v3087 = vpop.trf.xlu0
    %v3088 = vpop.trf.xlu0
    %v3089 = vpop.trf.xlu0
    %v3090 = vpop.trf.xlu0
    %v3091 = vpop.trf.xlu0
    %v3092 = vpop.trf.xlu0
    %v3093 = vpop.trf.xlu0
    %v3094 = vpop.trf.xlu0
    %3095 = vxpose.xlu0.b32.start [1/16] %v1543, 128
    %3096 = vxpose.xlu0.b32.cont [2/16] 0.0, 128
    %3097 = vxpose.xlu0.b32.cont [3/16] 0.0, 128
    %3098 = vxpose.xlu0.b32.cont [4/16] 0.0, 128
    %3099 = vxpose.xlu0.b32.cont [5/16] 0.0, 128
    %3100 = vxpose.xlu0.b32.cont [6/16] 0.0, 128
    %3101 = vxpose.xlu0.b32.cont [7/16] 0.0, 128
    %3102 = vxpose.xlu0.b32.cont [8/16] 0.0, 128
    %3103 = vxpose.xlu0.b32.cont [9/16] 0.0, 128
    %3104 = vxpose.xlu0.b32.cont [10/16] 0.0, 128
    %3105 = vxpose.xlu0.b32.cont [11/16] 0.0, 128
    %3106 = vxpose.xlu0.b32.cont [12/16] 0.0, 128
    %3107 = vxpose.xlu0.b32.cont [13/16] 0.0, 128
    %3108 = vxpose.xlu0.b32.cont [14/16] 0.0, 128
    %3109 = vxpose.xlu0.b32.cont [15/16] 0.0, 128
    %3110 = vxpose.xlu0.b32.end [16/16] 0.0, 128
    %v3111 = vpop.trf.xlu0
    %v3112 = vpop.trf.xlu0
    %v3113 = vpop.trf.xlu0
    %v3114 = vpop.trf.xlu0
    %v3115 = vpop.trf.xlu0
    %v3116 = vpop.trf.xlu0
    %v3117 = vpop.trf.xlu0
    %v3118 = vpop.trf.xlu0
    %v3119 = vpop.trf.xlu0
    %v3120 = vpop.trf.xlu0
    %v3121 = vpop.trf.xlu0
    %v3122 = vpop.trf.xlu0
    %v3123 = vpop.trf.xlu0
    %v3124 = vpop.trf.xlu0
    %v3125 = vpop.trf.xlu0
    %v3126 = vpop.trf.xlu0
    %3127 = vxpose.xlu0.b32.start [1/16] %v1553, 128
    %3128 = vxpose.xlu0.b32.cont [2/16] 0.0, 128
    %3129 = vxpose.xlu0.b32.cont [3/16] 0.0, 128
    %3130 = vxpose.xlu0.b32.cont [4/16] 0.0, 128
    %3131 = vxpose.xlu0.b32.cont [5/16] 0.0, 128
    %3132 = vxpose.xlu0.b32.cont [6/16] 0.0, 128
    %3133 = vxpose.xlu0.b32.cont [7/16] 0.0, 128
    %3134 = vxpose.xlu0.b32.cont [8/16] 0.0, 128
    %3135 = vxpose.xlu0.b32.cont [9/16] 0.0, 128
    %3136 = vxpose.xlu0.b32.cont [10/16] 0.0, 128
    %3137 = vxpose.xlu0.b32.cont [11/16] 0.0, 128
    %3138 = vxpose.xlu0.b32.cont [12/16] 0.0, 128
    %3139 = vxpose.xlu0.b32.cont [13/16] 0.0, 128
    %3140 = vxpose.xlu0.b32.cont [14/16] 0.0, 128
    %3141 = vxpose.xlu0.b32.cont [15/16] 0.0, 128
    %3142 = vxpose.xlu0.b32.end [16/16] 0.0, 128
    %v3143 = vpop.trf.xlu0
    %v3144 = vpop.trf.xlu0
    %v3145 = vpop.trf.xlu0
    %v3146 = vpop.trf.xlu0
    %v3147 = vpop.trf.xlu0
    %v3148 = vpop.trf.xlu0
    %v3149 = vpop.trf.xlu0
    %v3150 = vpop.trf.xlu0
    %v3151 = vpop.trf.xlu0
    %v3152 = vpop.trf.xlu0
    %v3153 = vpop.trf.xlu0
    %v3154 = vpop.trf.xlu0
    %v3155 = vpop.trf.xlu0
    %v3156 = vpop.trf.xlu0
    %v3157 = vpop.trf.xlu0
    %v3158 = vpop.trf.xlu0
    %3159 = vxpose.xlu0.b32.start [1/16] %v1550, 128
    %3160 = vxpose.xlu0.b32.cont [2/16] 0.0, 128
    %3161 = vxpose.xlu0.b32.cont [3/16] 0.0, 128
    %3162 = vxpose.xlu0.b32.cont [4/16] 0.0, 128
    %3163 = vxpose.xlu0.b32.cont [5/16] 0.0, 128
    %3164 = vxpose.xlu0.b32.cont [6/16] 0.0, 128
    %3165 = vxpose.xlu0.b32.cont [7/16] 0.0, 128
    %3166 = vxpose.xlu0.b32.cont [8/16] 0.0, 128
    %3167 = vxpose.xlu0.b32.cont [9/16] 0.0, 128
    %3168 = vxpose.xlu0.b32.cont [10/16] 0.0, 128
    %3169 = vxpose.xlu0.b32.cont [11/16] 0.0, 128
    %3170 = vxpose.xlu0.b32.cont [12/16] 0.0, 128
    %3171 = vxpose.xlu0.b32.cont [13/16] 0.0, 128
    %3172 = vxpose.xlu0.b32.cont [14/16] 0.0, 128
    %3173 = vxpose.xlu0.b32.cont [15/16] 0.0, 128
    %3174 = vxpose.xlu0.b32.end [16/16] 0.0, 128
    %v3175 = vpop.trf.xlu0
    %v3176 = vpop.trf.xlu0
    %v3177 = vpop.trf.xlu0
    %v3178 = vpop.trf.xlu0
    %v3179 = vpop.trf.xlu0
    %v3180 = vpop.trf.xlu0
    %v3181 = vpop.trf.xlu0
    %v3182 = vpop.trf.xlu0
    %v3183 = vpop.trf.xlu0
    %v3184 = vpop.trf.xlu0
    %v3185 = vpop.trf.xlu0
    %v3186 = vpop.trf.xlu0
    %v3187 = vpop.trf.xlu0
    %v3188 = vpop.trf.xlu0
    %v3189 = vpop.trf.xlu0
    %v3190 = vpop.trf.xlu0
    %3191 = vxpose.xlu0.b32.start [1/16] %v1554, 128
    %3192 = vxpose.xlu0.b32.cont [2/16] 0.0, 128
    %3193 = vxpose.xlu0.b32.cont [3/16] 0.0, 128
    %3194 = vxpose.xlu0.b32.cont [4/16] 0.0, 128
    %3195 = vxpose.xlu0.b32.cont [5/16] 0.0, 128
    %3196 = vxpose.xlu0.b32.cont [6/16] 0.0, 128
    %3197 = vxpose.xlu0.b32.cont [7/16] 0.0, 128
    %3198 = vxpose.xlu0.b32.cont [8/16] 0.0, 128
    %3199 = vxpose.xlu0.b32.cont [9/16] 0.0, 128
    %3200 = vxpose.xlu0.b32.cont [10/16] 0.0, 128
    %3201 = vxpose.xlu0.b32.cont [11/16] 0.0, 128
    %3202 = vxpose.xlu0.b32.cont [12/16] 0.0, 128
    %3203 = vxpose.xlu0.b32.cont [13/16] 0.0, 128
    %3204 = vxpose.xlu0.b32.cont [14/16] 0.0, 128
    %3205 = vxpose.xlu0.b32.cont [15/16] 0.0, 128
    %3206 = vxpose.xlu0.b32.end [16/16] 0.0, 128
    %v3207 = vpop.trf.xlu0
    %v3208 = vpop.trf.xlu0
    %v3209 = vpop.trf.xlu0
    %v3210 = vpop.trf.xlu0
    %v3211 = vpop.trf.xlu0
    %v3212 = vpop.trf.xlu0
    %v3213 = vpop.trf.xlu0
    %v3214 = vpop.trf.xlu0
    %v3215 = vpop.trf.xlu0
    %v3216 = vpop.trf.xlu0
    %v3217 = vpop.trf.xlu0
    %v3218 = vpop.trf.xlu0
    %v3219 = vpop.trf.xlu0
    %v3220 = vpop.trf.xlu0
    %v3221 = vpop.trf.xlu0
    %v3222 = vpop.trf.xlu0
    %3223 = vxpose.xlu0.b32.start [1/16] %v1593, 128
    %3224 = vxpose.xlu0.b32.cont [2/16] 0.0, 128
    %3225 = vxpose.xlu0.b32.cont [3/16] 0.0, 128
    %3226 = vxpose.xlu0.b32.cont [4/16] 0.0, 128
    %3227 = vxpose.xlu0.b32.cont [5/16] 0.0, 128
    %3228 = vxpose.xlu0.b32.cont [6/16] 0.0, 128
    %3229 = vxpose.xlu0.b32.cont [7/16] 0.0, 128
    %3230 = vxpose.xlu0.b32.cont [8/16] 0.0, 128
    %3231 = vxpose.xlu0.b32.cont [9/16] 0.0, 128
    %3232 = vxpose.xlu0.b32.cont [10/16] 0.0, 128
    %3233 = vxpose.xlu0.b32.cont [11/16] 0.0, 128
    %3234 = vxpose.xlu0.b32.cont [12/16] 0.0, 128
    %3235 = vxpose.xlu0.b32.cont [13/16] 0.0, 128
    %3236 = vxpose.xlu0.b32.cont [14/16] 0.0, 128
    %3237 = vxpose.xlu0.b32.cont [15/16] 0.0, 128
    %3238 = vxpose.xlu0.b32.end [16/16] 0.0, 128
    %v3239 = vpop.trf.xlu0
    %v3240 = vpop.trf.xlu0
    %v3241 = vpop.trf.xlu0
    %v3242 = vpop.trf.xlu0
    %v3243 = vpop.trf.xlu0
    %v3244 = vpop.trf.xlu0
    %v3245 = vpop.trf.xlu0
    %v3246 = vpop.trf.xlu0
    %v3247 = vpop.trf.xlu0
    %v3248 = vpop.trf.xlu0
    %v3249 = vpop.trf.xlu0
    %v3250 = vpop.trf.xlu0
    %v3251 = vpop.trf.xlu0
    %v3252 = vpop.trf.xlu0
    %v3253 = vpop.trf.xlu0
    %v3254 = vpop.trf.xlu0
    %3255 = vxpose.xlu0.b32.start [1/16] %v1617, 128
    %3256 = vxpose.xlu0.b32.cont [2/16] 0.0, 128
    %3257 = vxpose.xlu0.b32.cont [3/16] 0.0, 128
    %3258 = vxpose.xlu0.b32.cont [4/16] 0.0, 128
    %3259 = vxpose.xlu0.b32.cont [5/16] 0.0, 128
    %3260 = vxpose.xlu0.b32.cont [6/16] 0.0, 128
    %3261 = vxpose.xlu0.b32.cont [7/16] 0.0, 128
    %3262 = vxpose.xlu0.b32.cont [8/16] 0.0, 128
    %3263 = vxpose.xlu0.b32.cont [9/16] 0.0, 128
    %3264 = vxpose.xlu0.b32.cont [10/16] 0.0, 128
    %3265 = vxpose.xlu0.b32.cont [11/16] 0.0, 128
    %3266 = vxpose.xlu0.b32.cont [12/16] 0.0, 128
    %3267 = vxpose.xlu0.b32.cont [13/16] 0.0, 128
    %3268 = vxpose.xlu0.b32.cont [14/16] 0.0, 128
    %3269 = vxpose.xlu0.b32.cont [15/16] 0.0, 128
    %3270 = vxpose.xlu0.b32.end [16/16] 0.0, 128
    %v3271 = vpop.trf.xlu0
    %v3272 = vpop.trf.xlu0
    %v3273 = vpop.trf.xlu0
    %v3274 = vpop.trf.xlu0
    %v3275 = vpop.trf.xlu0
    %v3276 = vpop.trf.xlu0
    %v3277 = vpop.trf.xlu0
    %v3278 = vpop.trf.xlu0
    %v3279 = vpop.trf.xlu0
    %v3280 = vpop.trf.xlu0
    %v3281 = vpop.trf.xlu0
    %v3282 = vpop.trf.xlu0
    %v3283 = vpop.trf.xlu0
    %v3284 = vpop.trf.xlu0
    %v3285 = vpop.trf.xlu0
    %v3286 = vpop.trf.xlu0
    %3287 = vxpose.xlu0.b32.start [1/16] %v1600, 128
    %3288 = vxpose.xlu0.b32.cont [2/16] 0.0, 128
    %3289 = vxpose.xlu0.b32.cont [3/16] 0.0, 128
    %3290 = vxpose.xlu0.b32.cont [4/16] 0.0, 128
    %3291 = vxpose.xlu0.b32.cont [5/16] 0.0, 128
    %3292 = vxpose.xlu0.b32.cont [6/16] 0.0, 128
    %3293 = vxpose.xlu0.b32.cont [7/16] 0.0, 128
    %3294 = vxpose.xlu0.b32.cont [8/16] 0.0, 128
    %3295 = vxpose.xlu0.b32.cont [9/16] 0.0, 128
    %3296 = vxpose.xlu0.b32.cont [10/16] 0.0, 128
    %3297 = vxpose.xlu0.b32.cont [11/16] 0.0, 128
    %3298 = vxpose.xlu0.b32.cont [12/16] 0.0, 128
    %3299 = vxpose.xlu0.b32.cont [13/16] 0.0, 128
    %3300 = vxpose.xlu0.b32.cont [14/16] 0.0, 128
    %3301 = vxpose.xlu0.b32.cont [15/16] 0.0, 128
    %3302 = vxpose.xlu0.b32.end [16/16] 0.0, 128
    %v3303 = vpop.trf.xlu0
    %v3304 = vpop.trf.xlu0
    %v3305 = vpop.trf.xlu0
    %v3306 = vpop.trf.xlu0
    %v3307 = vpop.trf.xlu0
    %v3308 = vpop.trf.xlu0
    %v3309 = vpop.trf.xlu0
    %v3310 = vpop.trf.xlu0
    %v3311 = vpop.trf.xlu0
    %v3312 = vpop.trf.xlu0
    %v3313 = vpop.trf.xlu0
    %v3314 = vpop.trf.xlu0
    %v3315 = vpop.trf.xlu0
    %v3316 = vpop.trf.xlu0
    %v3317 = vpop.trf.xlu0
    %v3318 = vpop.trf.xlu0
    %3319 = vxpose.xlu0.b32.start [1/16] %v1618, 128
    %3320 = vxpose.xlu0.b32.cont [2/16] 0.0, 128
    %3321 = vxpose.xlu0.b32.cont [3/16] 0.0, 128
    %3322 = vxpose.xlu0.b32.cont [4/16] 0.0, 128
    %3323 = vxpose.xlu0.b32.cont [5/16] 0.0, 128
    %3324 = vxpose.xlu0.b32.cont [6/16] 0.0, 128
    %3325 = vxpose.xlu0.b32.cont [7/16] 0.0, 128
    %3326 = vxpose.xlu0.b32.cont [8/16] 0.0, 128
    %3327 = vxpose.xlu0.b32.cont [9/16] 0.0, 128
    %3328 = vxpose.xlu0.b32.cont [10/16] 0.0, 128
    %3329 = vxpose.xlu0.b32.cont [11/16] 0.0, 128
    %3330 = vxpose.xlu0.b32.cont [12/16] 0.0, 128
    %3331 = vxpose.xlu0.b32.cont [13/16] 0.0, 128
    %3332 = vxpose.xlu0.b32.cont [14/16] 0.0, 128
    %3333 = vxpose.xlu0.b32.cont [15/16] 0.0, 128
    %3334 = vxpose.xlu0.b32.end [16/16] 0.0, 128
    %v3335 = vpop.trf.xlu0
    %v3336 = vpop.trf.xlu0
    %v3337 = vpop.trf.xlu0
    %v3338 = vpop.trf.xlu0
    %v3339 = vpop.trf.xlu0
    %v3340 = vpop.trf.xlu0
    %v3341 = vpop.trf.xlu0
    %v3342 = vpop.trf.xlu0
    %v3343 = vpop.trf.xlu0
    %v3344 = vpop.trf.xlu0
    %v3345 = vpop.trf.xlu0
    %v3346 = vpop.trf.xlu0
    %v3347 = vpop.trf.xlu0
    %v3348 = vpop.trf.xlu0
    %v3349 = vpop.trf.xlu0
    %v3350 = vpop.trf.xlu0
    %3351 = vxpose.xlu0.b32.start [1/16] %v1609, 128
    %3352 = vxpose.xlu0.b32.cont [2/16] 0.0, 128
    %3353 = vxpose.xlu0.b32.cont [3/16] 0.0, 128
    %3354 = vxpose.xlu0.b32.cont [4/16] 0.0, 128
    %3355 = vxpose.xlu0.b32.cont [5/16] 0.0, 128
    %3356 = vxpose.xlu0.b32.cont [6/16] 0.0, 128
    %3357 = vxpose.xlu0.b32.cont [7/16] 0.0, 128
    %3358 = vxpose.xlu0.b32.cont [8/16] 0.0, 128
    %3359 = vxpose.xlu0.b32.cont [9/16] 0.0, 128
    %3360 = vxpose.xlu0.b32.cont [10/16] 0.0, 128
    %3361 = vxpose.xlu0.b32.cont [11/16] 0.0, 128
    %3362 = vxpose.xlu0.b32.cont [12/16] 0.0, 128
    %3363 = vxpose.xlu0.b32.cont [13/16] 0.0, 128
    %3364 = vxpose.xlu0.b32.cont [14/16] 0.0, 128
    %3365 = vxpose.xlu0.b32.cont [15/16] 0.0, 128
    %3366 = vxpose.xlu0.b32.end [16/16] 0.0, 128
    %v3367 = vpop.trf.xlu0
    %v3368 = vpop.trf.xlu0
    %v3369 = vpop.trf.xlu0
    %v3370 = vpop.trf.xlu0
    %v3371 = vpop.trf.xlu0
    %v3372 = vpop.trf.xlu0
    %v3373 = vpop.trf.xlu0
    %v3374 = vpop.trf.xlu0
    %v3375 = vpop.trf.xlu0
    %v3376 = vpop.trf.xlu0
    %v3377 = vpop.trf.xlu0
    %v3378 = vpop.trf.xlu0
    %v3379 = vpop.trf.xlu0
    %v3380 = vpop.trf.xlu0
    %v3381 = vpop.trf.xlu0
    %v3382 = vpop.trf.xlu0
    %3383 = vxpose.xlu0.b32.start [1/16] %v1619, 128
    %3384 = vxpose.xlu0.b32.cont [2/16] 0.0, 128
    %3385 = vxpose.xlu0.b32.cont [3/16] 0.0, 128
    %3386 = vxpose.xlu0.b32.cont [4/16] 0.0, 128
    %3387 = vxpose.xlu0.b32.cont [5/16] 0.0, 128
    %3388 = vxpose.xlu0.b32.cont [6/16] 0.0, 128
    %3389 = vxpose.xlu0.b32.cont [7/16] 0.0, 128
    %3390 = vxpose.xlu0.b32.cont [8/16] 0.0, 128
    %3391 = vxpose.xlu0.b32.cont [9/16] 0.0, 128
    %3392 = vxpose.xlu0.b32.cont [10/16] 0.0, 128
    %3393 = vxpose.xlu0.b32.cont [11/16] 0.0, 128
    %3394 = vxpose.xlu0.b32.cont [12/16] 0.0, 128
    %3395 = vxpose.xlu0.b32.cont [13/16] 0.0, 128
    %3396 = vxpose.xlu0.b32.cont [14/16] 0.0, 128
    %3397 = vxpose.xlu0.b32.cont [15/16] 0.0, 128
    %3398 = vxpose.xlu0.b32.end [16/16] 0.0, 128
    %v3399 = vpop.trf.xlu0
    %v3400 = vpop.trf.xlu0
    %v3401 = vpop.trf.xlu0
    %v3402 = vpop.trf.xlu0
    %v3403 = vpop.trf.xlu0
    %v3404 = vpop.trf.xlu0
    %v3405 = vpop.trf.xlu0
    %v3406 = vpop.trf.xlu0
    %v3407 = vpop.trf.xlu0
    %v3408 = vpop.trf.xlu0
    %v3409 = vpop.trf.xlu0
    %v3410 = vpop.trf.xlu0
    %v3411 = vpop.trf.xlu0
    %v3412 = vpop.trf.xlu0
    %v3413 = vpop.trf.xlu0
    %v3414 = vpop.trf.xlu0
    %3415 = vxpose.xlu0.b32.start [1/16] %v1616, 128
    %3416 = vxpose.xlu0.b32.cont [2/16] 0.0, 128
    %3417 = vxpose.xlu0.b32.cont [3/16] 0.0, 128
    %3418 = vxpose.xlu0.b32.cont [4/16] 0.0, 128
    %3419 = vxpose.xlu0.b32.cont [5/16] 0.0, 128
    %3420 = vxpose.xlu0.b32.cont [6/16] 0.0, 128
    %3421 = vxpose.xlu0.b32.cont [7/16] 0.0, 128
    %3422 = vxpose.xlu0.b32.cont [8/16] 0.0, 128
    %3423 = vxpose.xlu0.b32.cont [9/16] 0.0, 128
    %3424 = vxpose.xlu0.b32.cont [10/16] 0.0, 128
    %3425 = vxpose.xlu0.b32.cont [11/16] 0.0, 128
    %3426 = vxpose.xlu0.b32.cont [12/16] 0.0, 128
    %3427 = vxpose.xlu0.b32.cont [13/16] 0.0, 128
    %3428 = vxpose.xlu0.b32.cont [14/16] 0.0, 128
    %3429 = vxpose.xlu0.b32.cont [15/16] 0.0, 128
    %3430 = vxpose.xlu0.b32.end [16/16] 0.0, 128
    %v3431 = vpop.trf.xlu0
    %v3432 = vpop.trf.xlu0
    %v3433 = vpop.trf.xlu0
    %v3434 = vpop.trf.xlu0
    %v3435 = vpop.trf.xlu0
    %v3436 = vpop.trf.xlu0
    %v3437 = vpop.trf.xlu0
    %v3438 = vpop.trf.xlu0
    %v3439 = vpop.trf.xlu0
    %v3440 = vpop.trf.xlu0
    %v3441 = vpop.trf.xlu0
    %v3442 = vpop.trf.xlu0
    %v3443 = vpop.trf.xlu0
    %v3444 = vpop.trf.xlu0
    %v3445 = vpop.trf.xlu0
    %v3446 = vpop.trf.xlu0
    %3447 = vxpose.xlu0.b32.start [1/16] %v1620, 128
    %3448 = vxpose.xlu0.b32.cont [2/16] 0.0, 128
    %3449 = vxpose.xlu0.b32.cont [3/16] 0.0, 128
    %3450 = vxpose.xlu0.b32.cont [4/16] 0.0, 128
    %3451 = vxpose.xlu0.b32.cont [5/16] 0.0, 128
    %3452 = vxpose.xlu0.b32.cont [6/16] 0.0, 128
    %3453 = vxpose.xlu0.b32.cont [7/16] 0.0, 128
    %3454 = vxpose.xlu0.b32.cont [8/16] 0.0, 128
    %3455 = vxpose.xlu0.b32.cont [9/16] 0.0, 128
    %3456 = vxpose.xlu0.b32.cont [10/16] 0.0, 128
    %3457 = vxpose.xlu0.b32.cont [11/16] 0.0, 128
    %3458 = vxpose.xlu0.b32.cont [12/16] 0.0, 128
    %3459 = vxpose.xlu0.b32.cont [13/16] 0.0, 128
    %3460 = vxpose.xlu0.b32.cont [14/16] 0.0, 128
    %3461 = vxpose.xlu0.b32.cont [15/16] 0.0, 128
    %3462 = vxpose.xlu0.b32.end [16/16] 0.0, 128
    %v3463 = vpop.trf.xlu0
    %v3464 = vpop.trf.xlu0
    %v3465 = vpop.trf.xlu0
    %v3466 = vpop.trf.xlu0
    %v3467 = vpop.trf.xlu0
    %v3468 = vpop.trf.xlu0
    %v3469 = vpop.trf.xlu0
    %v3470 = vpop.trf.xlu0
    %v3471 = vpop.trf.xlu0
    %v3472 = vpop.trf.xlu0
    %v3473 = vpop.trf.xlu0
    %v3474 = vpop.trf.xlu0
    %v3475 = vpop.trf.xlu0
    %v3476 = vpop.trf.xlu0
    %v3477 = vpop.trf.xlu0
    %v3478 = vpop.trf.xlu0
    %3479 = vxpose.xlu0.b32.start [1/16] %v1659, 128
    %3480 = vxpose.xlu0.b32.cont [2/16] 0.0, 128
    %3481 = vxpose.xlu0.b32.cont [3/16] 0.0, 128
    %3482 = vxpose.xlu0.b32.cont [4/16] 0.0, 128
    %3483 = vxpose.xlu0.b32.cont [5/16] 0.0, 128
    %3484 = vxpose.xlu0.b32.cont [6/16] 0.0, 128
    %3485 = vxpose.xlu0.b32.cont [7/16] 0.0, 128
    %3486 = vxpose.xlu0.b32.cont [8/16] 0.0, 128
    %3487 = vxpose.xlu0.b32.cont [9/16] 0.0, 128
    %3488 = vxpose.xlu0.b32.cont [10/16] 0.0, 128
    %3489 = vxpose.xlu0.b32.cont [11/16] 0.0, 128
    %3490 = vxpose.xlu0.b32.cont [12/16] 0.0, 128
    %3491 = vxpose.xlu0.b32.cont [13/16] 0.0, 128
    %3492 = vxpose.xlu0.b32.cont [14/16] 0.0, 128
    %3493 = vxpose.xlu0.b32.cont [15/16] 0.0, 128
    %3494 = vxpose.xlu0.b32.end [16/16] 0.0, 128
    %v3495 = vpop.trf.xlu0
    %v3496 = vpop.trf.xlu0
    %v3497 = vpop.trf.xlu0
    %v3498 = vpop.trf.xlu0
    %v3499 = vpop.trf.xlu0
    %v3500 = vpop.trf.xlu0
    %v3501 = vpop.trf.xlu0
    %v3502 = vpop.trf.xlu0
    %v3503 = vpop.trf.xlu0
    %v3504 = vpop.trf.xlu0
    %v3505 = vpop.trf.xlu0
    %v3506 = vpop.trf.xlu0
    %v3507 = vpop.trf.xlu0
    %v3508 = vpop.trf.xlu0
    %v3509 = vpop.trf.xlu0
    %v3510 = vpop.trf.xlu0
    %3511 = vxpose.xlu0.b32.start [1/16] %v1683, 128
    %3512 = vxpose.xlu0.b32.cont [2/16] 0.0, 128
    %3513 = vxpose.xlu0.b32.cont [3/16] 0.0, 128
    %3514 = vxpose.xlu0.b32.cont [4/16] 0.0, 128
    %3515 = vxpose.xlu0.b32.cont [5/16] 0.0, 128
    %3516 = vxpose.xlu0.b32.cont [6/16] 0.0, 128
    %3517 = vxpose.xlu0.b32.cont [7/16] 0.0, 128
    %3518 = vxpose.xlu0.b32.cont [8/16] 0.0, 128
    %3519 = vxpose.xlu0.b32.cont [9/16] 0.0, 128
    %3520 = vxpose.xlu0.b32.cont [10/16] 0.0, 128
    %3521 = vxpose.xlu0.b32.cont [11/16] 0.0, 128
    %3522 = vxpose.xlu0.b32.cont [12/16] 0.0, 128
    %3523 = vxpose.xlu0.b32.cont [13/16] 0.0, 128
    %3524 = vxpose.xlu0.b32.cont [14/16] 0.0, 128
    %3525 = vxpose.xlu0.b32.cont [15/16] 0.0, 128
    %3526 = vxpose.xlu0.b32.end [16/16] 0.0, 128
    %v3527 = vpop.trf.xlu0
    %v3528 = vpop.trf.xlu0
    %v3529 = vpop.trf.xlu0
    %v3530 = vpop.trf.xlu0
    %v3531 = vpop.trf.xlu0
    %v3532 = vpop.trf.xlu0
    %v3533 = vpop.trf.xlu0
    %v3534 = vpop.trf.xlu0
    %v3535 = vpop.trf.xlu0
    %v3536 = vpop.trf.xlu0
    %v3537 = vpop.trf.xlu0
    %v3538 = vpop.trf.xlu0
    %v3539 = vpop.trf.xlu0
    %v3540 = vpop.trf.xlu0
    %v3541 = vpop.trf.xlu0
    %v3542 = vpop.trf.xlu0
    %3543 = vxpose.xlu0.b32.start [1/16] %v1666, 128
    %3544 = vxpose.xlu0.b32.cont [2/16] 0.0, 128
    %3545 = vxpose.xlu0.b32.cont [3/16] 0.0, 128
    %3546 = vxpose.xlu0.b32.cont [4/16] 0.0, 128
    %3547 = vxpose.xlu0.b32.cont [5/16] 0.0, 128
    %3548 = vxpose.xlu0.b32.cont [6/16] 0.0, 128
    %3549 = vxpose.xlu0.b32.cont [7/16] 0.0, 128
    %3550 = vxpose.xlu0.b32.cont [8/16] 0.0, 128
    %3551 = vxpose.xlu0.b32.cont [9/16] 0.0, 128
    %3552 = vxpose.xlu0.b32.cont [10/16] 0.0, 128
    %3553 = vxpose.xlu0.b32.cont [11/16] 0.0, 128
    %3554 = vxpose.xlu0.b32.cont [12/16] 0.0, 128
    %3555 = vxpose.xlu0.b32.cont [13/16] 0.0, 128
    %3556 = vxpose.xlu0.b32.cont [14/16] 0.0, 128
    %3557 = vxpose.xlu0.b32.cont [15/16] 0.0, 128
    %3558 = vxpose.xlu0.b32.end [16/16] 0.0, 128
    %v3559 = vpop.trf.xlu0
    %v3560 = vpop.trf.xlu0
    %v3561 = vpop.trf.xlu0
    %v3562 = vpop.trf.xlu0
    %v3563 = vpop.trf.xlu0
    %v3564 = vpop.trf.xlu0
    %v3565 = vpop.trf.xlu0
    %v3566 = vpop.trf.xlu0
    %v3567 = vpop.trf.xlu0
    %v3568 = vpop.trf.xlu0
    %v3569 = vpop.trf.xlu0
    %v3570 = vpop.trf.xlu0
    %v3571 = vpop.trf.xlu0
    %v3572 = vpop.trf.xlu0
    %v3573 = vpop.trf.xlu0
    %v3574 = vpop.trf.xlu0
    %3575 = vxpose.xlu0.b32.start [1/16] %v1684, 128
    %3576 = vxpose.xlu0.b32.cont [2/16] 0.0, 128
    %3577 = vxpose.xlu0.b32.cont [3/16] 0.0, 128
    %3578 = vxpose.xlu0.b32.cont [4/16] 0.0, 128
    %3579 = vxpose.xlu0.b32.cont [5/16] 0.0, 128
    %3580 = vxpose.xlu0.b32.cont [6/16] 0.0, 128
    %3581 = vxpose.xlu0.b32.cont [7/16] 0.0, 128
    %3582 = vxpose.xlu0.b32.cont [8/16] 0.0, 128
    %3583 = vxpose.xlu0.b32.cont [9/16] 0.0, 128
    %3584 = vxpose.xlu0.b32.cont [10/16] 0.0, 128
    %3585 = vxpose.xlu0.b32.cont [11/16] 0.0, 128
    %3586 = vxpose.xlu0.b32.cont [12/16] 0.0, 128
    %3587 = vxpose.xlu0.b32.cont [13/16] 0.0, 128
    %3588 = vxpose.xlu0.b32.cont [14/16] 0.0, 128
    %3589 = vxpose.xlu0.b32.cont [15/16] 0.0, 128
    %3590 = vxpose.xlu0.b32.end [16/16] 0.0, 128
    %v3591 = vpop.trf.xlu0
    %v3592 = vpop.trf.xlu0
    %v3593 = vpop.trf.xlu0
    %v3594 = vpop.trf.xlu0
    %v3595 = vpop.trf.xlu0
    %v3596 = vpop.trf.xlu0
    %v3597 = vpop.trf.xlu0
    %v3598 = vpop.trf.xlu0
    %v3599 = vpop.trf.xlu0
    %v3600 = vpop.trf.xlu0
    %v3601 = vpop.trf.xlu0
    %v3602 = vpop.trf.xlu0
    %v3603 = vpop.trf.xlu0
    %v3604 = vpop.trf.xlu0
    %v3605 = vpop.trf.xlu0
    %v3606 = vpop.trf.xlu0
    %3607 = vxpose.xlu0.b32.start [1/16] %v1675, 128
    %3608 = vxpose.xlu0.b32.cont [2/16] 0.0, 128
    %3609 = vxpose.xlu0.b32.cont [3/16] 0.0, 128
    %3610 = vxpose.xlu0.b32.cont [4/16] 0.0, 128
    %3611 = vxpose.xlu0.b32.cont [5/16] 0.0, 128
    %3612 = vxpose.xlu0.b32.cont [6/16] 0.0, 128
    %3613 = vxpose.xlu0.b32.cont [7/16] 0.0, 128
    %3614 = vxpose.xlu0.b32.cont [8/16] 0.0, 128
    %3615 = vxpose.xlu0.b32.cont [9/16] 0.0, 128
    %3616 = vxpose.xlu0.b32.cont [10/16] 0.0, 128
    %3617 = vxpose.xlu0.b32.cont [11/16] 0.0, 128
    %3618 = vxpose.xlu0.b32.cont [12/16] 0.0, 128
    %3619 = vxpose.xlu0.b32.cont [13/16] 0.0, 128
    %3620 = vxpose.xlu0.b32.cont [14/16] 0.0, 128
    %3621 = vxpose.xlu0.b32.cont [15/16] 0.0, 128
    %3622 = vxpose.xlu0.b32.end [16/16] 0.0, 128
    %v3623 = vpop.trf.xlu0
    %v3624 = vpop.trf.xlu0
    %v3625 = vpop.trf.xlu0
    %v3626 = vpop.trf.xlu0
    %v3627 = vpop.trf.xlu0
    %v3628 = vpop.trf.xlu0
    %v3629 = vpop.trf.xlu0
    %v3630 = vpop.trf.xlu0
    %v3631 = vpop.trf.xlu0
    %v3632 = vpop.trf.xlu0
    %v3633 = vpop.trf.xlu0
    %v3634 = vpop.trf.xlu0
    %v3635 = vpop.trf.xlu0
    %v3636 = vpop.trf.xlu0
    %v3637 = vpop.trf.xlu0
    %v3638 = vpop.trf.xlu0
    %3639 = vxpose.xlu0.b32.start [1/16] %v1685, 128
    %3640 = vxpose.xlu0.b32.cont [2/16] 0.0, 128
    %3641 = vxpose.xlu0.b32.cont [3/16] 0.0, 128
    %3642 = vxpose.xlu0.b32.cont [4/16] 0.0, 128
    %3643 = vxpose.xlu0.b32.cont [5/16] 0.0, 128
    %3644 = vxpose.xlu0.b32.cont [6/16] 0.0, 128
    %3645 = vxpose.xlu0.b32.cont [7/16] 0.0, 128
    %3646 = vxpose.xlu0.b32.cont [8/16] 0.0, 128
    %3647 = vxpose.xlu0.b32.cont [9/16] 0.0, 128
    %3648 = vxpose.xlu0.b32.cont [10/16] 0.0, 128
    %3649 = vxpose.xlu0.b32.cont [11/16] 0.0, 128
    %3650 = vxpose.xlu0.b32.cont [12/16] 0.0, 128
    %3651 = vxpose.xlu0.b32.cont [13/16] 0.0, 128
    %3652 = vxpose.xlu0.b32.cont [14/16] 0.0, 128
    %3653 = vxpose.xlu0.b32.cont [15/16] 0.0, 128
    %3654 = vxpose.xlu0.b32.end [16/16] 0.0, 128
    %v3655 = vpop.trf.xlu0
    %v3656 = vpop.trf.xlu0
    %v3657 = vpop.trf.xlu0
    %v3658 = vpop.trf.xlu0
    %v3659 = vpop.trf.xlu0
    %v3660 = vpop.trf.xlu0
    %v3661 = vpop.trf.xlu0
    %v3662 = vpop.trf.xlu0
    %v3663 = vpop.trf.xlu0
    %v3664 = vpop.trf.xlu0
    %v3665 = vpop.trf.xlu0
    %v3666 = vpop.trf.xlu0
    %v3667 = vpop.trf.xlu0
    %v3668 = vpop.trf.xlu0
    %v3669 = vpop.trf.xlu0
    %v3670 = vpop.trf.xlu0
    %3671 = vxpose.xlu0.b32.start [1/16] %v1682, 128
    %3672 = vxpose.xlu0.b32.cont [2/16] 0.0, 128
    %3673 = vxpose.xlu0.b32.cont [3/16] 0.0, 128
    %3674 = vxpose.xlu0.b32.cont [4/16] 0.0, 128
    %3675 = vxpose.xlu0.b32.cont [5/16] 0.0, 128
    %3676 = vxpose.xlu0.b32.cont [6/16] 0.0, 128
    %3677 = vxpose.xlu0.b32.cont [7/16] 0.0, 128
    %3678 = vxpose.xlu0.b32.cont [8/16] 0.0, 128
    %3679 = vxpose.xlu0.b32.cont [9/16] 0.0, 128
    %3680 = vxpose.xlu0.b32.cont [10/16] 0.0, 128
    %3681 = vxpose.xlu0.b32.cont [11/16] 0.0, 128
    %3682 = vxpose.xlu0.b32.cont [12/16] 0.0, 128
    %3683 = vxpose.xlu0.b32.cont [13/16] 0.0, 128
    %3684 = vxpose.xlu0.b32.cont [14/16] 0.0, 128
    %3685 = vxpose.xlu0.b32.cont [15/16] 0.0, 128
    %3686 = vxpose.xlu0.b32.end [16/16] 0.0, 128
    %v3687 = vpop.trf.xlu0
    %v3688 = vpop.trf.xlu0
    %v3689 = vpop.trf.xlu0
    %v3690 = vpop.trf.xlu0
    %v3691 = vpop.trf.xlu0
    %v3692 = vpop.trf.xlu0
    %v3693 = vpop.trf.xlu0
    %v3694 = vpop.trf.xlu0
    %v3695 = vpop.trf.xlu0
    %v3696 = vpop.trf.xlu0
    %v3697 = vpop.trf.xlu0
    %v3698 = vpop.trf.xlu0
    %v3699 = vpop.trf.xlu0
    %v3700 = vpop.trf.xlu0
    %v3701 = vpop.trf.xlu0
    %v3702 = vpop.trf.xlu0
    %3703 = vxpose.xlu0.b32.start [1/16] %v1686, 128
    %3704 = vxpose.xlu0.b32.cont [2/16] 0.0, 128
    %3705 = vxpose.xlu0.b32.cont [3/16] 0.0, 128
    %3706 = vxpose.xlu0.b32.cont [4/16] 0.0, 128
    %3707 = vxpose.xlu0.b32.cont [5/16] 0.0, 128
    %3708 = vxpose.xlu0.b32.cont [6/16] 0.0, 128
    %3709 = vxpose.xlu0.b32.cont [7/16] 0.0, 128
    %3710 = vxpose.xlu0.b32.cont [8/16] 0.0, 128
    %3711 = vxpose.xlu0.b32.cont [9/16] 0.0, 128
    %3712 = vxpose.xlu0.b32.cont [10/16] 0.0, 128
    %3713 = vxpose.xlu0.b32.cont [11/16] 0.0, 128
    %3714 = vxpose.xlu0.b32.cont [12/16] 0.0, 128
    %3715 = vxpose.xlu0.b32.cont [13/16] 0.0, 128
    %3716 = vxpose.xlu0.b32.cont [14/16] 0.0, 128
    %3717 = vxpose.xlu0.b32.cont [15/16] 0.0, 128
    %3718 = vxpose.xlu0.b32.end [16/16] 0.0, 128
    %v3719 = vpop.trf.xlu0
    %v3720 = vpop.trf.xlu0
    %v3721 = vpop.trf.xlu0
    %v3722 = vpop.trf.xlu0
    %v3723 = vpop.trf.xlu0
    %v3724 = vpop.trf.xlu0
    %v3725 = vpop.trf.xlu0
    %v3726 = vpop.trf.xlu0
    %v3727 = vpop.trf.xlu0
    %v3728 = vpop.trf.xlu0
    %v3729 = vpop.trf.xlu0
    %v3730 = vpop.trf.xlu0
    %v3731 = vpop.trf.xlu0
    %v3732 = vpop.trf.xlu0
    %v3733 = vpop.trf.xlu0
    %v3734 = vpop.trf.xlu0
    %v3735 = vcombine.low %v1703, %v1767
    %v3737 = vunpack.c.l.s4 1983009808
    %v3738 = vunpack.c.0.s8 %v3737
    %v3739 = vlaneseq
    %v3740 = vshrl.u32 %v3739, 7
    %v3741 = vsub.s32 %v3738, %v3740
    %v3742 = vrot.slane %v3735, %v3741
    %v3743 = vcombine.low %v1735, %v1799
    %v3745 = vunpack.c.l.s4 1983009808
    %v3746 = vunpack.c.0.s8 %v3745
    %v3747 = vlaneseq
    %v3748 = vshrl.u32 %v3747, 7
    %v3749 = vsub.s32 %v3746, %v3748
    %v3750 = vrot.slane %v3743, %v3749
    %v3751 = vcombine.low %v1831, %v1895
    %v3753 = vunpack.c.l.s4 1983009808
    %v3754 = vunpack.c.0.s8 %v3753
    %v3755 = vlaneseq
    %v3756 = vshrl.u32 %v3755, 7
    %v3757 = vsub.s32 %v3754, %v3756
    %v3758 = vrot.slane %v3751, %v3757
    %v3759 = vcombine.low %v1863, %v1927
    %v3761 = vunpack.c.l.s4 1983009808
    %v3762 = vunpack.c.0.s8 %v3761
    %v3763 = vlaneseq
    %v3764 = vshrl.u32 %v3763, 7
    %v3765 = vsub.s32 %v3762, %v3764
    %v3766 = vrot.slane %v3759, %v3765
    %v3767 = vcombine.low %v3742, %v3750
    %v3769 = vunpack.c.l.s4 1934713408
    %v3770 = vunpack.c.0.s8 %v3769
    %v3771 = vlaneseq
    %v3772 = vshrl.u32 %v3771, 7
    %v3773 = vsub.s32 %v3770, %v3772
    %v3774 = vrot.slane %v3767, %v3773
    %v3775 = vcombine.low %v3758, %v3766
    %v3777 = vunpack.c.l.s4 1934713408
    %v3778 = vunpack.c.0.s8 %v3777
    %v3779 = vlaneseq
    %v3780 = vshrl.u32 %v3779, 7
    %v3781 = vsub.s32 %v3778, %v3780
    %v3782 = vrot.slane %v3775, %v3781
    %v3783 = vcombine.low %v3774, %v3782
    %v3784 = vcombine.high %v3774, %v3782
    %v3785 = vcombine.low %v1959, %v2023
    %v3787 = vunpack.c.l.s4 1983009808
    %v3788 = vunpack.c.0.s8 %v3787
    %v3789 = vlaneseq
    %v3790 = vshrl.u32 %v3789, 7
    %v3791 = vsub.s32 %v3788, %v3790
    %v3792 = vrot.slane %v3785, %v3791
    %v3793 = vcombine.low %v1991, %v2055
    %v3795 = vunpack.c.l.s4 1983009808
    %v3796 = vunpack.c.0.s8 %v3795
    %v3797 = vlaneseq
    %v3798 = vshrl.u32 %v3797, 7
    %v3799 = vsub.s32 %v3796, %v3798
    %v3800 = vrot.slane %v3793, %v3799
    %v3801 = vcombine.low %v2087, %v2151
    %v3803 = vunpack.c.l.s4 1983009808
    %v3804 = vunpack.c.0.s8 %v3803
    %v3805 = vlaneseq
    %v3806 = vshrl.u32 %v3805, 7
    %v3807 = vsub.s32 %v3804, %v3806
    %v3808 = vrot.slane %v3801, %v3807
    %v3809 = vcombine.low %v2119, %v2183
    %v3811 = vunpack.c.l.s4 1983009808
    %v3812 = vunpack.c.0.s8 %v3811
    %v3813 = vlaneseq
    %v3814 = vshrl.u32 %v3813, 7
    %v3815 = vsub.s32 %v3812, %v3814
    %v3816 = vrot.slane %v3809, %v3815
    %v3817 = vcombine.low %v3792, %v3800
    %v3819 = vunpack.c.l.s4 1934713408
    %v3820 = vunpack.c.0.s8 %v3819
    %v3821 = vlaneseq
    %v3822 = vshrl.u32 %v3821, 7
    %v3823 = vsub.s32 %v3820, %v3822
    %v3824 = vrot.slane %v3817, %v3823
    %v3825 = vcombine.low %v3808, %v3816
    %v3827 = vunpack.c.l.s4 1934713408
    %v3828 = vunpack.c.0.s8 %v3827
    %v3829 = vlaneseq
    %v3830 = vshrl.u32 %v3829, 7
    %v3831 = vsub.s32 %v3828, %v3830
    %v3832 = vrot.slane %v3825, %v3831
    %v3833 = vcombine.low %v3824, %v3832
    %v3834 = vcombine.high %v3824, %v3832
    %v3835 = vcombine.low %v2215, %v2279
    %v3837 = vunpack.c.l.s4 1983009808
    %v3838 = vunpack.c.0.s8 %v3837
    %v3839 = vlaneseq
    %v3840 = vshrl.u32 %v3839, 7
    %v3841 = vsub.s32 %v3838, %v3840
    %v3842 = vrot.slane %v3835, %v3841
    %v3843 = vcombine.low %v2247, %v2311
    %v3845 = vunpack.c.l.s4 1983009808
    %v3846 = vunpack.c.0.s8 %v3845
    %v3847 = vlaneseq
    %v3848 = vshrl.u32 %v3847, 7
    %v3849 = vsub.s32 %v3846, %v3848
    %v3850 = vrot.slane %v3843, %v3849
    %v3851 = vcombine.low %v2343, %v2407
    %v3853 = vunpack.c.l.s4 1983009808
    %v3854 = vunpack.c.0.s8 %v3853
    %v3855 = vlaneseq
    %v3856 = vshrl.u32 %v3855, 7
    %v3857 = vsub.s32 %v3854, %v3856
    %v3858 = vrot.slane %v3851, %v3857
    %v3859 = vcombine.low %v2375, %v2439
    %v3861 = vunpack.c.l.s4 1983009808
    %v3862 = vunpack.c.0.s8 %v3861
    %v3863 = vlaneseq
    %v3864 = vshrl.u32 %v3863, 7
    %v3865 = vsub.s32 %v3862, %v3864
    %v3866 = vrot.slane %v3859, %v3865
    %v3867 = vcombine.low %v3842, %v3850
    %v3869 = vunpack.c.l.s4 1934713408
    %v3870 = vunpack.c.0.s8 %v3869
    %v3871 = vlaneseq
    %v3872 = vshrl.u32 %v3871, 7
    %v3873 = vsub.s32 %v3870, %v3872
    %v3874 = vrot.slane %v3867, %v3873
    %v3875 = vcombine.low %v3858, %v3866
    %v3877 = vunpack.c.l.s4 1934713408
    %v3878 = vunpack.c.0.s8 %v3877
    %v3879 = vlaneseq
    %v3880 = vshrl.u32 %v3879, 7
    %v3881 = vsub.s32 %v3878, %v3880
    %v3882 = vrot.slane %v3875, %v3881
    %v3883 = vcombine.low %v3874, %v3882
    %v3884 = vcombine.high %v3874, %v3882
    %v3885 = vcombine.low %v2471, %v2535
    %v3887 = vunpack.c.l.s4 1983009808
    %v3888 = vunpack.c.0.s8 %v3887
    %v3889 = vlaneseq
    %v3890 = vshrl.u32 %v3889, 7
    %v3891 = vsub.s32 %v3888, %v3890
    %v3892 = vrot.slane %v3885, %v3891
    %v3893 = vcombine.low %v2503, %v2567
    %v3895 = vunpack.c.l.s4 1983009808
    %v3896 = vunpack.c.0.s8 %v3895
    %v3897 = vlaneseq
    %v3898 = vshrl.u32 %v3897, 7
    %v3899 = vsub.s32 %v3896, %v3898
    %v3900 = vrot.slane %v3893, %v3899
    %v3901 = vcombine.low %v2599, %v2663
    %v3903 = vunpack.c.l.s4 1983009808
    %v3904 = vunpack.c.0.s8 %v3903
    %v3905 = vlaneseq
    %v3906 = vshrl.u32 %v3905, 7
    %v3907 = vsub.s32 %v3904, %v3906
    %v3908 = vrot.slane %v3901, %v3907
    %v3909 = vcombine.low %v2631, %v2695
    %v3911 = vunpack.c.l.s4 1983009808
    %v3912 = vunpack.c.0.s8 %v3911
    %v3913 = vlaneseq
    %v3914 = vshrl.u32 %v3913, 7
    %v3915 = vsub.s32 %v3912, %v3914
    %v3916 = vrot.slane %v3909, %v3915
    %v3917 = vcombine.low %v3892, %v3900
    %v3919 = vunpack.c.l.s4 1934713408
    %v3920 = vunpack.c.0.s8 %v3919
    %v3921 = vlaneseq
    %v3922 = vshrl.u32 %v3921, 7
    %v3923 = vsub.s32 %v3920, %v3922
    %v3924 = vrot.slane %v3917, %v3923
    %v3925 = vcombine.low %v3908, %v3916
    %v3927 = vunpack.c.l.s4 1934713408
    %v3928 = vunpack.c.0.s8 %v3927
    %v3929 = vlaneseq
    %v3930 = vshrl.u32 %v3929, 7
    %v3931 = vsub.s32 %v3928, %v3930
    %v3932 = vrot.slane %v3925, %v3931
    %v3933 = vcombine.low %v3924, %v3932
    %v3934 = vcombine.high %v3924, %v3932
    %v3935 = vcombine.low %v2727, %v2791
    %v3937 = vunpack.c.l.s4 1983009808
    %v3938 = vunpack.c.0.s8 %v3937
    %v3939 = vlaneseq
    %v3940 = vshrl.u32 %v3939, 7
    %v3941 = vsub.s32 %v3938, %v3940
    %v3942 = vrot.slane %v3935, %v3941
    %v3943 = vcombine.low %v2759, %v2823
    %v3945 = vunpack.c.l.s4 1983009808
    %v3946 = vunpack.c.0.s8 %v3945
    %v3947 = vlaneseq
    %v3948 = vshrl.u32 %v3947, 7
    %v3949 = vsub.s32 %v3946, %v3948
    %v3950 = vrot.slane %v3943, %v3949
    %v3951 = vcombine.low %v2855, %v2919
    %v3953 = vunpack.c.l.s4 1983009808
    %v3954 = vunpack.c.0.s8 %v3953
    %v3955 = vlaneseq
    %v3956 = vshrl.u32 %v3955, 7
    %v3957 = vsub.s32 %v3954, %v3956
    %v3958 = vrot.slane %v3951, %v3957
    %v3959 = vcombine.low %v2887, %v2951
    %v3961 = vunpack.c.l.s4 1983009808
    %v3962 = vunpack.c.0.s8 %v3961
    %v3963 = vlaneseq
    %v3964 = vshrl.u32 %v3963, 7
    %v3965 = vsub.s32 %v3962, %v3964
    %v3966 = vrot.slane %v3959, %v3965
    %v3967 = vcombine.low %v3942, %v3950
    %v3969 = vunpack.c.l.s4 1934713408
    %v3970 = vunpack.c.0.s8 %v3969
    %v3971 = vlaneseq
    %v3972 = vshrl.u32 %v3971, 7
    %v3973 = vsub.s32 %v3970, %v3972
    %v3974 = vrot.slane %v3967, %v3973
    %v3975 = vcombine.low %v3958, %v3966
    %v3977 = vunpack.c.l.s4 1934713408
    %v3978 = vunpack.c.0.s8 %v3977
    %v3979 = vlaneseq
    %v3980 = vshrl.u32 %v3979, 7
    %v3981 = vsub.s32 %v3978, %v3980
    %v3982 = vrot.slane %v3975, %v3981
    %v3983 = vcombine.low %v3974, %v3982
    %v3984 = vcombine.high %v3974, %v3982
    %v3985 = vcombine.low %v2983, %v3047
    %v3987 = vunpack.c.l.s4 1983009808
    %v3988 = vunpack.c.0.s8 %v3987
    %v3989 = vlaneseq
    %v3990 = vshrl.u32 %v3989, 7
    %v3991 = vsub.s32 %v3988, %v3990
    %v3992 = vrot.slane %v3985, %v3991
    %v3993 = vcombine.low %v3015, %v3079
    %v3995 = vunpack.c.l.s4 1983009808
    %v3996 = vunpack.c.0.s8 %v3995
    %v3997 = vlaneseq
    %v3998 = vshrl.u32 %v3997, 7
    %v3999 = vsub.s32 %v3996, %v3998
    %v4000 = vrot.slane %v3993, %v3999
    %v4001 = vcombine.low %v3111, %v3175
    %v4003 = vunpack.c.l.s4 1983009808
    %v4004 = vunpack.c.0.s8 %v4003
    %v4005 = vlaneseq
    %v4006 = vshrl.u32 %v4005, 7
    %v4007 = vsub.s32 %v4004, %v4006
    %v4008 = vrot.slane %v4001, %v4007
    %v4009 = vcombine.low %v3143, %v3207
    %v4011 = vunpack.c.l.s4 1983009808
    %v4012 = vunpack.c.0.s8 %v4011
    %v4013 = vlaneseq
    %v4014 = vshrl.u32 %v4013, 7
    %v4015 = vsub.s32 %v4012, %v4014
    %v4016 = vrot.slane %v4009, %v4015
    %v4017 = vcombine.low %v3992, %v4000
    %v4019 = vunpack.c.l.s4 1934713408
    %v4020 = vunpack.c.0.s8 %v4019
    %v4021 = vlaneseq
    %v4022 = vshrl.u32 %v4021, 7
    %v4023 = vsub.s32 %v4020, %v4022
    %v4024 = vrot.slane %v4017, %v4023
    %v4025 = vcombine.low %v4008, %v4016
    %v4027 = vunpack.c.l.s4 1934713408
    %v4028 = vunpack.c.0.s8 %v4027
    %v4029 = vlaneseq
    %v4030 = vshrl.u32 %v4029, 7
    %v4031 = vsub.s32 %v4028, %v4030
    %v4032 = vrot.slane %v4025, %v4031
    %v4033 = vcombine.low %v4024, %v4032
    %v4034 = vcombine.high %v4024, %v4032
    %v4035 = vcombine.low %v3239, %v3303
    %v4037 = vunpack.c.l.s4 1983009808
    %v4038 = vunpack.c.0.s8 %v4037
    %v4039 = vlaneseq
    %v4040 = vshrl.u32 %v4039, 7
    %v4041 = vsub.s32 %v4038, %v4040
    %v4042 = vrot.slane %v4035, %v4041
    %v4043 = vcombine.low %v3271, %v3335
    %v4045 = vunpack.c.l.s4 1983009808
    %v4046 = vunpack.c.0.s8 %v4045
    %v4047 = vlaneseq
    %v4048 = vshrl.u32 %v4047, 7
    %v4049 = vsub.s32 %v4046, %v4048
    %v4050 = vrot.slane %v4043, %v4049
    %v4051 = vcombine.low %v3367, %v3431
    %v4053 = vunpack.c.l.s4 1983009808
    %v4054 = vunpack.c.0.s8 %v4053
    %v4055 = vlaneseq
    %v4056 = vshrl.u32 %v4055, 7
    %v4057 = vsub.s32 %v4054, %v4056
    %v4058 = vrot.slane %v4051, %v4057
    %v4059 = vcombine.low %v3399, %v3463
    %v4061 = vunpack.c.l.s4 1983009808
    %v4062 = vunpack.c.0.s8 %v4061
    %v4063 = vlaneseq
    %v4064 = vshrl.u32 %v4063, 7
    %v4065 = vsub.s32 %v4062, %v4064
    %v4066 = vrot.slane %v4059, %v4065
    %v4067 = vcombine.low %v4042, %v4050
    %v4069 = vunpack.c.l.s4 1934713408
    %v4070 = vunpack.c.0.s8 %v4069
    %v4071 = vlaneseq
    %v4072 = vshrl.u32 %v4071, 7
    %v4073 = vsub.s32 %v4070, %v4072
    %v4074 = vrot.slane %v4067, %v4073
    %v4075 = vcombine.low %v4058, %v4066
    %v4077 = vunpack.c.l.s4 1934713408
    %v4078 = vunpack.c.0.s8 %v4077
    %v4079 = vlaneseq
    %v4080 = vshrl.u32 %v4079, 7
    %v4081 = vsub.s32 %v4078, %v4080
    %v4082 = vrot.slane %v4075, %v4081
    %v4083 = vcombine.low %v4074, %v4082
    %v4084 = vcombine.high %v4074, %v4082
    %v4085 = vcombine.low %v3495, %v3559
    %v4087 = vunpack.c.l.s4 1983009808
    %v4088 = vunpack.c.0.s8 %v4087
    %v4089 = vlaneseq
    %v4090 = vshrl.u32 %v4089, 7
    %v4091 = vsub.s32 %v4088, %v4090
    %v4092 = vrot.slane %v4085, %v4091
    %v4093 = vcombine.low %v3527, %v3591
    %v4095 = vunpack.c.l.s4 1983009808
    %v4096 = vunpack.c.0.s8 %v4095
    %v4097 = vlaneseq
    %v4098 = vshrl.u32 %v4097, 7
    %v4099 = vsub.s32 %v4096, %v4098
    %v4100 = vrot.slane %v4093, %v4099
    %v4101 = vcombine.low %v3623, %v3687
    %v4103 = vunpack.c.l.s4 1983009808
    %v4104 = vunpack.c.0.s8 %v4103
    %v4105 = vlaneseq
    %v4106 = vshrl.u32 %v4105, 7
    %v4107 = vsub.s32 %v4104, %v4106
    %v4108 = vrot.slane %v4101, %v4107
    %v4109 = vcombine.low %v3655, %v3719
    %v4111 = vunpack.c.l.s4 1983009808
    %v4112 = vunpack.c.0.s8 %v4111
    %v4113 = vlaneseq
    %v4114 = vshrl.u32 %v4113, 7
    %v4115 = vsub.s32 %v4112, %v4114
    %v4116 = vrot.slane %v4109, %v4115
    %v4117 = vcombine.low %v4092, %v4100
    %v4119 = vunpack.c.l.s4 1934713408
    %v4120 = vunpack.c.0.s8 %v4119
    %v4121 = vlaneseq
    %v4122 = vshrl.u32 %v4121, 7
    %v4123 = vsub.s32 %v4120, %v4122
    %v4124 = vrot.slane %v4117, %v4123
    %v4125 = vcombine.low %v4108, %v4116
    %v4127 = vunpack.c.l.s4 1934713408
    %v4128 = vunpack.c.0.s8 %v4127
    %v4129 = vlaneseq
    %v4130 = vshrl.u32 %v4129, 7
    %v4131 = vsub.s32 %v4128, %v4130
    %v4132 = vrot.slane %v4125, %v4131
    %v4133 = vcombine.low %v4124, %v4132
    %v4134 = vcombine.high %v4124, %v4132
    %v4136 = vsel %vm109, %v1047, 0
    %v4139 = vsel %vm109, %v1048, 0
    %v4142 = vsel %vm109, %v1049, 0
    %v4145 = vsel %vm109, %v1050, 0
    %v4148 = vsel %vm109, %v1051, 0
    %v4151 = vsel %vm109, %v1052, 0
    %v4154 = vsel %vm109, %v1053, 0
    %v4157 = vsel %vm109, %v1054, 0
    %4159 = vmatprep.subr.mxu0 0.0
    %4160 = vmatpush1.msra.mxu0 %v3783
    %4161 = vmatprep.subr.mxu0 0.0
    %4162 = vmatpush1.msra.mxu0 %v3833
    %4163 = vmatprep.subr.mxu0 0.0
    %4164 = vmatpush1.msra.mxu0 %v3883
    %4165 = vmatprep.subr.mxu0 0.0
    %4166 = vmatpush1.msra.mxu0 %v3933
    %4167 = vmatprep.subr.mxu0 0.0
    %4168 = vmatpush1.msra.mxu0 %v3983
    %4169 = vmatprep.subr.mxu0 0.0
    %4170 = vmatpush1.msra.mxu0 %v4033
    %4171 = vmatprep.subr.mxu0 0.0
    %4172 = vmatpush1.msra.mxu0 %v4083
    %4173 = vmatprep.subr.mxu0 0.0
    %4174 = vmatpush1.msra.mxu0 %v4133
    %4175 = vmatprep.subr.mxu0 0.0
    %4176 = vmatpush1.msra.mxu0 0.0
    %4177 = vmatprep.subr.mxu0 0.0
    %4178 = vmatpush1.msra.mxu0 0.0
    %4179 = vmatprep.subr.mxu0 0.0
    %4180 = vmatpush1.msra.mxu0 0.0
    %4181 = vmatprep.subr.mxu0 0.0
    %4182 = vmatpush1.msra.mxu0 0.0
    %4183 = vmatprep.subr.mxu0 0.0
    %4184 = vmatpush1.msra.mxu0 0.0
    %4185 = vmatprep.subr.mxu0 0.0
    %4186 = vmatpush1.msra.mxu0 0.0
    %4187 = vmatprep.subr.mxu0 0.0
    %4188 = vmatpush1.msra.mxu0 0.0
    %4189 = vmatprep.subr.mxu0 0.0
    %4190 = vmatpush1.msra.mxu0 0.0
    %4191 = vmatprep.subr.mxu0 0.0
    %4192 = vmatpush1.msra.mxu0 0.0
    %4193 = vmatprep.subr.mxu0 0.0
    %4194 = vmatpush1.msra.mxu0 0.0
    %4195 = vmatprep.subr.mxu0 0.0
    %4196 = vmatpush1.msra.mxu0 0.0
    %4197 = vmatprep.subr.mxu0 0.0
    %4198 = vmatpush1.msra.mxu0 0.0
    %4199 = vmatprep.subr.mxu0 0.0
    %4200 = vmatpush1.msra.mxu0 0.0
    %4201 = vmatprep.subr.mxu0 0.0
    %4202 = vmatpush1.msra.mxu0 0.0
    %4203 = vmatprep.subr.mxu0 0.0
    %4204 = vmatpush1.msra.mxu0 0.0
    %4205 = vmatprep.subr.mxu0 0.0
    %4206 = vmatpush1.msra.mxu0 0.0
    %4207 = vmatprep.subr.mxu0 0.0
    %4208 = vmatpush1.msra.mxu0 0.0
    %4209 = vmatprep.subr.mxu0 0.0
    %4210 = vmatpush1.msra.mxu0 0.0
    %4211 = vmatprep.subr.mxu0 0.0
    %4212 = vmatpush1.msra.mxu0 0.0
    %4213 = vmatprep.subr.mxu0 0.0
    %4214 = vmatpush1.msra.mxu0 0.0
    %4215 = vmatprep.subr.mxu0 0.0
    %4216 = vmatpush1.msra.mxu0 0.0
    %4217 = vmatprep.subr.mxu0 0.0
    %4218 = vmatpush1.msra.mxu0 0.0
    %4219 = vmatprep.subr.mxu0 0.0
    %4220 = vmatpush1.msra.mxu0 0.0
    %4221 = vmatprep.subr.mxu0 0.0
    %4222 = vmatpush1.msra.mxu0 0.0
    %4223 = vmatprep.mubr.f32.mxu0 0.0
    %4224 = vmatmul.mubr.f32.gmra.mrb[0].mxu0 %v4136
    %v4225 = vpop.f32.mrb[0].mxu0
    %v4226 = vadd.f32 0.0, %v4225
    %v4227 = vpop.f32.mrb[0].mxu0
    %4228 = vmatprep.mubr.f32.mxu0 0.0
    %4229 = vmatmul.mubr.f32.gmra.mrb[0].mxu0 %v4139
    %v4230 = vpop.f32.mrb[0].mxu0
    %v4231 = vadd.f32 0.0, %v4230
    %v4232 = vpop.f32.mrb[0].mxu0
    %4233 = vmatprep.mubr.f32.mxu0 0.0
    %4234 = vmatmul.mubr.f32.gmra.mrb[0].mxu0 %v4142
    %v4235 = vpop.f32.mrb[0].mxu0
    %v4236 = vadd.f32 0.0, %v4235
    %v4237 = vpop.f32.mrb[0].mxu0
    %4238 = vmatprep.mubr.f32.mxu0 0.0
    %4239 = vmatmul.mubr.f32.gmra.mrb[0].mxu0 %v4145
    %v4240 = vpop.f32.mrb[0].mxu0
    %v4241 = vadd.f32 0.0, %v4240
    %v4242 = vpop.f32.mrb[0].mxu0
    %4243 = vmatprep.mubr.f32.mxu0 0.0
    %4244 = vmatmul.mubr.f32.gmra.mrb[0].mxu0 %v4148
    %v4245 = vpop.f32.mrb[0].mxu0
    %v4246 = vadd.f32 0.0, %v4245
    %v4247 = vpop.f32.mrb[0].mxu0
    %4248 = vmatprep.mubr.f32.mxu0 0.0
    %4249 = vmatmul.mubr.f32.gmra.mrb[0].mxu0 %v4151
    %v4250 = vpop.f32.mrb[0].mxu0
    %v4251 = vadd.f32 0.0, %v4250
    %v4252 = vpop.f32.mrb[0].mxu0
    %4253 = vmatprep.mubr.f32.mxu0 0.0
    %4254 = vmatmul.mubr.f32.gmra.mrb[0].mxu0 %v4154
    %v4255 = vpop.f32.mrb[0].mxu0
    %v4256 = vadd.f32 0.0, %v4255
    %v4257 = vpop.f32.mrb[0].mxu0
    %4258 = vmatprep.mubr.f32.mxu0 0.0
    %4259 = vmatmul.mubr.f32.gmra.mrb[0].mxu0 %v4157
    %v4260 = vpop.f32.mrb[0].mxu0
    %v4261 = vadd.f32 0.0, %v4260
    %v4262 = vpop.f32.mrb[0].mxu0
    %4263 = vdwg.mxu0
    %v4265 = vsel %vm109, %v1079, 0
    %v4268 = vsel %vm109, %v1080, 0
    %v4271 = vsel %vm109, %v1081, 0
    %v4274 = vsel %vm109, %v1082, 0
    %v4277 = vsel %vm109, %v1083, 0
    %v4280 = vsel %vm109, %v1084, 0
    %v4283 = vsel %vm109, %v1085, 0
    %v4286 = vsel %vm109, %v1086, 0
    %4288 = vmatprep.subr.mxu0 0.0
    %4289 = vmatpush1.msra.mxu0 %v3784
    %4290 = vmatprep.subr.mxu0 0.0
    %4291 = vmatpush1.msra.mxu0 %v3834
    %4292 = vmatprep.subr.mxu0 0.0
    %4293 = vmatpush1.msra.mxu0 %v3884
    %4294 = vmatprep.subr.mxu0 0.0
    %4295 = vmatpush1.msra.mxu0 %v3934
    %4296 = vmatprep.subr.mxu0 0.0
    %4297 = vmatpush1.msra.mxu0 %v3984
    %4298 = vmatprep.subr.mxu0 0.0
    %4299 = vmatpush1.msra.mxu0 %v4034
    %4300 = vmatprep.subr.mxu0 0.0
    %4301 = vmatpush1.msra.mxu0 %v4084
    %4302 = vmatprep.subr.mxu0 0.0
    %4303 = vmatpush1.msra.mxu0 %v4134
    %4304 = vmatprep.subr.mxu0 0.0
    %4305 = vmatpush1.msra.mxu0 0.0
    %4306 = vmatprep.subr.mxu0 0.0
    %4307 = vmatpush1.msra.mxu0 0.0
    %4308 = vmatprep.subr.mxu0 0.0
    %4309 = vmatpush1.msra.mxu0 0.0
    %4310 = vmatprep.subr.mxu0 0.0
    %4311 = vmatpush1.msra.mxu0 0.0
    %4312 = vmatprep.subr.mxu0 0.0
    %4313 = vmatpush1.msra.mxu0 0.0
    %4314 = vmatprep.subr.mxu0 0.0
    %4315 = vmatpush1.msra.mxu0 0.0
    %4316 = vmatprep.subr.mxu0 0.0
    %4317 = vmatpush1.msra.mxu0 0.0
    %4318 = vmatprep.subr.mxu0 0.0
    %4319 = vmatpush1.msra.mxu0 0.0
    %4320 = vmatprep.subr.mxu0 0.0
    %4321 = vmatpush1.msra.mxu0 0.0
    %4322 = vmatprep.subr.mxu0 0.0
    %4323 = vmatpush1.msra.mxu0 0.0
    %4324 = vmatprep.subr.mxu0 0.0
    %4325 = vmatpush1.msra.mxu0 0.0
    %4326 = vmatprep.subr.mxu0 0.0
    %4327 = vmatpush1.msra.mxu0 0.0
    %4328 = vmatprep.subr.mxu0 0.0
    %4329 = vmatpush1.msra.mxu0 0.0
    %4330 = vmatprep.subr.mxu0 0.0
    %4331 = vmatpush1.msra.mxu0 0.0
    %4332 = vmatprep.subr.mxu0 0.0
    %4333 = vmatpush1.msra.mxu0 0.0
    %4334 = vmatprep.subr.mxu0 0.0
    %4335 = vmatpush1.msra.mxu0 0.0
    %4336 = vmatprep.subr.mxu0 0.0
    %4337 = vmatpush1.msra.mxu0 0.0
    %4338 = vmatprep.subr.mxu0 0.0
    %4339 = vmatpush1.msra.mxu0 0.0
    %4340 = vmatprep.subr.mxu0 0.0
    %4341 = vmatpush1.msra.mxu0 0.0
    %4342 = vmatprep.subr.mxu0 0.0
    %4343 = vmatpush1.msra.mxu0 0.0
    %4344 = vmatprep.subr.mxu0 0.0
    %4345 = vmatpush1.msra.mxu0 0.0
    %4346 = vmatprep.subr.mxu0 0.0
    %4347 = vmatpush1.msra.mxu0 0.0
    %4348 = vmatprep.subr.mxu0 0.0
    %4349 = vmatpush1.msra.mxu0 0.0
    %4350 = vmatprep.subr.mxu0 0.0
    %4351 = vmatpush1.msra.mxu0 0.0
    %4352 = vmatprep.mubr.f32.mxu0 0.0
    %4353 = vmatmul.mubr.f32.gmra.mrb[0].mxu0 %v4265
    %v4354 = vpop.f32.mrb[0].mxu0
    %v4355 = vadd.f32 0.0, %v4354
    %v4356 = vpop.f32.mrb[0].mxu0
    %4357 = vmatprep.mubr.f32.mxu0 0.0
    %4358 = vmatmul.mubr.f32.gmra.mrb[0].mxu0 %v4268
    %v4359 = vpop.f32.mrb[0].mxu0
    %v4360 = vadd.f32 0.0, %v4359
    %v4361 = vpop.f32.mrb[0].mxu0
    %4362 = vmatprep.mubr.f32.mxu0 0.0
    %4363 = vmatmul.mubr.f32.gmra.mrb[0].mxu0 %v4271
    %v4364 = vpop.f32.mrb[0].mxu0
    %v4365 = vadd.f32 0.0, %v4364
    %v4366 = vpop.f32.mrb[0].mxu0
    %4367 = vmatprep.mubr.f32.mxu0 0.0
    %4368 = vmatmul.mubr.f32.gmra.mrb[0].mxu0 %v4274
    %v4369 = vpop.f32.mrb[0].mxu0
    %v4370 = vadd.f32 0.0, %v4369
    %v4371 = vpop.f32.mrb[0].mxu0
    %4372 = vmatprep.mubr.f32.mxu0 0.0
    %4373 = vmatmul.mubr.f32.gmra.mrb[0].mxu0 %v4277
    %v4374 = vpop.f32.mrb[0].mxu0
    %v4375 = vadd.f32 0.0, %v4374
    %v4376 = vpop.f32.mrb[0].mxu0
    %4377 = vmatprep.mubr.f32.mxu0 0.0
    %4378 = vmatmul.mubr.f32.gmra.mrb[0].mxu0 %v4280
    %v4379 = vpop.f32.mrb[0].mxu0
    %v4380 = vadd.f32 0.0, %v4379
    %v4381 = vpop.f32.mrb[0].mxu0
    %4382 = vmatprep.mubr.f32.mxu0 0.0
    %4383 = vmatmul.mubr.f32.gmra.mrb[0].mxu0 %v4283
    %v4384 = vpop.f32.mrb[0].mxu0
    %v4385 = vadd.f32 0.0, %v4384
    %v4386 = vpop.f32.mrb[0].mxu0
    %4387 = vmatprep.mubr.f32.mxu0 0.0
    %4388 = vmatmul.mubr.f32.gmra.mrb[0].mxu0 %v4286
    %v4389 = vpop.f32.mrb[0].mxu0
    %v4390 = vadd.f32 0.0, %v4389
    %v4391 = vpop.f32.mrb[0].mxu0
    %4392 = vdwg.mxu0
    %4393 = vxpose.xlu0.b32.start [1/16] %v4226, 128
    %4394 = vxpose.xlu0.b32.cont [2/16] %v4231, 128
    %4395 = vxpose.xlu0.b32.cont [3/16] %v4236, 128
    %4396 = vxpose.xlu0.b32.cont [4/16] %v4241, 128
    %4397 = vxpose.xlu0.b32.cont [5/16] %v4246, 128
    %4398 = vxpose.xlu0.b32.cont [6/16] %v4251, 128
    %4399 = vxpose.xlu0.b32.cont [7/16] %v4256, 128
    %4400 = vxpose.xlu0.b32.cont [8/16] %v4261, 128
    %4401 = vxpose.xlu0.b32.cont [9/16] 0.0, 128
    %4402 = vxpose.xlu0.b32.cont [10/16] 0.0, 128
    %4403 = vxpose.xlu0.b32.cont [11/16] 0.0, 128
    %4404 = vxpose.xlu0.b32.cont [12/16] 0.0, 128
    %4405 = vxpose.xlu0.b32.cont [13/16] 0.0, 128
    %4406 = vxpose.xlu0.b32.cont [14/16] 0.0, 128
    %4407 = vxpose.xlu0.b32.cont [15/16] 0.0, 128
    %4408 = vxpose.xlu0.b32.end [16/16] 0.0, 128
    %v4409 = vpop.trf.xlu0
    %v4410 = vpop.trf.xlu0
    %v4411 = vpop.trf.xlu0
    %v4412 = vpop.trf.xlu0
    %v4413 = vpop.trf.xlu0
    %v4414 = vpop.trf.xlu0
    %v4415 = vpop.trf.xlu0
    %v4416 = vpop.trf.xlu0
    %v4417 = vpop.trf.xlu0
    %v4418 = vpop.trf.xlu0
    %v4419 = vpop.trf.xlu0
    %v4420 = vpop.trf.xlu0
    %v4421 = vpop.trf.xlu0
    %v4422 = vpop.trf.xlu0
    %v4423 = vpop.trf.xlu0
    %v4424 = vpop.trf.xlu0
    %4425 = vxpose.xlu0.b32.start [1/16] %v4355, 128
    %4426 = vxpose.xlu0.b32.cont [2/16] %v4360, 128
    %4427 = vxpose.xlu0.b32.cont [3/16] %v4365, 128
    %4428 = vxpose.xlu0.b32.cont [4/16] %v4370, 128
    %4429 = vxpose.xlu0.b32.cont [5/16] %v4375, 128
    %4430 = vxpose.xlu0.b32.cont [6/16] %v4380, 128
    %4431 = vxpose.xlu0.b32.cont [7/16] %v4385, 128
    %4432 = vxpose.xlu0.b32.cont [8/16] %v4390, 128
    %4433 = vxpose.xlu0.b32.cont [9/16] 0.0, 128
    %4434 = vxpose.xlu0.b32.cont [10/16] 0.0, 128
    %4435 = vxpose.xlu0.b32.cont [11/16] 0.0, 128
    %4436 = vxpose.xlu0.b32.cont [12/16] 0.0, 128
    %4437 = vxpose.xlu0.b32.cont [13/16] 0.0, 128
    %4438 = vxpose.xlu0.b32.cont [14/16] 0.0, 128
    %4439 = vxpose.xlu0.b32.cont [15/16] 0.0, 128
    %4440 = vxpose.xlu0.b32.end [16/16] 0.0, 128
    %v4441 = vpop.trf.xlu0
    %v4442 = vpop.trf.xlu0
    %v4443 = vpop.trf.xlu0
    %v4444 = vpop.trf.xlu0
    %v4445 = vpop.trf.xlu0
    %v4446 = vpop.trf.xlu0
    %v4447 = vpop.trf.xlu0
    %v4448 = vpop.trf.xlu0
    %v4449 = vpop.trf.xlu0
    %v4450 = vpop.trf.xlu0
    %v4451 = vpop.trf.xlu0
    %v4452 = vpop.trf.xlu0
    %v4453 = vpop.trf.xlu0
    %v4454 = vpop.trf.xlu0
    %v4455 = vpop.trf.xlu0
    %v4456 = vpop.trf.xlu0
    %v4457 = vcombine.low %v4409, %v4441
    %v4459 = vunpack.c.l.s4 1934713408
    %v4460 = vunpack.c.0.s8 %v4459
    %v4461 = vlaneseq
    %v4462 = vshrl.u32 %v4461, 7
    %v4463 = vsub.s32 %v4460, %v4462
    %v4464 = vrot.slane %v4457, %v4463
    %v4465 = vcombine.high %v4464, 0.0
    %v4466 = vcombine.low %v4464, %v4465
    %v4468 = vunpack.c.l.s4 1934713408
    %v4469 = vunpack.c.0.s8 %v4468
    %v4470 = vlaneseq
    %v4471 = vshrl.u32 %v4470, 7
    %v4472 = vsub.s32 %v4469, %v4471
    %v4473 = vrot.slane %v4466, %v4472
    %v4474 = vcombine.high %v4473, 0.0
    %4476 = vrot.lane.b32.xlu0 %v4474, 64
    %v4477 = vpop.permute.xlu0 %4476
    %v4479 = vsel %vm109, %v4473, %v4477
    %v4480 = vld [vmem:[#allocation2] sm:$0x3]
    %v4481 = vld [vmem:[#allocation11] sm:$0xff]
    %v4482 = vld [vmem:[#allocation11 + $0x8] sm:$0xff]
    %v4483 = vld [vmem:[#allocation11 + $0x10] sm:$0xff]
    %v4484 = vld [vmem:[#allocation11 + $0x18] sm:$0xff]
    %v4485 = vld [vmem:[#allocation11 + $0x20] sm:$0xff]
    %v4486 = vld [vmem:[#allocation11 + $0x28] sm:$0xff]
    %v4487 = vld [vmem:[#allocation11 + $0x30] sm:$0xff]
    %v4488 = vld [vmem:[#allocation11 + $0x38] sm:$0xff]
    %v4489 = vld [vmem:[#allocation11 + $0x40] sm:$0xff]
    %v4490 = vld [vmem:[#allocation11 + $0x48] sm:$0xff]
    %v4491 = vld [vmem:[#allocation11 + $0x50] sm:$0xff]
    %v4492 = vld [vmem:[#allocation11 + $0x58] sm:$0xff]
    %v4493 = vld [vmem:[#allocation11 + $0x60] sm:$0xff]
    %v4494 = vld [vmem:[#allocation11 + $0x68] sm:$0xff]
    %v4495 = vld [vmem:[#allocation11 + $0x70] sm:$0xff]
    %v4496 = vld [vmem:[#allocation11 + $0x78] sm:$0xff]
    %4497 = vmatprep.subr.mxu0 0.0
    %4498 = vmatpush1.msra.mxu0 %v4481
    %4499 = vmatprep.subr.mxu0 0.0
    %4500 = vmatpush1.msra.mxu0 %v4482
    %4501 = vmatprep.subr.mxu0 0.0
    %4502 = vmatpush1.msra.mxu0 %v4483
    %4503 = vmatprep.subr.mxu0 0.0
    %4504 = vmatpush1.msra.mxu0 %v4484
    %4505 = vmatprep.subr.mxu0 0.0
    %4506 = vmatpush1.msra.mxu0 %v4485
    %4507 = vmatprep.subr.mxu0 0.0
    %4508 = vmatpush1.msra.mxu0 %v4486
    %4509 = vmatprep.subr.mxu0 0.0
    %4510 = vmatpush1.msra.mxu0 %v4487
    %4511 = vmatprep.subr.mxu0 0.0
    %4512 = vmatpush1.msra.mxu0 %v4488
    %4513 = vmatprep.subr.mxu0 0.0
    %4514 = vmatpush1.msra.mxu0 %v4489
    %4515 = vmatprep.subr.mxu0 0.0
    %4516 = vmatpush1.msra.mxu0 %v4490
    %4517 = vmatprep.subr.mxu0 0.0
    %4518 = vmatpush1.msra.mxu0 %v4491
    %4519 = vmatprep.subr.mxu0 0.0
    %4520 = vmatpush1.msra.mxu0 %v4492
    %4521 = vmatprep.subr.mxu0 0.0
    %4522 = vmatpush1.msra.mxu0 %v4493
    %4523 = vmatprep.subr.mxu0 0.0
    %4524 = vmatpush1.msra.mxu0 %v4494
    %4525 = vmatprep.subr.mxu0 0.0
    %4526 = vmatpush1.msra.mxu0 %v4495
    %4527 = vmatprep.subr.mxu0 0.0
    %4528 = vmatpush1.msra.mxu0 %v4496
    %4529 = vmatprep.subr.mxu0 0.0
    %4530 = vmatpush1.msra.mxu0 0.0
    %4531 = vmatprep.subr.mxu0 0.0
    %4532 = vmatpush1.msra.mxu0 0.0
    %4533 = vmatprep.subr.mxu0 0.0
    %4534 = vmatpush1.msra.mxu0 0.0
    %4535 = vmatprep.subr.mxu0 0.0
    %4536 = vmatpush1.msra.mxu0 0.0
    %4537 = vmatprep.subr.mxu0 0.0
    %4538 = vmatpush1.msra.mxu0 0.0
    %4539 = vmatprep.subr.mxu0 0.0
    %4540 = vmatpush1.msra.mxu0 0.0
    %4541 = vmatprep.subr.mxu0 0.0
    %4542 = vmatpush1.msra.mxu0 0.0
    %4543 = vmatprep.subr.mxu0 0.0
    %4544 = vmatpush1.msra.mxu0 0.0
    %4545 = vmatprep.subr.mxu0 0.0
    %4546 = vmatpush1.msra.mxu0 0.0
    %4547 = vmatprep.subr.mxu0 0.0
    %4548 = vmatpush1.msra.mxu0 0.0
    %4549 = vmatprep.subr.mxu0 0.0
    %4550 = vmatpush1.msra.mxu0 0.0
    %4551 = vmatprep.subr.mxu0 0.0
    %4552 = vmatpush1.msra.mxu0 0.0
    %4553 = vmatprep.subr.mxu0 0.0
    %4554 = vmatpush1.msra.mxu0 0.0
    %4555 = vmatprep.subr.mxu0 0.0
    %4556 = vmatpush1.msra.mxu0 0.0
    %4557 = vmatprep.subr.mxu0 0.0
    %4558 = vmatpush1.msra.mxu0 0.0
    %4559 = vmatprep.subr.mxu0 0.0
    %4560 = vmatpush1.msra.mxu0 0.0
    %4561 = vmatprep.mubr.f32.mxu0 0.0
    %4562 = vmatmul.mubr.f32.gmra.mrb[0].mxu0 %v4479
    %v4563 = vpop.f32.mrb[0].mxu0
    %v4564 = vadd.f32 0.0, %v4563
    %v4565 = vpop.f32.mrb[0].mxu0
    %4566 = vdwg.mxu0
    %v4567 = vadd.f32 %v4480, %v4564
    %4568 = vst [vmem:[#allocation13] sm:$0x3] %v4567
    // Predicated region
    $region54: #{attention_pooling.1} parent=1 // pred_check
      _
    $region55: #{attention_pooling.1} parent=1 // pred_check_branch
      %4570 = sbr.rel (0) target = $region57
    $region56: #{attention_pooling.1} parent=1 // pred_region
      %s4572 = ssub.s32 32, 32
      %4573 = vsyncadd [#allocation4], %s4572
      %s4575 = sshll.u32 [#allocation13], 4
      %s4576 = int_to_ptr.vmem [resolvable:$true] %s4575
      %4578 = dma.vmem_to_hbm [thread:$0]  %s4576, 32, %s7, [#allocation4]
    $region57: #{attention_pooling.1} parent=1 // pred_fallthru
      _
    // Predicated region
    $region58: #{attention_pooling.1} parent=1 // pred_check
      _
    $region59: #{attention_pooling.1} parent=1 // pred_check_branch
      %4580 = sbr.rel (0) target = $region61
    $region60: #{attention_pooling.1} parent=1 // pred_region
      %4581 = dma.done [#allocation4], 32
    $region61: #{attention_pooling.1} parent=1 // pred_fallthru
      _
    %4582 = vsyncpa [#allocation3], 1
    %4583 = vsyncpa [#allocation6], 1
    %4584 = vsyncpa [#allocation9], 1
    %4585 = vsyncpa [#allocation12], 1
    %4586 = vsyncpa [#allocation4], 1

</llo_original>
